<compile_context>
chip_gen: v6e
topology: v6e:2x2x1
jax: 0.10.0
libtpu: 0.0.40
codegen_flags: <defaults>
</compile_context>

<pallas_src>
import jax
import jax.numpy as jnp
from jax import lax
from jax.experimental import pallas as pl
from jax.experimental.pallas import tpu as pltpu


def _round_up(x, m):
    return (x + m - 1) // m * m


def _padded_tile_bytes(shape, dtype):
    """VMEM footprint of one buffer of `shape` with (sublane, 128) tile padding."""
    dt = jnp.dtype(dtype)
    sub = max(8, 32 // dt.itemsize)
    dims = list(shape)
    if len(dims) >= 1:
        dims[-1] = _round_up(dims[-1], 128)
    if len(dims) >= 2:
        dims[-2] = _round_up(dims[-2], sub)
    n = dt.itemsize
    for d in dims:
        n *= d
    return n


def _make_kernel(K, M, Wp_pad, Ho, Cout, neg_slope, weight_resident):
    def kernel(x_ref, w_ref, b_ref, m_ref, o_ref, acc_ref):
        j = pl.program_id(1)  # kw tap index (ascending)

        def w_slice(kh):
            if weight_resident:
                return w_ref[j, kh]        # whole weight resident; dynamic kw index
            return w_ref[0, kh]            # streamed: current kw slice only

        def tap(kh):
            # x slice starts at kh*Wp_pad (multiple of the sublane tile) -> aligned view.
            xk = x_ref[0, pl.ds(kh * Wp_pad, M), :]       # (M, Cin)
            return lax.dot_general(
                xk, w_slice(kh), (((1,), (1,)), ((), ())),
                preferred_element_type=jnp.float32)

        d0 = tap(0)

        @pl.when(j == 0)
        def _init_with_first_tap():
            acc_ref[...] = d0

        @pl.when(j > 0)
        def _horner_fused():
            # Horner kw shift fused with the kh=0 accumulate: single acc RMW instead of
            # a standalone roll pass + a separate '+='. Row-wrap junk only ever reaches
            # columns < K-1, which are masked at pooling time.
            acc_ref[...] = pltpu.roll(acc_ref[...], shift=1, axis=0) + d0

        for kh in range(1, K):
            acc_ref[...] += tap(kh)

        @pl.when(j == K - 1)
        def _finalize():
            val = acc_ref[...] + b_ref[...]                    # (M, Cout) + (1, Cout)
            act = jnp.where(val > 0, val, val * neg_slope)
            act = act.reshape(Ho, Wp_pad, Cout)                # aligned -> free reshape
            # mask already contains the 1/(Ho*Wo) pooling scale; one multiply does
            # masking + mean normalization.
            act = act * m_ref[...].reshape(1, Wp_pad, 1)
            pooled = jnp.sum(act, axis=(0, 1))
            o_ref[...] = pooled.reshape(1, 1, Cout).astype(o_ref.dtype)

    return kernel


def conv_t_leaky_gap(x_nchw, w_pt, b, *, padding=2, neg_slope=-0.608,
                     compute_dtype=jnp.bfloat16):
    """Fused ConvTranspose2d(stride=1) + leaky-where + global average pool.

    x_nchw : (N, Cin, H, W)      float32
    w_pt   : (Cin, Cout, K, K)   PyTorch ConvTranspose2d weight layout
    b      : (Cout,)             bias
    compute_dtype : bf16 (default, fast MXU path, f32 accumulation) or jnp.float32
                    for exact f32 semantics. Note: the bf16 path quantizes the input
                    activations and the weight, not just the matmul.
    returns: (N, Cout, 1, 1) in x's dtype
    """
    N, Cin, H, W = x_nchw.shape
    Cin_w, Cout, K, K2 = w_pt.shape
    assert Cin_w == Cin and K == K2
    assert padding <= K - 1, "implementation assumes K-1-padding >= 0"

    pad = K - 1 - padding                       # equivalent forward-conv padding
    Ho = H + K - 1 - 2 * padding                # transposed-conv output height
    Wo = W + K - 1 - 2 * padding                # transposed-conv output width
    Hp = H + 2 * pad
    Wp = W + 2 * pad                            # == Wo + K - 1
    Wp_pad = _round_up(Wp, 16)                  # sublane-align (covers f32 and bf16 tiles)
    M = Ho * Wp_pad                             # rows of the flat conv accumulator
    HpWp = Hp * Wp_pad

    cdt = jnp.dtype(compute_dtype)
    out_dtype = x_nchw.dtype

    # ---- glue: layout only, no compute (cast FIRST so the copies move cdt bytes) ----
    x_c = x_nchw.astype(cdt)
    x_nhwc = jnp.transpose(x_c, (0, 2, 3, 1))                           # NCHW -> NHWC
    xp = jnp.pad(x_nhwc, ((0, 0), (pad, pad),
                          (pad, pad + (Wp_pad - Wp)), (0, 0)))          # (N, Hp, Wp_pad, Cin)
    xp = xp.reshape(N, HpWp, Cin)                                       # flat, tile-aligned rows
    # w_kw[kw, kh, co, ci] = W_pt[ci, co, K-1-kh, K-1-kw]  (Cin on the lane axis)
    w_kw = jnp.transpose(jnp.flip(w_pt.astype(cdt), axis=(2, 3)), (3, 2, 1, 0))
    b2 = b.reshape(1, Cout).astype(jnp.float32)
    # Column mask (valid conv output columns) with the pooling scale folded in.
    col = jnp.arange(Wp_pad, dtype=jnp.int32)
    colmask = (((col >= K - 1) & (col < K - 1 + Wo)).astype(jnp.float32)
               * (1.0 / float(Ho * Wo))).reshape(Wp_pad, 1)

    # ---- VMEM budget (tile-padded) and weight-residency decision ----
    base_bytes = (
        2 * _padded_tile_bytes((HpWp, Cin), cdt)            # input block, double-buffered
        + 2 * _padded_tile_bytes((1, Cout), jnp.float32)    # bias
        + 2 * _padded_tile_bytes((Wp_pad, 1), jnp.float32)  # column mask
        + _padded_tile_bytes((M, Cout), jnp.float32)        # accumulator scratch
        + 2 * _padded_tile_bytes((1, 1, Cout), out_dtype)   # output block
    )
    w_resident_bytes = 2 * _padded_tile_bytes((K, K, Cout, Cin), cdt)
    w_stream_bytes = 2 * _padded_tile_bytes((K, Cout, Cin), cdt)

    try:
        info = pltpu.get_tpu_info()
        vmem_cap = int(getattr(info, "vmem_capacity_bytes", 64 * 1024 * 1024))
    except Exception:
        vmem_cap = 64 * 1024 * 1024              # conservative (v7x physical VMEM)
    vmem_ceiling = max(32 * 1024 * 1024, vmem_cap - 6 * 1024 * 1024)

    def _budget(data_bytes):
        return int(data_bytes * 1.25) + (2 << 20)

    # Keep the whole flipped weight resident (fetched once, constant index_map) when it
    # fits; otherwise stream one kw-slice per step (e.g. f32 on 64 MiB v7x parts).
    weight_resident = _budget(base_bytes + w_resident_bytes) <= vmem_ceiling
    w_bytes = w_resident_bytes if weight_resident else w_stream_bytes
    vmem_limit = min(vmem_ceiling,
                     max(32 * 1024 * 1024, _budget(base_bytes + w_bytes)))

    if weight_resident:
        w_spec = pl.BlockSpec((K, K, Cout, Cin), lambda n, j: (0, 0, 0, 0))
    else:
        w_spec = pl.BlockSpec((1, K, Cout, Cin), lambda n, j: (j, 0, 0, 0))

    kernel = _make_kernel(K, M, Wp_pad, Ho, Cout, neg_slope, weight_resident)

    out = pl.pallas_call(
        kernel,
        out_shape=jax.ShapeDtypeStruct((N, 1, Cout), out_dtype),
        grid_spec=pltpu.PrefetchScalarGridSpec(
            num_scalar_prefetch=0,
            grid=(N, K),
            in_specs=[
                # input block index is constant over kw -> fetched once per sample
                pl.BlockSpec((1, HpWp, Cin), lambda n, j: (n, 0, 0)),
                w_spec,
                pl.BlockSpec((1, Cout), lambda n, j: (0, 0)),
                pl.BlockSpec((Wp_pad, 1), lambda n, j: (0, 0)),
            ],
            out_specs=pl.BlockSpec((1, 1, Cout), lambda n, j: (n, 0, 0)),
            scratch_shapes=[pltpu.VMEM((M, Cout), jnp.float32)],
        ),
        compiler_params=pltpu.CompilerParams(
            dimension_semantics=("parallel", "arbitrary"),
            vmem_limit_bytes=vmem_limit,
        ),
    )(xp, w_kw, b2, colmask)

    return out.reshape(N, Cout, 1, 1)


def reference_forward(x_nchw, w_pt, b, *, padding=2, neg_slope=-0.608):
    """Pure-JAX reference implementing the ConvTranspose2d scatter definition directly."""
    N, Cin, H, W = x_nchw.shape
    Cout, K = w_pt.shape[1], w_pt.shape[2]
    Hf, Wf = H + K - 1, W + K - 1
    y = jnp.zeros((N, Cout, Hf, Wf), jnp.float32)
    for kh in range(K):
        for kw in range(K):
            contrib = jnp.einsum('nchw,cd->ndhw', x_nchw, w_pt[:, :, kh, kw])
            y = y.at[:, :, kh:kh + H, kw:kw + W].add(contrib)
    y = y[:, :, padding:Hf - padding, padding:Wf - padding] + b[None, :, None, None]
    y = jnp.where(y > 0, y, y * neg_slope)
    return jnp.mean(y, axis=(2, 3), keepdims=True)


if __name__ == "__main__":
    # Small shapes consistent with the module (ConvTranspose2d k=6, s=1, p=2);
    # the original uses Cin=623, Cout=154, spatial 73x36 — scaled down for the test.
    N, Cin, Cout, K = 2, 16, 8, 6

    key = jax.random.PRNGKey(0)
    kx, kw_, kb = jax.random.split(key, 3)
    w = jax.random.normal(kw_, (Cin, Cout, K, K), dtype=jnp.float32) * 0.05
    b = jax.random.normal(kb, (Cout,), dtype=jnp.float32) * 0.05

    fwd_bf16 = jax.jit(lambda x, w, b: conv_t_leaky_gap(x, w, b, padding=2))
    fwd_f32 = jax.jit(lambda x, w, b: conv_t_leaky_gap(
        x, w, b, padding=2, compute_dtype=jnp.float32))

    # Case 1: Wp_pad == Wp (no alignment columns); Case 2: Wp_pad > Wp (exercises the
    # alignment-padding columns interacting with the roll wrap + column mask).
    for case_idx, (H, W) in enumerate([(12, 10), (9, 11)]):
        kx, sub = jax.random.split(kx)
        x = jax.random.normal(sub, (N, Cin, H, W), dtype=jnp.float32)
        ref = reference_forward(x, w, b, padding=2)

        # f32 path: exact module semantics.
        out_f32 = jax.block_until_ready(fwd_f32(x, w, b))
        assert out_f32.shape == (N, Cout, 1, 1), out_f32.shape
        assert jnp.allclose(out_f32, ref, rtol=1e-4, atol=1e-4), \
            (case_idx, float(jnp.max(jnp.abs(out_f32 - ref))))

        # bf16 default path (fp32 accumulation): looser tolerance (inputs are quantized).
        out_bf16 = jax.block_until_ready(fwd_bf16(x, w, b))
        assert out_bf16.shape == (N, Cout, 1, 1), out_bf16.shape
        assert jnp.allclose(out_bf16, ref, rtol=5e-2, atol=5e-2), \
            (case_idx, float(jnp.max(jnp.abs(out_bf16 - ref))))

    print("KERNEL_OK")
</pallas_src>

<mosaic_0001>
module attributes {stable_mosaic.version = 11 : i64} {
  func.func @kernel(%arg0: i32, %arg1: i32, %arg2: memref<1x288x16xf32, #tpu.memory_space<vmem>>, %arg3: memref<6x6x8x16xf32, #tpu.memory_space<vmem>>, %arg4: memref<1x8xf32, #tpu.memory_space<vmem>>, %arg5: memref<16x1xf32, #tpu.memory_space<vmem>>, %arg6: memref<1x1x8xf32, #tpu.memory_space<vmem>>, %arg7: memref<208x8xf32, #tpu.memory_space<vmem>>) attributes {dimension_semantics = [#tpu.dimension_semantics<parallel>, #tpu.dimension_semantics<arbitrary>], iteration_bounds = array<i64: 2, 6>, scalar_prefetch = 0 : i64, scratch_operands = 1 : i64, tpu.core_type = #tpu.core_type<tc>, window_params = [{transform_indices = @transform_0, window_bounds = array<i64: 1, 288, 16>}, {pipeline_mode = #tpu.pipeline_mode<synchronous>, transform_indices = @transform_1, window_bounds = array<i64: 6, 6, 8, 16>}, {pipeline_mode = #tpu.pipeline_mode<synchronous>, transform_indices = @transform_2, window_bounds = array<i64: 1, 8>}, {pipeline_mode = #tpu.pipeline_mode<synchronous>, transform_indices = @transform_3, window_bounds = array<i64: 16, 1>}, {transform_indices = @transform_4, window_bounds = array<i64: 1, 1, 8>}]} {
    %c0 = arith.constant 0 : index
    %c0_0 = arith.constant 0 : index
    %c0_1 = arith.constant 0 : index
    %0 = vector.load %arg2[%c0, %c0_0, %c0_1] : memref<1x288x16xf32, #tpu.memory_space<vmem>>, vector<1x208x16xf32>
    %1 = vector.shape_cast %0 : vector<1x208x16xf32> to vector<208x16xf32>
    %2 = arith.index_cast %arg1 : i32 to index
    %c0_2 = arith.constant 0 : index
    %c0_3 = arith.constant 0 : index
    %c0_4 = arith.constant 0 : index
    %3 = vector.load %arg3[%2, %c0_2, %c0_3, %c0_4] : memref<6x6x8x16xf32, #tpu.memory_space<vmem>>, vector<1x1x8x16xf32>
    %4 = vector.shape_cast %3 : vector<1x1x8x16xf32> to vector<8x16xf32>
    %cst = arith.constant dense<0.000000e+00> : vector<208x8xf32>
    %5 = tpu.matmul %1, %4, %cst {dimension_numbers = #tpu.dot_dimension_numbers<[1], [1], [0], [0], [0, 0, 1, 0], [], []>} : vector<208x16xf32>, vector<8x16xf32>, vector<208x8xf32> -> vector<208x8xf32>
    %c0_i32 = arith.constant 0 : i32
    %6 = arith.cmpi eq, %arg1, %c0_i32 : i32
    %7 = arith.extui %6 : i1 to i32
    %c0_i32_5 = arith.constant 0 : i32
    %8 = arith.cmpi ne, %7, %c0_i32_5 : i32
    scf.if %8 {
      %c0_54 = arith.constant 0 : index
      %c0_55 = arith.constant 0 : index
      %60 = vector.load %arg7[%c0_54, %c0_55] : memref<208x8xf32, #tpu.memory_space<vmem>>, vector<208x8xf32>
      tpu.vector_store %arg7[%c0_54, %c0_55], %5 {strides = array<i32>} : memref<208x8xf32, #tpu.memory_space<vmem>>, vector<208x8xf32>,
    } else {
    }
    %c0_i32_6 = arith.constant 0 : i32
    %9 = arith.cmpi sgt, %arg1, %c0_i32_6 : i32
    %10 = arith.extui %9 : i1 to i32
    %c0_i32_7 = arith.constant 0 : i32
    %11 = arith.cmpi ne, %10, %c0_i32_7 : i32
    scf.if %11 {
      %c0_54 = arith.constant 0 : index
      %c0_55 = arith.constant 0 : index
      %60 = vector.load %arg7[%c0_54, %c0_55] : memref<208x8xf32, #tpu.memory_space<vmem>>, vector<208x8xf32>
      %c1_i32 = arith.constant 1 : i32
      %61 = tpu.dynamic_rotate %60 by %c1_i32 dim 0 : vector<208x8xf32>, i32 -> vector<208x8xf32>
      %62 = arith.addf %61, %5 : vector<208x8xf32>
      %c0_56 = arith.constant 0 : index
      %c0_57 = arith.constant 0 : index
      %63 = vector.load %arg7[%c0_56, %c0_57] : memref<208x8xf32, #tpu.memory_space<vmem>>, vector<208x8xf32>
      tpu.vector_store %arg7[%c0_56, %c0_57], %62 {strides = array<i32>} : memref<208x8xf32, #tpu.memory_space<vmem>>, vector<208x8xf32>,
    } else {
    }
    %c0_8 = arith.constant 0 : index
    %c0_9 = arith.constant 0 : index
    %12 = vector.load %arg7[%c0_8, %c0_9] : memref<208x8xf32, #tpu.memory_space<vmem>>, vector<208x8xf32>
    %c0_10 = arith.constant 0 : index
    %c16 = arith.constant 16 : index
    %c0_11 = arith.constant 0 : index
    %13 = vector.load %arg2[%c0_10, %c16, %c0_11] : memref<1x288x16xf32, #tpu.memory_space<vmem>>, vector<1x208x16xf32>
    %14 = vector.shape_cast %13 : vector<1x208x16xf32> to vector<208x16xf32>
    %15 = arith.index_cast %arg1 : i32 to index
    %c1 = arith.constant 1 : index
    %c0_12 = arith.constant 0 : index
    %c0_13 = arith.constant 0 : index
    %16 = vector.load %arg3[%15, %c1, %c0_12, %c0_13] : memref<6x6x8x16xf32, #tpu.memory_space<vmem>>, vector<1x1x8x16xf32>
    %17 = vector.shape_cast %16 : vector<1x1x8x16xf32> to vector<8x16xf32>
    %cst_14 = arith.constant dense<0.000000e+00> : vector<208x8xf32>
    %18 = tpu.matmul %14, %17, %cst_14 {dimension_numbers = #tpu.dot_dimension_numbers<[1], [1], [0], [0], [0, 0, 1, 0], [], []>} : vector<208x16xf32>, vector<8x16xf32>, vector<208x8xf32> -> vector<208x8xf32>
    %19 = arith.addf %12, %18 : vector<208x8xf32>
    %c0_15 = arith.constant 0 : index
    %c0_16 = arith.constant 0 : index
    %20 = vector.load %arg7[%c0_15, %c0_16] : memref<208x8xf32, #tpu.memory_space<vmem>>, vector<208x8xf32>
    tpu.vector_store %arg7[%c0_15, %c0_16], %19 {strides = array<i32>} : memref<208x8xf32, #tpu.memory_space<vmem>>, vector<208x8xf32>,
    %c0_17 = arith.constant 0 : index
    %c0_18 = arith.constant 0 : index
    %21 = vector.load %arg7[%c0_17, %c0_18] : memref<208x8xf32, #tpu.memory_space<vmem>>, vector<208x8xf32>
    %c0_19 = arith.constant 0 : index
    %c32 = arith.constant 32 : index
    %c0_20 = arith.constant 0 : index
    %22 = vector.load %arg2[%c0_19, %c32, %c0_20] : memref<1x288x16xf32, #tpu.memory_space<vmem>>, vector<1x208x16xf32>
    %23 = vector.shape_cast %22 : vector<1x208x16xf32> to vector<208x16xf32>
    %24 = arith.index_cast %arg1 : i32 to index
    %c2 = arith.constant 2 : index
    %c0_21 = arith.constant 0 : index
    %c0_22 = arith.constant 0 : index
    %25 = vector.load %arg3[%24, %c2, %c0_21, %c0_22] : memref<6x6x8x16xf32, #tpu.memory_space<vmem>>, vector<1x1x8x16xf32>
    %26 = vector.shape_cast %25 : vector<1x1x8x16xf32> to vector<8x16xf32>
    %cst_23 = arith.constant dense<0.000000e+00> : vector<208x8xf32>
    %27 = tpu.matmul %23, %26, %cst_23 {dimension_numbers = #tpu.dot_dimension_numbers<[1], [1], [0], [0], [0, 0, 1, 0], [], []>} : vector<208x16xf32>, vector<8x16xf32>, vector<208x8xf32> -> vector<208x8xf32>
    %28 = arith.addf %21, %27 : vector<208x8xf32>
    %c0_24 = arith.constant 0 : index
    %c0_25 = arith.constant 0 : index
    %29 = vector.load %arg7[%c0_24, %c0_25] : memref<208x8xf32, #tpu.memory_space<vmem>>, vector<208x8xf32>
    tpu.vector_store %arg7[%c0_24, %c0_25], %28 {strides = array<i32>} : memref<208x8xf32, #tpu.memory_space<vmem>>, vector<208x8xf32>,
    %c0_26 = arith.constant 0 : index
    %c0_27 = arith.constant 0 : index
    %30 = vector.load %arg7[%c0_26, %c0_27] : memref<208x8xf32, #tpu.memory_space<vmem>>, vector<208x8xf32>
    %c0_28 = arith.constant 0 : index
    %c48 = arith.constant 48 : index
    %c0_29 = arith.constant 0 : index
    %31 = vector.load %arg2[%c0_28, %c48, %c0_29] : memref<1x288x16xf32, #tpu.memory_space<vmem>>, vector<1x208x16xf32>
    %32 = vector.shape_cast %31 : vector<1x208x16xf32> to vector<208x16xf32>
    %33 = arith.index_cast %arg1 : i32 to index
    %c3 = arith.constant 3 : index
    %c0_30 = arith.constant 0 : index
    %c0_31 = arith.constant 0 : index
    %34 = vector.load %arg3[%33, %c3, %c0_30, %c0_31] : memref<6x6x8x16xf32, #tpu.memory_space<vmem>>, vector<1x1x8x16xf32>
    %35 = vector.shape_cast %34 : vector<1x1x8x16xf32> to vector<8x16xf32>
    %cst_32 = arith.constant dense<0.000000e+00> : vector<208x8xf32>
    %36 = tpu.matmul %32, %35, %cst_32 {dimension_numbers = #tpu.dot_dimension_numbers<[1], [1], [0], [0], [0, 0, 1, 0], [], []>} : vector<208x16xf32>, vector<8x16xf32>, vector<208x8xf32> -> vector<208x8xf32>
    %37 = arith.addf %30, %36 : vector<208x8xf32>
    %c0_33 = arith.constant 0 : index
    %c0_34 = arith.constant 0 : index
    %38 = vector.load %arg7[%c0_33, %c0_34] : memref<208x8xf32, #tpu.memory_space<vmem>>, vector<208x8xf32>
    tpu.vector_store %arg7[%c0_33, %c0_34], %37 {strides = array<i32>} : memref<208x8xf32, #tpu.memory_space<vmem>>, vector<208x8xf32>,
    %c0_35 = arith.constant 0 : index
    %c0_36 = arith.constant 0 : index
    %39 = vector.load %arg7[%c0_35, %c0_36] : memref<208x8xf32, #tpu.memory_space<vmem>>, vector<208x8xf32>
    %c0_37 = arith.constant 0 : index
    %c64 = arith.constant 64 : index
    %c0_38 = arith.constant 0 : index
    %40 = vector.load %arg2[%c0_37, %c64, %c0_38] : memref<1x288x16xf32, #tpu.memory_space<vmem>>, vector<1x208x16xf32>
    %41 = vector.shape_cast %40 : vector<1x208x16xf32> to vector<208x16xf32>
    %42 = arith.index_cast %arg1 : i32 to index
    %c4 = arith.constant 4 : index
    %c0_39 = arith.constant 0 : index
    %c0_40 = arith.constant 0 : index
    %43 = vector.load %arg3[%42, %c4, %c0_39, %c0_40] : memref<6x6x8x16xf32, #tpu.memory_space<vmem>>, vector<1x1x8x16xf32>
    %44 = vector.shape_cast %43 : vector<1x1x8x16xf32> to vector<8x16xf32>
    %cst_41 = arith.constant dense<0.000000e+00> : vector<208x8xf32>
    %45 = tpu.matmul %41, %44, %cst_41 {dimension_numbers = #tpu.dot_dimension_numbers<[1], [1], [0], [0], [0, 0, 1, 0], [], []>} : vector<208x16xf32>, vector<8x16xf32>, vector<208x8xf32> -> vector<208x8xf32>
    %46 = arith.addf %39, %45 : vector<208x8xf32>
    %c0_42 = arith.constant 0 : index
    %c0_43 = arith.constant 0 : index
    %47 = vector.load %arg7[%c0_42, %c0_43] : memref<208x8xf32, #tpu.memory_space<vmem>>, vector<208x8xf32>
    tpu.vector_store %arg7[%c0_42, %c0_43], %46 {strides = array<i32>} : memref<208x8xf32, #tpu.memory_space<vmem>>, vector<208x8xf32>,
    %c0_44 = arith.constant 0 : index
    %c0_45 = arith.constant 0 : index
    %48 = vector.load %arg7[%c0_44, %c0_45] : memref<208x8xf32, #tpu.memory_space<vmem>>, vector<208x8xf32>
    %c0_46 = arith.constant 0 : index
    %c80 = arith.constant 80 : index
    %c0_47 = arith.constant 0 : index
    %49 = vector.load %arg2[%c0_46, %c80, %c0_47] : memref<1x288x16xf32, #tpu.memory_space<vmem>>, vector<1x208x16xf32>
    %50 = vector.shape_cast %49 : vector<1x208x16xf32> to vector<208x16xf32>
    %51 = arith.index_cast %arg1 : i32 to index
    %c5 = arith.constant 5 : index
    %c0_48 = arith.constant 0 : index
    %c0_49 = arith.constant 0 : index
    %52 = vector.load %arg3[%51, %c5, %c0_48, %c0_49] : memref<6x6x8x16xf32, #tpu.memory_space<vmem>>, vector<1x1x8x16xf32>
    %53 = vector.shape_cast %52 : vector<1x1x8x16xf32> to vector<8x16xf32>
    %cst_50 = arith.constant dense<0.000000e+00> : vector<208x8xf32>
    %54 = tpu.matmul %50, %53, %cst_50 {dimension_numbers = #tpu.dot_dimension_numbers<[1], [1], [0], [0], [0, 0, 1, 0], [], []>} : vector<208x16xf32>, vector<8x16xf32>, vector<208x8xf32> -> vector<208x8xf32>
    %55 = arith.addf %48, %54 : vector<208x8xf32>
    %c0_51 = arith.constant 0 : index
    %c0_52 = arith.constant 0 : index
    %56 = vector.load %arg7[%c0_51, %c0_52] : memref<208x8xf32, #tpu.memory_space<vmem>>, vector<208x8xf32>
    tpu.vector_store %arg7[%c0_51, %c0_52], %55 {strides = array<i32>} : memref<208x8xf32, #tpu.memory_space<vmem>>, vector<208x8xf32>,
    %c5_i32 = arith.constant 5 : i32
    %57 = arith.cmpi eq, %arg1, %c5_i32 : i32
    %58 = arith.extui %57 : i1 to i32
    %c0_i32_53 = arith.constant 0 : i32
    %59 = arith.cmpi ne, %58, %c0_i32_53 : i32
    scf.if %59 {
      %c0_54 = arith.constant 0 : index
      %c0_55 = arith.constant 0 : index
      %60 = vector.load %arg7[%c0_54, %c0_55] : memref<208x8xf32, #tpu.memory_space<vmem>>, vector<208x8xf32>
      %c0_56 = arith.constant 0 : index
      %c0_57 = arith.constant 0 : index
      %61 = vector.load %arg4[%c0_56, %c0_57] : memref<1x8xf32, #tpu.memory_space<vmem>>, vector<1x8xf32>
      %62 = vector.broadcast %61 : vector<1x8xf32> to vector<208x8xf32>
      %63 = arith.addf %60, %62 : vector<208x8xf32>
      %cst_58 = arith.constant 0.000000e+00 : f32
      %64 = vector.broadcast %cst_58 : f32 to vector<208x8xf32>
      %65 = arith.cmpf ogt, %63, %64 : vector<208x8xf32>
      %cst_59 = arith.constant -0.60799998 : f32
      %66 = vector.broadcast %cst_59 : f32 to vector<208x8xf32>
      %67 = arith.mulf %63, %66 : vector<208x8xf32>
      %68 = arith.select %65, %63, %67 : vector<208x8xi1>, vector<208x8xf32>
      %69 = vector.shape_cast %68 : vector<208x8xf32> to vector<13x16x8xf32>
      %c0_60 = arith.constant 0 : index
      %c0_61 = arith.constant 0 : index
      %70 = vector.load %arg5[%c0_60, %c0_61] : memref<16x1xf32, #tpu.memory_space<vmem>>, vector<16x1xf32>
      %71 = vector.shape_cast %70 : vector<16x1xf32> to vector<1x16x1xf32>
      %72 = vector.broadcast %71 : vector<1x16x1xf32> to vector<13x16x8xf32>
      %73 = arith.mulf %69, %72 : vector<13x16x8xf32>
      %cst_62 = arith.constant dense<0.000000e+00> : vector<8xf32>
      %74 = vector.multi_reduction <add>, %73, %cst_62 [0, 1] : vector<13x16x8xf32> to vector<8xf32>
      %75 = vector.shape_cast %74 : vector<8xf32> to vector<1x1x8xf32>
      %c0_63 = arith.constant 0 : index
      %c0_64 = arith.constant 0 : index
      %c0_65 = arith.constant 0 : index
      %76 = vector.load %arg6[%c0_63, %c0_64, %c0_65] : memref<1x1x8xf32, #tpu.memory_space<vmem>>, vector<1x1x8xf32>
      tpu.vector_store %arg6[%c0_63, %c0_64, %c0_65], %75 {strides = array<i32>} : memref<1x1x8xf32, #tpu.memory_space<vmem>>, vector<1x1x8xf32>,
    } else {
    }
    return
  }
  func.func @transform_0(%arg0: i32, %arg1: i32) -> (i32, i32, i32) {
    %c0_i32 = arith.constant 0 : i32
    %c0_i32_0 = arith.constant 0 : i32
    %c0_i32_1 = arith.constant 0 : i32
    return %arg0, %c0_i32, %c0_i32_0 : i32, i32, i32
  }
  func.func @transform_1(%arg0: i32, %arg1: i32) -> (i32, i32, i32, i32) {
    %c0_i32 = arith.constant 0 : i32
    %c0_i32_0 = arith.constant 0 : i32
    %c0_i32_1 = arith.constant 0 : i32
    %c0_i32_2 = arith.constant 0 : i32
    %c0_i32_3 = arith.constant 0 : i32
    return %c0_i32, %c0_i32_0, %c0_i32_1, %c0_i32_2 : i32, i32, i32, i32
  }
  func.func @transform_2(%arg0: i32, %arg1: i32) -> (i32, i32) {
    %c0_i32 = arith.constant 0 : i32
    %c0_i32_0 = arith.constant 0 : i32
    %c0_i32_1 = arith.constant 0 : i32
    return %c0_i32, %c0_i32_0 : i32, i32
  }
  func.func @transform_3(%arg0: i32, %arg1: i32) -> (i32, i32) {
    %c0_i32 = arith.constant 0 : i32
    %c0_i32_0 = arith.constant 0 : i32
    %c0_i32_1 = arith.constant 0 : i32
    return %c0_i32, %c0_i32_0 : i32, i32
  }
  func.func @transform_4(%arg0: i32, %arg1: i32) -> (i32, i32, i32) {
    %c0_i32 = arith.constant 0 : i32
    %c0_i32_0 = arith.constant 0 : i32
    %c0_i32_1 = arith.constant 0 : i32
    return %arg0, %c0_i32, %c0_i32_0 : i32, i32, i32
  }
}

</mosaic_0001>

<llo_original>
// kernel: _lambda_.1
$region0: #{_lambda_.1}
  #allocation0 [shape = 'u32[]', space=smem, size = 0x4, offset = 0x4, fixed_abs, tag = 'smem constant byte address 0x4 - core index']
  #allocation1 [shape = 'u32[144,128]{1,0:T(1,128)}', space=vmem, size = 0x12000, scoped, tag = 'internal scratch']
  #allocation2 [shape = 'f32[208,8]{1,0:T(8,128)}', space=vmem, size = 0x1a000, scoped, tag = 'scratch operand']
  %s0 = inlined_call_operand.vmem [shape: f32[2,288,16], index: 0, kind: input, shape index: {}]
  %s1 = inlined_call_operand.vmem [shape: f32[6,6,8,16], index: 1, kind: input, shape index: {}]
  %s2 = inlined_call_operand.vmem [shape: f32[1,8], index: 2, kind: input, shape index: {}]
  %s3 = inlined_call_operand.vmem [shape: f32[16,1], index: 3, kind: input, shape index: {}]
  %s4 = inlined_call_operand.hbm [shape: f32[2,1,8], index: 4, kind: output, shape index: {}]
  %s5 = sld [smem:[#allocation0]]
  $region61: #{_lambda_.1} parent=0
    _
  %s7 = ssub.s32 1, %s5
  %s8 = scalar_select 0, %s7, %s5
  $region1: #{_lambda_.1} parent=0
    #allocation3 [shape = 'u8[1024]{0}', space=vmem, size = 0x400, scoped, tag = 'output window, operand 0']
    #allocation4 [shape = 's32[2]{0}', space=sflag, size = 0x8, scoped, tag = 'scoped memory for _lambda_.1']
    %9 = vsyncpa [#allocation4], 0
    %s10 = scalar_lea.sflag [#allocation4], 1
    %11 = vsyncpa %s10, 0
    loop: start=0, step=1, limit=14
    $region2: #{_lambda_.1} parent=1 // loop_pre_header
      _
    $region3: #{_lambda_.1} parent=1 // loop_header
      %s13 = sphi 0, %s17
      %p14 = scmp.ge.s32.totalorder %s13, 14
      %s20 = sphi 0, %s32
      %s21 = sphi 0, %s28
      %s22 = sphi 0, %s20
      %s23 = sphi 0, %s21
      %s24 = sphi 0, %s22
      %s25 = sphi 0, %s23
      %s35 = sphi 0, %s37
      %s38 = sphi 0, %s35
      %s39 = sphi 0, %s38
      %s55 = sphi 0, %s39
      %s59 = sphi 0, %s59
      %s61 = sphi 0, %s59
      %s62 = sphi 0, %s61
      %s76 = sphi 0, %s62
      %s80 = sphi 0, %s80
      %s82 = sphi 0, %s80
      %s83 = sphi 0, %s82
      %s97 = sphi 0, %s83
      %s101 = sphi 0, %s101
      %s103 = sphi 0, %s101
      %s104 = sphi 0, %s103
      %s118 = sphi 0, %s104
      %s124 = sphi 0, %s126
      %s127 = sphi 0, %s124
      %s128 = sphi 0, %s127
      %s144 = sphi 0, %s128
    $region4: #{_lambda_.1} parent=1 // loop_header_branch
      %16 = sbr.rel (%p14) target = $region8
    $region5: #{_lambda_.1} parent=1 // loop_body
      %s18 = ssub.s32 %s13, 1
      %s19 = ssub.s32 %s13, 2
      %s26 = sadd.s32 1, %s21
      %p27 = scmp.ge.s32.totalorder %s26, 6
      %s28 = scalar_select %p27, 0, %s26
      %s29 = sadd.s32 1, %s20
      %s30 = scalar_select %p27, %s29, %s20
      %p31 = scmp.ge.s32.totalorder %s30, 2
      %s32 = scalar_select %p31, 0, %s30
      %s33 = ssub.s32 %s20, %s32
      %p34 = scmp.eq.s32.totalorder %s33, 0
      %s36 = sadd.s32 %s35, 1
      %s37 = scalar_select %p34, %s35, %s36
      %p40 = pneg %p34
      %p41 = scmp.eq.s32.totalorder %s13, 11
      %p42 = por %p40, %p41
      %p43 = scmp.ne.s32.totalorder %s35, %s38
      %p44 = scmp.eq.s32.totalorder %s13, 0
      %p45 = por %p43, %p44
      %p46 = scmp.ne.s32.totalorder %s35, %s38
      %p47 = scmp.eq.s32.totalorder %s18, 11
      %p48 = por %p46, %p47
      %p49 = scmp.ne.s32.totalorder %s38, %s39
      %p50 = scmp.eq.s32.totalorder %s18, 0
      %p51 = por %p49, %p50
      %p52 = scmp.ne.s32.totalorder %s38, %s39
      %p53 = scmp.eq.s32.totalorder %s19, 11
      %p54 = por %p52, %p53
      %p56 = scmp.ne.s32.totalorder %s39, %s55
      %p57 = scmp.eq.s32.totalorder %s19, 0
      %p58 = por %p56, %p57
      %s60 = sadd.s32 %s59, 1
      %p63 = scmp.eq.s32.totalorder %s13, 11
      %p64 = scmp.ne.s32.totalorder %s59, %s61
      %p65 = scmp.eq.s32.totalorder %s13, 0
      %p66 = por %p64, %p65
      %p67 = scmp.ne.s32.totalorder %s59, %s61
      %p68 = scmp.eq.s32.totalorder %s18, 11
      %p69 = por %p67, %p68
      %p70 = scmp.ne.s32.totalorder %s61, %s62
      %p71 = scmp.eq.s32.totalorder %s18, 0
      %p72 = por %p70, %p71
      %p73 = scmp.ne.s32.totalorder %s61, %s62
      %p74 = scmp.eq.s32.totalorder %s19, 11
      %p75 = por %p73, %p74
      %p77 = scmp.ne.s32.totalorder %s62, %s76
      %p78 = scmp.eq.s32.totalorder %s19, 0
      %p79 = por %p77, %p78
      %s81 = sadd.s32 %s80, 1
      %p84 = scmp.eq.s32.totalorder %s13, 11
      %p85 = scmp.ne.s32.totalorder %s80, %s82
      %p86 = scmp.eq.s32.totalorder %s13, 0
      %p87 = por %p85, %p86
      %p88 = scmp.ne.s32.totalorder %s80, %s82
      %p89 = scmp.eq.s32.totalorder %s18, 11
      %p90 = por %p88, %p89
      %p91 = scmp.ne.s32.totalorder %s82, %s83
      %p92 = scmp.eq.s32.totalorder %s18, 0
      %p93 = por %p91, %p92
      %p94 = scmp.ne.s32.totalorder %s82, %s83
      %p95 = scmp.eq.s32.totalorder %s19, 11
      %p96 = por %p94, %p95
      %p98 = scmp.ne.s32.totalorder %s83, %s97
      %p99 = scmp.eq.s32.totalorder %s19, 0
      %p100 = por %p98, %p99
      %s102 = sadd.s32 %s101, 1
      %p105 = scmp.eq.s32.totalorder %s13, 11
      %p106 = scmp.ne.s32.totalorder %s101, %s103
      %p107 = scmp.eq.s32.totalorder %s13, 0
      %p108 = por %p106, %p107
      %p109 = scmp.ne.s32.totalorder %s101, %s103
      %p110 = scmp.eq.s32.totalorder %s18, 11
      %p111 = por %p109, %p110
      %p112 = scmp.ne.s32.totalorder %s103, %s104
      %p113 = scmp.eq.s32.totalorder %s18, 0
      %p114 = por %p112, %p113
      %p115 = scmp.ne.s32.totalorder %s103, %s104
      %p116 = scmp.eq.s32.totalorder %s19, 11
      %p117 = por %p115, %p116
      %p119 = scmp.ne.s32.totalorder %s104, %s118
      %p120 = scmp.eq.s32.totalorder %s19, 0
      %p121 = por %p119, %p120
      %s122 = ssub.s32 %s20, %s32
      %p123 = scmp.eq.s32.totalorder %s122, 0
      %s125 = sadd.s32 %s124, 1
      %s126 = scalar_select %p123, %s124, %s125
      %p129 = pneg %p123
      %p130 = scmp.eq.s32.totalorder %s13, 11
      %p131 = por %p129, %p130
      %p132 = scmp.ne.s32.totalorder %s124, %s127
      %p133 = scmp.eq.s32.totalorder %s13, 0
      %p134 = por %p132, %p133
      %p135 = scmp.ne.s32.totalorder %s124, %s127
      %p136 = scmp.eq.s32.totalorder %s18, 11
      %p137 = por %p135, %p136
      %p138 = scmp.ne.s32.totalorder %s127, %s128
      %p139 = scmp.eq.s32.totalorder %s18, 0
      %p140 = por %p138, %p139
      %p141 = scmp.ne.s32.totalorder %s127, %s128
      %p142 = scmp.eq.s32.totalorder %s19, 11
      %p143 = por %p141, %p142
      %p145 = scmp.ne.s32.totalorder %s128, %s144
      %p146 = scmp.eq.s32.totalorder %s19, 0
      %p147 = por %p145, %p146
      %p148 = scmp.le.s32.totalorder 1, %s13
      %p149 = scmp.lt.s32.totalorder %s13, 13
      %p150 = pnand %p148, %p149
      %p151 = pneg %p150
      // Predicated region
      $region9: #{_lambda_.1} parent=5 // pred_check
        _
      $region10: #{_lambda_.1} parent=5 // pred_check_branch
        %153 = sbr.rel (%p150) target = $region12
      $region11: #{_lambda_.1} parent=5 // pred_region
        %s154 = ssub.s32 %s13, 1
        // Predicated region
        $region13: #{_lambda_.1} parent=11 // pred_check
          %p155 = pneg %p72
        $region14: #{_lambda_.1} parent=11 // pred_check_branch
          %157 = sbr.rel (%p155) target = $region16
        $region15: #{_lambda_.1} parent=11 // pred_region
          _
        $region16: #{_lambda_.1} parent=11 // pred_fallthru
          _
        // Predicated region
        $region17: #{_lambda_.1} parent=11 // pred_check
          %p158 = pneg %p93
        $region18: #{_lambda_.1} parent=11 // pred_check_branch
          %160 = sbr.rel (%p158) target = $region20
        $region19: #{_lambda_.1} parent=11 // pred_region
          _
        $region20: #{_lambda_.1} parent=11 // pred_fallthru
          _
        // Predicated region
        $region21: #{_lambda_.1} parent=11 // pred_check
          %p161 = pneg %p114
        $region22: #{_lambda_.1} parent=11 // pred_check_branch
          %163 = sbr.rel (%p161) target = $region24
        $region23: #{_lambda_.1} parent=11 // pred_region
          _
        $region24: #{_lambda_.1} parent=11 // pred_fallthru
          _
      $region12: #{_lambda_.1} parent=5 // pred_fallthru
        _
      %p164 = scmp.lt.s32.totalorder %s13, 12
      // Predicated region
      $region25: #{_lambda_.1} parent=5 // pred_check
        %p165 = pneg %p164
      $region26: #{_lambda_.1} parent=5 // pred_check_branch
        %167 = sbr.rel (%p165) target = $region28
      $region27: #{_lambda_.1} parent=5 // pred_region
        // Predicated region
        $region29: #{_lambda_.1} parent=27 // pred_check
          %p168 = pneg %p45
        $region30: #{_lambda_.1} parent=27 // pred_check_branch
          %170 = sbr.rel (%p168) target = $region32
        $region31: #{_lambda_.1} parent=27 // pred_region
          %p171 = scmp.lt.s32.totalorder %s20, 1
          %s172 = scalar_select %p171, %s20, 1
          %s173 = smul.addr %s172, 36
          %s174 = smul.addr %s173, 8
          %s175 = scalar_lea.vmem %s0, %s174
        $region32: #{_lambda_.1} parent=27 // pred_fallthru
          _
      $region28: #{_lambda_.1} parent=5 // pred_fallthru
        _
      %p176 = scmp.le.s32.totalorder 1, %s13
      %p177 = scmp.lt.s32.totalorder %s13, 13
      %p178 = pnand %p176, %p177
      %p179 = pneg %p178
      // Predicated region
      $region33: #{_lambda_.1} parent=5 // pred_check
        _
      $region34: #{_lambda_.1} parent=5 // pred_check_branch
        %181 = sbr.rel (%p178) target = $region36
      $region35: #{_lambda_.1} parent=5 // pred_region
        %s182 = ssub.s32 %s13, 1
        %p183 = scmp.lt.s32.totalorder %s22, 1
        %s184 = scalar_select %p183, %s22, 1
        %s185 = smul.addr %s184, 36
        %s186 = smul.addr %s185, 8
        %s187 = scalar_lea.vmem %s0, %s186
        %p188 = pneg %p51
        %p189 = pneg %p48
        %p190 = pneg %p72
        %p191 = pneg %p69
        %p192 = pneg %p93
        %p193 = pneg %p90
        %p194 = pneg %p114
        %p195 = pneg %p111
        %p196 = pneg %p140
        %p197 = pneg %p137
        %s198 = sand.u32 %s127, 1
        %s199 = scalar_lea.sflag [#allocation4], %s198
        %s200 = sand.u32 %s127, 1
        %s201 = scalar_lea.vmem [#allocation3], %s200
        %p202 = scmp.lt.s32.totalorder %s22, 1
        %s203 = scalar_select %p202, %s22, 1
        %s204 = smul.addr %s203, 36
        %s205 = smul.addr %s204, 8
        %s206 = scalar_lea.vmem %s0, %s205
        %v207 = vld [vmem:[%s206] sm:$0xff]
        %v208 = vld [vmem:[%s206 + $0x8] sm:$0xff]
        %v209 = vld [vmem:[%s206 + $0x10] sm:$0xff]
        %v210 = vld [vmem:[%s206 + $0x18] sm:$0xff]
        %v211 = vld [vmem:[%s206 + $0x20] sm:$0xff]
        %v212 = vld [vmem:[%s206 + $0x28] sm:$0xff]
        %v213 = vld [vmem:[%s206 + $0x30] sm:$0xff]
        %v214 = vld [vmem:[%s206 + $0x38] sm:$0xff]
        %v215 = vld [vmem:[%s206 + $0x40] sm:$0xff]
        %v216 = vld [vmem:[%s206 + $0x48] sm:$0xff]
        %v217 = vld [vmem:[%s206 + $0x50] sm:$0xff]
        %v218 = vld [vmem:[%s206 + $0x58] sm:$0xff]
        %v219 = vld [vmem:[%s206 + $0x60] sm:$0xff]
        %v220 = vld [vmem:[%s206 + $0x68] sm:$0xff]
        %v221 = vld [vmem:[%s206 + $0x70] sm:$0xff]
        %v222 = vld [vmem:[%s206 + $0x78] sm:$0xff]
        %v223 = vld [vmem:[%s206 + $0x80] sm:$0xff]
        %v224 = vld [vmem:[%s206 + $0x88] sm:$0xff]
        %v225 = vld [vmem:[%s206 + $0x90] sm:$0xff]
        %v226 = vld [vmem:[%s206 + $0x98] sm:$0xff]
        %v227 = vld [vmem:[%s206 + $0xa0] sm:$0xff]
        %v228 = vld [vmem:[%s206 + $0xa8] sm:$0xff]
        %v229 = vld [vmem:[%s206 + $0xb0] sm:$0xff]
        %v230 = vld [vmem:[%s206 + $0xb8] sm:$0xff]
        %v231 = vld [vmem:[%s206 + $0xc0] sm:$0xff]
        %v232 = vld [vmem:[%s206 + $0xc8] sm:$0xff]
        %s233 = smul.u32 %s23, 48
        %s234 = scalar_lea.vmem %s1, %s233
        %v235 = vld [vmem:[%s234] sm:$0xff]
        %vm236 = vcmask 130048
        %v238 = vsel %vm236, %v207, 0
        %v241 = vsel %vm236, %v208, 0
        %v244 = vsel %vm236, %v209, 0
        %v247 = vsel %vm236, %v210, 0
        %v250 = vsel %vm236, %v211, 0
        %v253 = vsel %vm236, %v212, 0
        %v256 = vsel %vm236, %v213, 0
        %v259 = vsel %vm236, %v214, 0
        %v262 = vsel %vm236, %v215, 0
        %v265 = vsel %vm236, %v216, 0
        %v268 = vsel %vm236, %v217, 0
        %v271 = vsel %vm236, %v218, 0
        %v274 = vsel %vm236, %v219, 0
        %v277 = vsel %vm236, %v220, 0
        %v280 = vsel %vm236, %v221, 0
        %v283 = vsel %vm236, %v222, 0
        %v286 = vsel %vm236, %v223, 0
        %v289 = vsel %vm236, %v224, 0
        %v292 = vsel %vm236, %v225, 0
        %v295 = vsel %vm236, %v226, 0
        %v298 = vsel %vm236, %v227, 0
        %v301 = vsel %vm236, %v228, 0
        %v304 = vsel %vm236, %v229, 0
        %v307 = vsel %vm236, %v230, 0
        %v310 = vsel %vm236, %v231, 0
        %v313 = vsel %vm236, %v232, 0
        %v316 = vsel %vm236, %v235, 0
        %318 = vmatprep.subr.mxu0 0.0
        %319 = vmatpush1.xpose.msra.mxu0 0.0
        %320 = vmatprep.subr.mxu0 0.0
        %321 = vmatpush1.xpose.msra.mxu0 0.0
        %322 = vmatprep.subr.mxu0 0.0
        %323 = vmatpush1.xpose.msra.mxu0 0.0
        %324 = vmatprep.subr.mxu0 0.0
        %325 = vmatpush1.xpose.msra.mxu0 0.0
        %326 = vmatprep.subr.mxu0 0.0
        %327 = vmatpush1.xpose.msra.mxu0 0.0
        %328 = vmatprep.subr.mxu0 0.0
        %329 = vmatpush1.xpose.msra.mxu0 0.0
        %330 = vmatprep.subr.mxu0 0.0
        %331 = vmatpush1.xpose.msra.mxu0 0.0
        %332 = vmatprep.subr.mxu0 0.0
        %333 = vmatpush1.xpose.msra.mxu0 0.0
        %334 = vmatprep.subr.mxu0 0.0
        %335 = vmatpush1.xpose.msra.mxu0 0.0
        %336 = vmatprep.subr.mxu0 0.0
        %337 = vmatpush1.xpose.msra.mxu0 0.0
        %338 = vmatprep.subr.mxu0 0.0
        %339 = vmatpush1.xpose.msra.mxu0 0.0
        %340 = vmatprep.subr.mxu0 0.0
        %341 = vmatpush1.xpose.msra.mxu0 0.0
        %342 = vmatprep.subr.mxu0 0.0
        %343 = vmatpush1.xpose.msra.mxu0 0.0
        %344 = vmatprep.subr.mxu0 0.0
        %345 = vmatpush1.xpose.msra.mxu0 0.0
        %346 = vmatprep.subr.mxu0 0.0
        %347 = vmatpush1.xpose.msra.mxu0 0.0
        %348 = vmatprep.subr.mxu0 0.0
        %349 = vmatpush1.xpose.msra.mxu0 %v316
        %350 = vmatprep.subr.mxu0 0.0
        %351 = vmatpush2.xpose.msra.mxu0 0.0
        %352 = vmatprep.subr.mxu0 0.0
        %353 = vmatpush2.xpose.msra.mxu0 0.0
        %354 = vmatprep.subr.mxu0 0.0
        %355 = vmatpush2.xpose.msra.mxu0 0.0
        %356 = vmatprep.subr.mxu0 0.0
        %357 = vmatpush2.xpose.msra.mxu0 0.0
        %358 = vmatprep.subr.mxu0 0.0
        %359 = vmatpush2.xpose.msra.mxu0 0.0
        %360 = vmatprep.subr.mxu0 0.0
        %361 = vmatpush2.xpose.msra.mxu0 0.0
        %362 = vmatprep.subr.mxu0 0.0
        %363 = vmatpush2.xpose.msra.mxu0 0.0
        %364 = vmatprep.subr.mxu0 0.0
        %365 = vmatpush2.xpose.msra.mxu0 0.0
        %366 = vmatprep.subr.mxu0 0.0
        %367 = vmatpush2.xpose.msra.mxu0 0.0
        %368 = vmatprep.subr.mxu0 0.0
        %369 = vmatpush2.xpose.msra.mxu0 0.0
        %370 = vmatprep.subr.mxu0 0.0
        %371 = vmatpush2.xpose.msra.mxu0 0.0
        %372 = vmatprep.subr.mxu0 0.0
        %373 = vmatpush2.xpose.msra.mxu0 0.0
        %374 = vmatprep.subr.mxu0 0.0
        %375 = vmatpush2.xpose.msra.mxu0 0.0
        %376 = vmatprep.subr.mxu0 0.0
        %377 = vmatpush2.xpose.msra.mxu0 0.0
        %378 = vmatprep.subr.mxu0 0.0
        %379 = vmatpush2.xpose.msra.mxu0 0.0
        %380 = vmatprep.subr.mxu0 0.0
        %381 = vmatpush2.xpose.msra.mxu0 0.0
        %382 = vmatprep.mubr.f32.mxu0 0.0
        %383 = vmatmul.mubr.f32.gmra.mxu0 %v238
        %v384 = vpop.f32.mrf.mxu0
        %v385 = vadd.f32 0.0, %v384
        %v386 = vpop.f32.mrf.mxu0
        %387 = vmatprep.mubr.f32.mxu0 0.0
        %388 = vmatmul.mubr.f32.gmra.mxu0 %v241
        %v389 = vpop.f32.mrf.mxu0
        %v390 = vadd.f32 0.0, %v389
        %v391 = vpop.f32.mrf.mxu0
        %392 = vmatprep.mubr.f32.mxu0 0.0
        %393 = vmatmul.mubr.f32.gmra.mxu0 %v244
        %v394 = vpop.f32.mrf.mxu0
        %v395 = vadd.f32 0.0, %v394
        %v396 = vpop.f32.mrf.mxu0
        %397 = vmatprep.mubr.f32.mxu0 0.0
        %398 = vmatmul.mubr.f32.gmra.mxu0 %v247
        %v399 = vpop.f32.mrf.mxu0
        %v400 = vadd.f32 0.0, %v399
        %v401 = vpop.f32.mrf.mxu0
        %402 = vmatprep.mubr.f32.mxu0 0.0
        %403 = vmatmul.mubr.f32.gmra.mxu0 %v250
        %v404 = vpop.f32.mrf.mxu0
        %v405 = vadd.f32 0.0, %v404
        %v406 = vpop.f32.mrf.mxu0
        %407 = vmatprep.mubr.f32.mxu0 0.0
        %408 = vmatmul.mubr.f32.gmra.mxu0 %v253
        %v409 = vpop.f32.mrf.mxu0
        %v410 = vadd.f32 0.0, %v409
        %v411 = vpop.f32.mrf.mxu0
        %412 = vmatprep.mubr.f32.mxu0 0.0
        %413 = vmatmul.mubr.f32.gmra.mxu0 %v256
        %v414 = vpop.f32.mrf.mxu0
        %v415 = vadd.f32 0.0, %v414
        %v416 = vpop.f32.mrf.mxu0
        %417 = vmatprep.mubr.f32.mxu0 0.0
        %418 = vmatmul.mubr.f32.gmra.mxu0 %v259
        %v419 = vpop.f32.mrf.mxu0
        %v420 = vadd.f32 0.0, %v419
        %v421 = vpop.f32.mrf.mxu0
        %422 = vmatprep.mubr.f32.mxu0 0.0
        %423 = vmatmul.mubr.f32.gmra.mxu0 %v262
        %v424 = vpop.f32.mrf.mxu0
        %v425 = vadd.f32 0.0, %v424
        %v426 = vpop.f32.mrf.mxu0
        %427 = vmatprep.mubr.f32.mxu0 0.0
        %428 = vmatmul.mubr.f32.gmra.mxu0 %v265
        %v429 = vpop.f32.mrf.mxu0
        %v430 = vadd.f32 0.0, %v429
        %v431 = vpop.f32.mrf.mxu0
        %432 = vmatprep.mubr.f32.mxu0 0.0
        %433 = vmatmul.mubr.f32.gmra.mxu0 %v268
        %v434 = vpop.f32.mrf.mxu0
        %v435 = vadd.f32 0.0, %v434
        %v436 = vpop.f32.mrf.mxu0
        %437 = vmatprep.mubr.f32.mxu0 0.0
        %438 = vmatmul.mubr.f32.gmra.mxu0 %v271
        %v439 = vpop.f32.mrf.mxu0
        %v440 = vadd.f32 0.0, %v439
        %v441 = vpop.f32.mrf.mxu0
        %442 = vmatprep.mubr.f32.mxu0 0.0
        %443 = vmatmul.mubr.f32.gmra.mxu0 %v274
        %v444 = vpop.f32.mrf.mxu0
        %v445 = vadd.f32 0.0, %v444
        %v446 = vpop.f32.mrf.mxu0
        %447 = vmatprep.mubr.f32.mxu0 0.0
        %448 = vmatmul.mubr.f32.gmra.mxu0 %v277
        %v449 = vpop.f32.mrf.mxu0
        %v450 = vadd.f32 0.0, %v449
        %v451 = vpop.f32.mrf.mxu0
        %452 = vmatprep.mubr.f32.mxu0 0.0
        %453 = vmatmul.mubr.f32.gmra.mxu0 %v280
        %v454 = vpop.f32.mrf.mxu0
        %v455 = vadd.f32 0.0, %v454
        %v456 = vpop.f32.mrf.mxu0
        %457 = vmatprep.mubr.f32.mxu0 0.0
        %458 = vmatmul.mubr.f32.gmra.mxu0 %v283
        %v459 = vpop.f32.mrf.mxu0
        %v460 = vadd.f32 0.0, %v459
        %v461 = vpop.f32.mrf.mxu0
        %462 = vmatprep.mubr.f32.mxu0 0.0
        %463 = vmatmul.mubr.f32.gmra.mxu0 %v286
        %v464 = vpop.f32.mrf.mxu0
        %v465 = vadd.f32 0.0, %v464
        %v466 = vpop.f32.mrf.mxu0
        %467 = vmatprep.mubr.f32.mxu0 0.0
        %468 = vmatmul.mubr.f32.gmra.mxu0 %v289
        %v469 = vpop.f32.mrf.mxu0
        %v470 = vadd.f32 0.0, %v469
        %v471 = vpop.f32.mrf.mxu0
        %472 = vmatprep.mubr.f32.mxu0 0.0
        %473 = vmatmul.mubr.f32.gmra.mxu0 %v292
        %v474 = vpop.f32.mrf.mxu0
        %v475 = vadd.f32 0.0, %v474
        %v476 = vpop.f32.mrf.mxu0
        %477 = vmatprep.mubr.f32.mxu0 0.0
        %478 = vmatmul.mubr.f32.gmra.mxu0 %v295
        %v479 = vpop.f32.mrf.mxu0
        %v480 = vadd.f32 0.0, %v479
        %v481 = vpop.f32.mrf.mxu0
        %482 = vmatprep.mubr.f32.mxu0 0.0
        %483 = vmatmul.mubr.f32.gmra.mxu0 %v298
        %v484 = vpop.f32.mrf.mxu0
        %v485 = vadd.f32 0.0, %v484
        %v486 = vpop.f32.mrf.mxu0
        %487 = vmatprep.mubr.f32.mxu0 0.0
        %488 = vmatmul.mubr.f32.gmra.mxu0 %v301
        %v489 = vpop.f32.mrf.mxu0
        %v490 = vadd.f32 0.0, %v489
        %v491 = vpop.f32.mrf.mxu0
        %492 = vmatprep.mubr.f32.mxu0 0.0
        %493 = vmatmul.mubr.f32.gmra.mxu0 %v304
        %v494 = vpop.f32.mrf.mxu0
        %v495 = vadd.f32 0.0, %v494
        %v496 = vpop.f32.mrf.mxu0
        %497 = vmatprep.mubr.f32.mxu0 0.0
        %498 = vmatmul.mubr.f32.gmra.mxu0 %v307
        %v499 = vpop.f32.mrf.mxu0
        %v500 = vadd.f32 0.0, %v499
        %v501 = vpop.f32.mrf.mxu0
        %502 = vmatprep.mubr.f32.mxu0 0.0
        %503 = vmatmul.mubr.f32.gmra.mxu0 %v310
        %v504 = vpop.f32.mrf.mxu0
        %v505 = vadd.f32 0.0, %v504
        %v506 = vpop.f32.mrf.mxu0
        %507 = vmatprep.mubr.f32.mxu0 0.0
        %508 = vmatmul.mubr.f32.gmra.mxu0 %v313
        %v509 = vpop.f32.mrf.mxu0
        %v510 = vadd.f32 0.0, %v509
        %v511 = vpop.f32.mrf.mxu0
        %512 = vdwg.mxu0
        %p513 = scmp.eq.s32.totalorder %s23, 0
        // Predicated region
        $region37: #{_lambda_.1} parent=35 // pred_check
          %p514 = pneg %p513
        $region38: #{_lambda_.1} parent=35 // pred_check_branch
          %516 = sbr.rel (%p514) target = $region40
        $region39: #{_lambda_.1} parent=35 // pred_region
          %vm517 = vcmask 64512
          %518 = vst.msk [vmem:[#allocation2] sm:$0xff] %vm517, %v385
          %519 = vst.msk [vmem:[#allocation2 + $0x8] sm:$0xff] %vm517, %v390
          %520 = vst.msk [vmem:[#allocation2 + $0x10] sm:$0xff] %vm517, %v395
          %521 = vst.msk [vmem:[#allocation2 + $0x18] sm:$0xff] %vm517, %v400
          %522 = vst.msk [vmem:[#allocation2 + $0x20] sm:$0xff] %vm517, %v405
          %523 = vst.msk [vmem:[#allocation2 + $0x28] sm:$0xff] %vm517, %v410
          %524 = vst.msk [vmem:[#allocation2 + $0x30] sm:$0xff] %vm517, %v415
          %525 = vst.msk [vmem:[#allocation2 + $0x38] sm:$0xff] %vm517, %v420
          %526 = vst.msk [vmem:[#allocation2 + $0x40] sm:$0xff] %vm517, %v425
          %527 = vst.msk [vmem:[#allocation2 + $0x48] sm:$0xff] %vm517, %v430
          %528 = vst.msk [vmem:[#allocation2 + $0x50] sm:$0xff] %vm517, %v435
          %529 = vst.msk [vmem:[#allocation2 + $0x58] sm:$0xff] %vm517, %v440
          %530 = vst.msk [vmem:[#allocation2 + $0x60] sm:$0xff] %vm517, %v445
          %531 = vst.msk [vmem:[#allocation2 + $0x68] sm:$0xff] %vm517, %v450
          %532 = vst.msk [vmem:[#allocation2 + $0x70] sm:$0xff] %vm517, %v455
          %533 = vst.msk [vmem:[#allocation2 + $0x78] sm:$0xff] %vm517, %v460
          %534 = vst.msk [vmem:[#allocation2 + $0x80] sm:$0xff] %vm517, %v465
          %535 = vst.msk [vmem:[#allocation2 + $0x88] sm:$0xff] %vm517, %v470
          %536 = vst.msk [vmem:[#allocation2 + $0x90] sm:$0xff] %vm517, %v475
          %537 = vst.msk [vmem:[#allocation2 + $0x98] sm:$0xff] %vm517, %v480
          %538 = vst.msk [vmem:[#allocation2 + $0xa0] sm:$0xff] %vm517, %v485
          %539 = vst.msk [vmem:[#allocation2 + $0xa8] sm:$0xff] %vm517, %v490
          %540 = vst.msk [vmem:[#allocation2 + $0xb0] sm:$0xff] %vm517, %v495
          %541 = vst.msk [vmem:[#allocation2 + $0xb8] sm:$0xff] %vm517, %v500
          %542 = vst.msk [vmem:[#allocation2 + $0xc0] sm:$0xff] %vm517, %v505
          %543 = vst.msk [vmem:[#allocation2 + $0xc8] sm:$0xff] %vm517, %v510
        $region40: #{_lambda_.1} parent=35 // pred_fallthru
          _
        %p544 = scmp.gt.s32.totalorder %s23, 0
        // Predicated region
        $region41: #{_lambda_.1} parent=35 // pred_check
          %p545 = pneg %p544
        $region42: #{_lambda_.1} parent=35 // pred_check_branch
          %547 = sbr.rel (%p545) target = $region44
        $region43: #{_lambda_.1} parent=35 // pred_region
          %v548 = vld [vmem:[#allocation2] sm:$0xff]
          %v549 = vld [vmem:[#allocation2 + $0x8] sm:$0xff]
          %v550 = vld [vmem:[#allocation2 + $0x10] sm:$0xff]
          %v551 = vld [vmem:[#allocation2 + $0x18] sm:$0xff]
          %v552 = vld [vmem:[#allocation2 + $0x20] sm:$0xff]
          %v553 = vld [vmem:[#allocation2 + $0x28] sm:$0xff]
          %v554 = vld [vmem:[#allocation2 + $0x30] sm:$0xff]
          %v555 = vld [vmem:[#allocation2 + $0x38] sm:$0xff]
          %v556 = vld [vmem:[#allocation2 + $0x40] sm:$0xff]
          %v557 = vld [vmem:[#allocation2 + $0x48] sm:$0xff]
          %v558 = vld [vmem:[#allocation2 + $0x50] sm:$0xff]
          %v559 = vld [vmem:[#allocation2 + $0x58] sm:$0xff]
          %v560 = vld [vmem:[#allocation2 + $0x60] sm:$0xff]
          %v561 = vld [vmem:[#allocation2 + $0x68] sm:$0xff]
          %v562 = vld [vmem:[#allocation2 + $0x70] sm:$0xff]
          %v563 = vld [vmem:[#allocation2 + $0x78] sm:$0xff]
          %v564 = vld [vmem:[#allocation2 + $0x80] sm:$0xff]
          %v565 = vld [vmem:[#allocation2 + $0x88] sm:$0xff]
          %v566 = vld [vmem:[#allocation2 + $0x90] sm:$0xff]
          %v567 = vld [vmem:[#allocation2 + $0x98] sm:$0xff]
          %v568 = vld [vmem:[#allocation2 + $0xa0] sm:$0xff]
          %v569 = vld [vmem:[#allocation2 + $0xa8] sm:$0xff]
          %v570 = vld [vmem:[#allocation2 + $0xb0] sm:$0xff]
          %v571 = vld [vmem:[#allocation2 + $0xb8] sm:$0xff]
          %v572 = vld [vmem:[#allocation2 + $0xc0] sm:$0xff]
          %v573 = vld [vmem:[#allocation2 + $0xc8] sm:$0xff]
          %v574 = vrot.slane %v548, 7
          %v575 = vrot.slane %v549, 7
          %v576 = vrot.slane %v550, 7
          %v577 = vrot.slane %v551, 7
          %v578 = vrot.slane %v552, 7
          %v579 = vrot.slane %v553, 7
          %v580 = vrot.slane %v554, 7
          %v581 = vrot.slane %v555, 7
          %v582 = vrot.slane %v556, 7
          %v583 = vrot.slane %v557, 7
          %v584 = vrot.slane %v558, 7
          %v585 = vrot.slane %v559, 7
          %v586 = vrot.slane %v560, 7
          %v587 = vrot.slane %v561, 7
          %v588 = vrot.slane %v562, 7
          %v589 = vrot.slane %v563, 7
          %v590 = vrot.slane %v564, 7
          %v591 = vrot.slane %v565, 7
          %v592 = vrot.slane %v566, 7
          %v593 = vrot.slane %v567, 7
          %v594 = vrot.slane %v568, 7
          %v595 = vrot.slane %v569, 7
          %v596 = vrot.slane %v570, 7
          %v597 = vrot.slane %v571, 7
          %v598 = vrot.slane %v572, 7
          %v599 = vrot.slane %v573, 7
          %v600 = vlaneseq
          %v601 = vshrl.u32 %v600, 7
          %vm602 = vcmp.lt.s32.totalorder %v601, 1
          %v603 = vsel %vm602, %v598, %v599
          %v604 = vsel %vm602, %v597, %v598
          %v605 = vsel %vm602, %v596, %v597
          %v606 = vsel %vm602, %v595, %v596
          %v607 = vsel %vm602, %v594, %v595
          %v608 = vsel %vm602, %v593, %v594
          %v609 = vsel %vm602, %v592, %v593
          %v610 = vsel %vm602, %v591, %v592
          %v611 = vsel %vm602, %v590, %v591
          %v612 = vsel %vm602, %v589, %v590
          %v613 = vsel %vm602, %v588, %v589
          %v614 = vsel %vm602, %v587, %v588
          %v615 = vsel %vm602, %v586, %v587
          %v616 = vsel %vm602, %v585, %v586
          %v617 = vsel %vm602, %v584, %v585
          %v618 = vsel %vm602, %v583, %v584
          %v619 = vsel %vm602, %v582, %v583
          %v620 = vsel %vm602, %v581, %v582
          %v621 = vsel %vm602, %v580, %v581
          %v622 = vsel %vm602, %v579, %v580
          %v623 = vsel %vm602, %v578, %v579
          %v624 = vsel %vm602, %v577, %v578
          %v625 = vsel %vm602, %v576, %v577
          %v626 = vsel %vm602, %v575, %v576
          %v627 = vsel %vm602, %v574, %v575
          %v628 = vsel %vm602, %v599, %v574
          %v629 = vadd.f32 %v628, %v385
          %v630 = vadd.f32 %v627, %v390
          %v631 = vadd.f32 %v626, %v395
          %v632 = vadd.f32 %v625, %v400
          %v633 = vadd.f32 %v624, %v405
          %v634 = vadd.f32 %v623, %v410
          %v635 = vadd.f32 %v622, %v415
          %v636 = vadd.f32 %v621, %v420
          %v637 = vadd.f32 %v620, %v425
          %v638 = vadd.f32 %v619, %v430
          %v639 = vadd.f32 %v618, %v435
          %v640 = vadd.f32 %v617, %v440
          %v641 = vadd.f32 %v616, %v445
          %v642 = vadd.f32 %v615, %v450
          %v643 = vadd.f32 %v614, %v455
          %v644 = vadd.f32 %v613, %v460
          %v645 = vadd.f32 %v612, %v465
          %v646 = vadd.f32 %v611, %v470
          %v647 = vadd.f32 %v610, %v475
          %v648 = vadd.f32 %v609, %v480
          %v649 = vadd.f32 %v608, %v485
          %v650 = vadd.f32 %v607, %v490
          %v651 = vadd.f32 %v606, %v495
          %v652 = vadd.f32 %v605, %v500
          %v653 = vadd.f32 %v604, %v505
          %v654 = vadd.f32 %v603, %v510
          %vm655 = vcmask 64512
          %656 = vst.msk [vmem:[#allocation2] sm:$0xff] %vm655, %v629
          %657 = vst.msk [vmem:[#allocation2 + $0x8] sm:$0xff] %vm655, %v630
          %658 = vst.msk [vmem:[#allocation2 + $0x10] sm:$0xff] %vm655, %v631
          %659 = vst.msk [vmem:[#allocation2 + $0x18] sm:$0xff] %vm655, %v632
          %660 = vst.msk [vmem:[#allocation2 + $0x20] sm:$0xff] %vm655, %v633
          %661 = vst.msk [vmem:[#allocation2 + $0x28] sm:$0xff] %vm655, %v634
          %662 = vst.msk [vmem:[#allocation2 + $0x30] sm:$0xff] %vm655, %v635
          %663 = vst.msk [vmem:[#allocation2 + $0x38] sm:$0xff] %vm655, %v636
          %664 = vst.msk [vmem:[#allocation2 + $0x40] sm:$0xff] %vm655, %v637
          %665 = vst.msk [vmem:[#allocation2 + $0x48] sm:$0xff] %vm655, %v638
          %666 = vst.msk [vmem:[#allocation2 + $0x50] sm:$0xff] %vm655, %v639
          %667 = vst.msk [vmem:[#allocation2 + $0x58] sm:$0xff] %vm655, %v640
          %668 = vst.msk [vmem:[#allocation2 + $0x60] sm:$0xff] %vm655, %v641
          %669 = vst.msk [vmem:[#allocation2 + $0x68] sm:$0xff] %vm655, %v642
          %670 = vst.msk [vmem:[#allocation2 + $0x70] sm:$0xff] %vm655, %v643
          %671 = vst.msk [vmem:[#allocation2 + $0x78] sm:$0xff] %vm655, %v644
          %672 = vst.msk [vmem:[#allocation2 + $0x80] sm:$0xff] %vm655, %v645
          %673 = vst.msk [vmem:[#allocation2 + $0x88] sm:$0xff] %vm655, %v646
          %674 = vst.msk [vmem:[#allocation2 + $0x90] sm:$0xff] %vm655, %v647
          %675 = vst.msk [vmem:[#allocation2 + $0x98] sm:$0xff] %vm655, %v648
          %676 = vst.msk [vmem:[#allocation2 + $0xa0] sm:$0xff] %vm655, %v649
          %677 = vst.msk [vmem:[#allocation2 + $0xa8] sm:$0xff] %vm655, %v650
          %678 = vst.msk [vmem:[#allocation2 + $0xb0] sm:$0xff] %vm655, %v651
          %679 = vst.msk [vmem:[#allocation2 + $0xb8] sm:$0xff] %vm655, %v652
          %680 = vst.msk [vmem:[#allocation2 + $0xc0] sm:$0xff] %vm655, %v653
          %681 = vst.msk [vmem:[#allocation2 + $0xc8] sm:$0xff] %vm655, %v654
        $region44: #{_lambda_.1} parent=35 // pred_fallthru
          _
        %v682 = vld [vmem:[#allocation2] sm:$0xff]
        %v683 = vld [vmem:[#allocation2 + $0x8] sm:$0xff]
        %v684 = vld [vmem:[#allocation2 + $0x10] sm:$0xff]
        %v685 = vld [vmem:[#allocation2 + $0x18] sm:$0xff]
        %v686 = vld [vmem:[#allocation2 + $0x20] sm:$0xff]
        %v687 = vld [vmem:[#allocation2 + $0x28] sm:$0xff]
        %v688 = vld [vmem:[#allocation2 + $0x30] sm:$0xff]
        %v689 = vld [vmem:[#allocation2 + $0x38] sm:$0xff]
        %v690 = vld [vmem:[#allocation2 + $0x40] sm:$0xff]
        %v691 = vld [vmem:[#allocation2 + $0x48] sm:$0xff]
        %v692 = vld [vmem:[#allocation2 + $0x50] sm:$0xff]
        %v693 = vld [vmem:[#allocation2 + $0x58] sm:$0xff]
        %v694 = vld [vmem:[#allocation2 + $0x60] sm:$0xff]
        %v695 = vld [vmem:[#allocation2 + $0x68] sm:$0xff]
        %v696 = vld [vmem:[#allocation2 + $0x70] sm:$0xff]
        %v697 = vld [vmem:[#allocation2 + $0x78] sm:$0xff]
        %v698 = vld [vmem:[#allocation2 + $0x80] sm:$0xff]
        %v699 = vld [vmem:[#allocation2 + $0x88] sm:$0xff]
        %v700 = vld [vmem:[#allocation2 + $0x90] sm:$0xff]
        %v701 = vld [vmem:[#allocation2 + $0x98] sm:$0xff]
        %v702 = vld [vmem:[#allocation2 + $0xa0] sm:$0xff]
        %v703 = vld [vmem:[#allocation2 + $0xa8] sm:$0xff]
        %v704 = vld [vmem:[#allocation2 + $0xb0] sm:$0xff]
        %v705 = vld [vmem:[#allocation2 + $0xb8] sm:$0xff]
        %v706 = vld [vmem:[#allocation2 + $0xc0] sm:$0xff]
        %v707 = vld [vmem:[#allocation2 + $0xc8] sm:$0xff]
        %v708 = vld [vmem:[%s206 + $0x10] sm:$0xff]
        %v709 = vld [vmem:[%s206 + $0x18] sm:$0xff]
        %v710 = vld [vmem:[%s206 + $0x20] sm:$0xff]
        %v711 = vld [vmem:[%s206 + $0x28] sm:$0xff]
        %v712 = vld [vmem:[%s206 + $0x30] sm:$0xff]
        %v713 = vld [vmem:[%s206 + $0x38] sm:$0xff]
        %v714 = vld [vmem:[%s206 + $0x40] sm:$0xff]
        %v715 = vld [vmem:[%s206 + $0x48] sm:$0xff]
        %v716 = vld [vmem:[%s206 + $0x50] sm:$0xff]
        %v717 = vld [vmem:[%s206 + $0x58] sm:$0xff]
        %v718 = vld [vmem:[%s206 + $0x60] sm:$0xff]
        %v719 = vld [vmem:[%s206 + $0x68] sm:$0xff]
        %v720 = vld [vmem:[%s206 + $0x70] sm:$0xff]
        %v721 = vld [vmem:[%s206 + $0x78] sm:$0xff]
        %v722 = vld [vmem:[%s206 + $0x80] sm:$0xff]
        %v723 = vld [vmem:[%s206 + $0x88] sm:$0xff]
        %v724 = vld [vmem:[%s206 + $0x90] sm:$0xff]
        %v725 = vld [vmem:[%s206 + $0x98] sm:$0xff]
        %v726 = vld [vmem:[%s206 + $0xa0] sm:$0xff]
        %v727 = vld [vmem:[%s206 + $0xa8] sm:$0xff]
        %v728 = vld [vmem:[%s206 + $0xb0] sm:$0xff]
        %v729 = vld [vmem:[%s206 + $0xb8] sm:$0xff]
        %v730 = vld [vmem:[%s206 + $0xc0] sm:$0xff]
        %v731 = vld [vmem:[%s206 + $0xc8] sm:$0xff]
        %v732 = vld [vmem:[%s206 + $0xd0] sm:$0xff]
        %v733 = vld [vmem:[%s206 + $0xd8] sm:$0xff]
        %s734 = sadd.s32 8, %s233
        %s735 = scalar_lea.vmem %s1, %s734
        %v736 = vld [vmem:[%s735] sm:$0xff]
        %v738 = vsel %vm236, %v708, 0
        %v741 = vsel %vm236, %v709, 0
        %v744 = vsel %vm236, %v710, 0
        %v747 = vsel %vm236, %v711, 0
        %v750 = vsel %vm236, %v712, 0
        %v753 = vsel %vm236, %v713, 0
        %v756 = vsel %vm236, %v714, 0
        %v759 = vsel %vm236, %v715, 0
        %v762 = vsel %vm236, %v716, 0
        %v765 = vsel %vm236, %v717, 0
        %v768 = vsel %vm236, %v718, 0
        %v771 = vsel %vm236, %v719, 0
        %v774 = vsel %vm236, %v720, 0
        %v777 = vsel %vm236, %v721, 0
        %v780 = vsel %vm236, %v722, 0
        %v783 = vsel %vm236, %v723, 0
        %v786 = vsel %vm236, %v724, 0
        %v789 = vsel %vm236, %v725, 0
        %v792 = vsel %vm236, %v726, 0
        %v795 = vsel %vm236, %v727, 0
        %v798 = vsel %vm236, %v728, 0
        %v801 = vsel %vm236, %v729, 0
        %v804 = vsel %vm236, %v730, 0
        %v807 = vsel %vm236, %v731, 0
        %v810 = vsel %vm236, %v732, 0
        %v813 = vsel %vm236, %v733, 0
        %v816 = vsel %vm236, %v736, 0
        %818 = vmatprep.subr.mxu0 0.0
        %819 = vmatpush1.xpose.msra.mxu0 0.0
        %820 = vmatprep.subr.mxu0 0.0
        %821 = vmatpush1.xpose.msra.mxu0 0.0
        %822 = vmatprep.subr.mxu0 0.0
        %823 = vmatpush1.xpose.msra.mxu0 0.0
        %824 = vmatprep.subr.mxu0 0.0
        %825 = vmatpush1.xpose.msra.mxu0 0.0
        %826 = vmatprep.subr.mxu0 0.0
        %827 = vmatpush1.xpose.msra.mxu0 0.0
        %828 = vmatprep.subr.mxu0 0.0
        %829 = vmatpush1.xpose.msra.mxu0 0.0
        %830 = vmatprep.subr.mxu0 0.0
        %831 = vmatpush1.xpose.msra.mxu0 0.0
        %832 = vmatprep.subr.mxu0 0.0
        %833 = vmatpush1.xpose.msra.mxu0 0.0
        %834 = vmatprep.subr.mxu0 0.0
        %835 = vmatpush1.xpose.msra.mxu0 0.0
        %836 = vmatprep.subr.mxu0 0.0
        %837 = vmatpush1.xpose.msra.mxu0 0.0
        %838 = vmatprep.subr.mxu0 0.0
        %839 = vmatpush1.xpose.msra.mxu0 0.0
        %840 = vmatprep.subr.mxu0 0.0
        %841 = vmatpush1.xpose.msra.mxu0 0.0
        %842 = vmatprep.subr.mxu0 0.0
        %843 = vmatpush1.xpose.msra.mxu0 0.0
        %844 = vmatprep.subr.mxu0 0.0
        %845 = vmatpush1.xpose.msra.mxu0 0.0
        %846 = vmatprep.subr.mxu0 0.0
        %847 = vmatpush1.xpose.msra.mxu0 0.0
        %848 = vmatprep.subr.mxu0 0.0
        %849 = vmatpush1.xpose.msra.mxu0 %v816
        %850 = vmatprep.subr.mxu0 0.0
        %851 = vmatpush2.xpose.msra.mxu0 0.0
        %852 = vmatprep.subr.mxu0 0.0
        %853 = vmatpush2.xpose.msra.mxu0 0.0
        %854 = vmatprep.subr.mxu0 0.0
        %855 = vmatpush2.xpose.msra.mxu0 0.0
        %856 = vmatprep.subr.mxu0 0.0
        %857 = vmatpush2.xpose.msra.mxu0 0.0
        %858 = vmatprep.subr.mxu0 0.0
        %859 = vmatpush2.xpose.msra.mxu0 0.0
        %860 = vmatprep.subr.mxu0 0.0
        %861 = vmatpush2.xpose.msra.mxu0 0.0
        %862 = vmatprep.subr.mxu0 0.0
        %863 = vmatpush2.xpose.msra.mxu0 0.0
        %864 = vmatprep.subr.mxu0 0.0
        %865 = vmatpush2.xpose.msra.mxu0 0.0
        %866 = vmatprep.subr.mxu0 0.0
        %867 = vmatpush2.xpose.msra.mxu0 0.0
        %868 = vmatprep.subr.mxu0 0.0
        %869 = vmatpush2.xpose.msra.mxu0 0.0
        %870 = vmatprep.subr.mxu0 0.0
        %871 = vmatpush2.xpose.msra.mxu0 0.0
        %872 = vmatprep.subr.mxu0 0.0
        %873 = vmatpush2.xpose.msra.mxu0 0.0
        %874 = vmatprep.subr.mxu0 0.0
        %875 = vmatpush2.xpose.msra.mxu0 0.0
        %876 = vmatprep.subr.mxu0 0.0
        %877 = vmatpush2.xpose.msra.mxu0 0.0
        %878 = vmatprep.subr.mxu0 0.0
        %879 = vmatpush2.xpose.msra.mxu0 0.0
        %880 = vmatprep.subr.mxu0 0.0
        %881 = vmatpush2.xpose.msra.mxu0 0.0
        %882 = vmatprep.mubr.f32.mxu0 0.0
        %883 = vmatmul.mubr.f32.gmra.mxu0 %v738
        %v884 = vpop.f32.mrf.mxu0
        %v885 = vadd.f32 0.0, %v884
        %v886 = vpop.f32.mrf.mxu0
        %887 = vmatprep.mubr.f32.mxu0 0.0
        %888 = vmatmul.mubr.f32.gmra.mxu0 %v741
        %v889 = vpop.f32.mrf.mxu0
        %v890 = vadd.f32 0.0, %v889
        %v891 = vpop.f32.mrf.mxu0
        %892 = vmatprep.mubr.f32.mxu0 0.0
        %893 = vmatmul.mubr.f32.gmra.mxu0 %v744
        %v894 = vpop.f32.mrf.mxu0
        %v895 = vadd.f32 0.0, %v894
        %v896 = vpop.f32.mrf.mxu0
        %897 = vmatprep.mubr.f32.mxu0 0.0
        %898 = vmatmul.mubr.f32.gmra.mxu0 %v747
        %v899 = vpop.f32.mrf.mxu0
        %v900 = vadd.f32 0.0, %v899
        %v901 = vpop.f32.mrf.mxu0
        %902 = vmatprep.mubr.f32.mxu0 0.0
        %903 = vmatmul.mubr.f32.gmra.mxu0 %v750
        %v904 = vpop.f32.mrf.mxu0
        %v905 = vadd.f32 0.0, %v904
        %v906 = vpop.f32.mrf.mxu0
        %907 = vmatprep.mubr.f32.mxu0 0.0
        %908 = vmatmul.mubr.f32.gmra.mxu0 %v753
        %v909 = vpop.f32.mrf.mxu0
        %v910 = vadd.f32 0.0, %v909
        %v911 = vpop.f32.mrf.mxu0
        %912 = vmatprep.mubr.f32.mxu0 0.0
        %913 = vmatmul.mubr.f32.gmra.mxu0 %v756
        %v914 = vpop.f32.mrf.mxu0
        %v915 = vadd.f32 0.0, %v914
        %v916 = vpop.f32.mrf.mxu0
        %917 = vmatprep.mubr.f32.mxu0 0.0
        %918 = vmatmul.mubr.f32.gmra.mxu0 %v759
        %v919 = vpop.f32.mrf.mxu0
        %v920 = vadd.f32 0.0, %v919
        %v921 = vpop.f32.mrf.mxu0
        %922 = vmatprep.mubr.f32.mxu0 0.0
        %923 = vmatmul.mubr.f32.gmra.mxu0 %v762
        %v924 = vpop.f32.mrf.mxu0
        %v925 = vadd.f32 0.0, %v924
        %v926 = vpop.f32.mrf.mxu0
        %927 = vmatprep.mubr.f32.mxu0 0.0
        %928 = vmatmul.mubr.f32.gmra.mxu0 %v765
        %v929 = vpop.f32.mrf.mxu0
        %v930 = vadd.f32 0.0, %v929
        %v931 = vpop.f32.mrf.mxu0
        %932 = vmatprep.mubr.f32.mxu0 0.0
        %933 = vmatmul.mubr.f32.gmra.mxu0 %v768
        %v934 = vpop.f32.mrf.mxu0
        %v935 = vadd.f32 0.0, %v934
        %v936 = vpop.f32.mrf.mxu0
        %937 = vmatprep.mubr.f32.mxu0 0.0
        %938 = vmatmul.mubr.f32.gmra.mxu0 %v771
        %v939 = vpop.f32.mrf.mxu0
        %v940 = vadd.f32 0.0, %v939
        %v941 = vpop.f32.mrf.mxu0
        %942 = vmatprep.mubr.f32.mxu0 0.0
        %943 = vmatmul.mubr.f32.gmra.mxu0 %v774
        %v944 = vpop.f32.mrf.mxu0
        %v945 = vadd.f32 0.0, %v944
        %v946 = vpop.f32.mrf.mxu0
        %947 = vmatprep.mubr.f32.mxu0 0.0
        %948 = vmatmul.mubr.f32.gmra.mxu0 %v777
        %v949 = vpop.f32.mrf.mxu0
        %v950 = vadd.f32 0.0, %v949
        %v951 = vpop.f32.mrf.mxu0
        %952 = vmatprep.mubr.f32.mxu0 0.0
        %953 = vmatmul.mubr.f32.gmra.mxu0 %v780
        %v954 = vpop.f32.mrf.mxu0
        %v955 = vadd.f32 0.0, %v954
        %v956 = vpop.f32.mrf.mxu0
        %957 = vmatprep.mubr.f32.mxu0 0.0
        %958 = vmatmul.mubr.f32.gmra.mxu0 %v783
        %v959 = vpop.f32.mrf.mxu0
        %v960 = vadd.f32 0.0, %v959
        %v961 = vpop.f32.mrf.mxu0
        %962 = vmatprep.mubr.f32.mxu0 0.0
        %963 = vmatmul.mubr.f32.gmra.mxu0 %v786
        %v964 = vpop.f32.mrf.mxu0
        %v965 = vadd.f32 0.0, %v964
        %v966 = vpop.f32.mrf.mxu0
        %967 = vmatprep.mubr.f32.mxu0 0.0
        %968 = vmatmul.mubr.f32.gmra.mxu0 %v789
        %v969 = vpop.f32.mrf.mxu0
        %v970 = vadd.f32 0.0, %v969
        %v971 = vpop.f32.mrf.mxu0
        %972 = vmatprep.mubr.f32.mxu0 0.0
        %973 = vmatmul.mubr.f32.gmra.mxu0 %v792
        %v974 = vpop.f32.mrf.mxu0
        %v975 = vadd.f32 0.0, %v974
        %v976 = vpop.f32.mrf.mxu0
        %977 = vmatprep.mubr.f32.mxu0 0.0
        %978 = vmatmul.mubr.f32.gmra.mxu0 %v795
        %v979 = vpop.f32.mrf.mxu0
        %v980 = vadd.f32 0.0, %v979
        %v981 = vpop.f32.mrf.mxu0
        %982 = vmatprep.mubr.f32.mxu0 0.0
        %983 = vmatmul.mubr.f32.gmra.mxu0 %v798
        %v984 = vpop.f32.mrf.mxu0
        %v985 = vadd.f32 0.0, %v984
        %v986 = vpop.f32.mrf.mxu0
        %987 = vmatprep.mubr.f32.mxu0 0.0
        %988 = vmatmul.mubr.f32.gmra.mxu0 %v801
        %v989 = vpop.f32.mrf.mxu0
        %v990 = vadd.f32 0.0, %v989
        %v991 = vpop.f32.mrf.mxu0
        %992 = vmatprep.mubr.f32.mxu0 0.0
        %993 = vmatmul.mubr.f32.gmra.mxu0 %v804
        %v994 = vpop.f32.mrf.mxu0
        %v995 = vadd.f32 0.0, %v994
        %v996 = vpop.f32.mrf.mxu0
        %997 = vmatprep.mubr.f32.mxu0 0.0
        %998 = vmatmul.mubr.f32.gmra.mxu0 %v807
        %v999 = vpop.f32.mrf.mxu0
        %v1000 = vadd.f32 0.0, %v999
        %v1001 = vpop.f32.mrf.mxu0
        %1002 = vmatprep.mubr.f32.mxu0 0.0
        %1003 = vmatmul.mubr.f32.gmra.mxu0 %v810
        %v1004 = vpop.f32.mrf.mxu0
        %v1005 = vadd.f32 0.0, %v1004
        %v1006 = vpop.f32.mrf.mxu0
        %1007 = vmatprep.mubr.f32.mxu0 0.0
        %1008 = vmatmul.mubr.f32.gmra.mxu0 %v813
        %v1009 = vpop.f32.mrf.mxu0
        %v1010 = vadd.f32 0.0, %v1009
        %v1011 = vpop.f32.mrf.mxu0
        %1012 = vdwg.mxu0
        %v1013 = vadd.f32 %v682, %v885
        %v1014 = vadd.f32 %v683, %v890
        %v1015 = vadd.f32 %v684, %v895
        %v1016 = vadd.f32 %v685, %v900
        %v1017 = vadd.f32 %v686, %v905
        %v1018 = vadd.f32 %v687, %v910
        %v1019 = vadd.f32 %v688, %v915
        %v1020 = vadd.f32 %v689, %v920
        %v1021 = vadd.f32 %v690, %v925
        %v1022 = vadd.f32 %v691, %v930
        %v1023 = vadd.f32 %v692, %v935
        %v1024 = vadd.f32 %v693, %v940
        %v1025 = vadd.f32 %v694, %v945
        %v1026 = vadd.f32 %v695, %v950
        %v1027 = vadd.f32 %v696, %v955
        %v1028 = vadd.f32 %v697, %v960
        %v1029 = vadd.f32 %v698, %v965
        %v1030 = vadd.f32 %v699, %v970
        %v1031 = vadd.f32 %v700, %v975
        %v1032 = vadd.f32 %v701, %v980
        %v1033 = vadd.f32 %v702, %v985
        %v1034 = vadd.f32 %v703, %v990
        %v1035 = vadd.f32 %v704, %v995
        %v1036 = vadd.f32 %v705, %v1000
        %v1037 = vadd.f32 %v706, %v1005
        %v1038 = vadd.f32 %v707, %v1010
        %vm1039 = vcmask 64512
        %1040 = vst.msk [vmem:[#allocation2] sm:$0xff] %vm1039, %v1013
        %1041 = vst.msk [vmem:[#allocation2 + $0x8] sm:$0xff] %vm1039, %v1014
        %1042 = vst.msk [vmem:[#allocation2 + $0x10] sm:$0xff] %vm1039, %v1015
        %1043 = vst.msk [vmem:[#allocation2 + $0x18] sm:$0xff] %vm1039, %v1016
        %1044 = vst.msk [vmem:[#allocation2 + $0x20] sm:$0xff] %vm1039, %v1017
        %1045 = vst.msk [vmem:[#allocation2 + $0x28] sm:$0xff] %vm1039, %v1018
        %1046 = vst.msk [vmem:[#allocation2 + $0x30] sm:$0xff] %vm1039, %v1019
        %1047 = vst.msk [vmem:[#allocation2 + $0x38] sm:$0xff] %vm1039, %v1020
        %1048 = vst.msk [vmem:[#allocation2 + $0x40] sm:$0xff] %vm1039, %v1021
        %1049 = vst.msk [vmem:[#allocation2 + $0x48] sm:$0xff] %vm1039, %v1022
        %1050 = vst.msk [vmem:[#allocation2 + $0x50] sm:$0xff] %vm1039, %v1023
        %1051 = vst.msk [vmem:[#allocation2 + $0x58] sm:$0xff] %vm1039, %v1024
        %1052 = vst.msk [vmem:[#allocation2 + $0x60] sm:$0xff] %vm1039, %v1025
        %1053 = vst.msk [vmem:[#allocation2 + $0x68] sm:$0xff] %vm1039, %v1026
        %1054 = vst.msk [vmem:[#allocation2 + $0x70] sm:$0xff] %vm1039, %v1027
        %1055 = vst.msk [vmem:[#allocation2 + $0x78] sm:$0xff] %vm1039, %v1028
        %1056 = vst.msk [vmem:[#allocation2 + $0x80] sm:$0xff] %vm1039, %v1029
        %1057 = vst.msk [vmem:[#allocation2 + $0x88] sm:$0xff] %vm1039, %v1030
        %1058 = vst.msk [vmem:[#allocation2 + $0x90] sm:$0xff] %vm1039, %v1031
        %1059 = vst.msk [vmem:[#allocation2 + $0x98] sm:$0xff] %vm1039, %v1032
        %1060 = vst.msk [vmem:[#allocation2 + $0xa0] sm:$0xff] %vm1039, %v1033
        %1061 = vst.msk [vmem:[#allocation2 + $0xa8] sm:$0xff] %vm1039, %v1034
        %1062 = vst.msk [vmem:[#allocation2 + $0xb0] sm:$0xff] %vm1039, %v1035
        %1063 = vst.msk [vmem:[#allocation2 + $0xb8] sm:$0xff] %vm1039, %v1036
        %1064 = vst.msk [vmem:[#allocation2 + $0xc0] sm:$0xff] %vm1039, %v1037
        %1065 = vst.msk [vmem:[#allocation2 + $0xc8] sm:$0xff] %vm1039, %v1038
        %v1066 = vld [vmem:[#allocation2] sm:$0xff]
        %v1067 = vld [vmem:[#allocation2 + $0x8] sm:$0xff]
        %v1068 = vld [vmem:[#allocation2 + $0x10] sm:$0xff]
        %v1069 = vld [vmem:[#allocation2 + $0x18] sm:$0xff]
        %v1070 = vld [vmem:[#allocation2 + $0x20] sm:$0xff]
        %v1071 = vld [vmem:[#allocation2 + $0x28] sm:$0xff]
        %v1072 = vld [vmem:[#allocation2 + $0x30] sm:$0xff]
        %v1073 = vld [vmem:[#allocation2 + $0x38] sm:$0xff]
        %v1074 = vld [vmem:[#allocation2 + $0x40] sm:$0xff]
        %v1075 = vld [vmem:[#allocation2 + $0x48] sm:$0xff]
        %v1076 = vld [vmem:[#allocation2 + $0x50] sm:$0xff]
        %v1077 = vld [vmem:[#allocation2 + $0x58] sm:$0xff]
        %v1078 = vld [vmem:[#allocation2 + $0x60] sm:$0xff]
        %v1079 = vld [vmem:[#allocation2 + $0x68] sm:$0xff]
        %v1080 = vld [vmem:[#allocation2 + $0x70] sm:$0xff]
        %v1081 = vld [vmem:[#allocation2 + $0x78] sm:$0xff]
        %v1082 = vld [vmem:[#allocation2 + $0x80] sm:$0xff]
        %v1083 = vld [vmem:[#allocation2 + $0x88] sm:$0xff]
        %v1084 = vld [vmem:[#allocation2 + $0x90] sm:$0xff]
        %v1085 = vld [vmem:[#allocation2 + $0x98] sm:$0xff]
        %v1086 = vld [vmem:[#allocation2 + $0xa0] sm:$0xff]
        %v1087 = vld [vmem:[#allocation2 + $0xa8] sm:$0xff]
        %v1088 = vld [vmem:[#allocation2 + $0xb0] sm:$0xff]
        %v1089 = vld [vmem:[#allocation2 + $0xb8] sm:$0xff]
        %v1090 = vld [vmem:[#allocation2 + $0xc0] sm:$0xff]
        %v1091 = vld [vmem:[#allocation2 + $0xc8] sm:$0xff]
        %v1092 = vld [vmem:[%s206 + $0x20] sm:$0xff]
        %v1093 = vld [vmem:[%s206 + $0x28] sm:$0xff]
        %v1094 = vld [vmem:[%s206 + $0x30] sm:$0xff]
        %v1095 = vld [vmem:[%s206 + $0x38] sm:$0xff]
        %v1096 = vld [vmem:[%s206 + $0x40] sm:$0xff]
        %v1097 = vld [vmem:[%s206 + $0x48] sm:$0xff]
        %v1098 = vld [vmem:[%s206 + $0x50] sm:$0xff]
        %v1099 = vld [vmem:[%s206 + $0x58] sm:$0xff]
        %v1100 = vld [vmem:[%s206 + $0x60] sm:$0xff]
        %v1101 = vld [vmem:[%s206 + $0x68] sm:$0xff]
        %v1102 = vld [vmem:[%s206 + $0x70] sm:$0xff]
        %v1103 = vld [vmem:[%s206 + $0x78] sm:$0xff]
        %v1104 = vld [vmem:[%s206 + $0x80] sm:$0xff]
        %v1105 = vld [vmem:[%s206 + $0x88] sm:$0xff]
        %v1106 = vld [vmem:[%s206 + $0x90] sm:$0xff]
        %v1107 = vld [vmem:[%s206 + $0x98] sm:$0xff]
        %v1108 = vld [vmem:[%s206 + $0xa0] sm:$0xff]
        %v1109 = vld [vmem:[%s206 + $0xa8] sm:$0xff]
        %v1110 = vld [vmem:[%s206 + $0xb0] sm:$0xff]
        %v1111 = vld [vmem:[%s206 + $0xb8] sm:$0xff]
        %v1112 = vld [vmem:[%s206 + $0xc0] sm:$0xff]
        %v1113 = vld [vmem:[%s206 + $0xc8] sm:$0xff]
        %v1114 = vld [vmem:[%s206 + $0xd0] sm:$0xff]
        %v1115 = vld [vmem:[%s206 + $0xd8] sm:$0xff]
        %v1116 = vld [vmem:[%s206 + $0xe0] sm:$0xff]
        %v1117 = vld [vmem:[%s206 + $0xe8] sm:$0xff]
        %s1118 = sadd.s32 16, %s233
        %s1119 = scalar_lea.vmem %s1, %s1118
        %v1120 = vld [vmem:[%s1119] sm:$0xff]
        %v1122 = vsel %vm236, %v1092, 0
        %v1125 = vsel %vm236, %v1093, 0
        %v1128 = vsel %vm236, %v1094, 0
        %v1131 = vsel %vm236, %v1095, 0
        %v1134 = vsel %vm236, %v1096, 0
        %v1137 = vsel %vm236, %v1097, 0
        %v1140 = vsel %vm236, %v1098, 0
        %v1143 = vsel %vm236, %v1099, 0
        %v1146 = vsel %vm236, %v1100, 0
        %v1149 = vsel %vm236, %v1101, 0
        %v1152 = vsel %vm236, %v1102, 0
        %v1155 = vsel %vm236, %v1103, 0
        %v1158 = vsel %vm236, %v1104, 0
        %v1161 = vsel %vm236, %v1105, 0
        %v1164 = vsel %vm236, %v1106, 0
        %v1167 = vsel %vm236, %v1107, 0
        %v1170 = vsel %vm236, %v1108, 0
        %v1173 = vsel %vm236, %v1109, 0
        %v1176 = vsel %vm236, %v1110, 0
        %v1179 = vsel %vm236, %v1111, 0
        %v1182 = vsel %vm236, %v1112, 0
        %v1185 = vsel %vm236, %v1113, 0
        %v1188 = vsel %vm236, %v1114, 0
        %v1191 = vsel %vm236, %v1115, 0
        %v1194 = vsel %vm236, %v1116, 0
        %v1197 = vsel %vm236, %v1117, 0
        %v1200 = vsel %vm236, %v1120, 0
        %1202 = vmatprep.subr.mxu0 0.0
        %1203 = vmatpush1.xpose.msra.mxu0 0.0
        %1204 = vmatprep.subr.mxu0 0.0
        %1205 = vmatpush1.xpose.msra.mxu0 0.0
        %1206 = vmatprep.subr.mxu0 0.0
        %1207 = vmatpush1.xpose.msra.mxu0 0.0
        %1208 = vmatprep.subr.mxu0 0.0
        %1209 = vmatpush1.xpose.msra.mxu0 0.0
        %1210 = vmatprep.subr.mxu0 0.0
        %1211 = vmatpush1.xpose.msra.mxu0 0.0
        %1212 = vmatprep.subr.mxu0 0.0
        %1213 = vmatpush1.xpose.msra.mxu0 0.0
        %1214 = vmatprep.subr.mxu0 0.0
        %1215 = vmatpush1.xpose.msra.mxu0 0.0
        %1216 = vmatprep.subr.mxu0 0.0
        %1217 = vmatpush1.xpose.msra.mxu0 0.0
        %1218 = vmatprep.subr.mxu0 0.0
        %1219 = vmatpush1.xpose.msra.mxu0 0.0
        %1220 = vmatprep.subr.mxu0 0.0
        %1221 = vmatpush1.xpose.msra.mxu0 0.0
        %1222 = vmatprep.subr.mxu0 0.0
        %1223 = vmatpush1.xpose.msra.mxu0 0.0
        %1224 = vmatprep.subr.mxu0 0.0
        %1225 = vmatpush1.xpose.msra.mxu0 0.0
        %1226 = vmatprep.subr.mxu0 0.0
        %1227 = vmatpush1.xpose.msra.mxu0 0.0
        %1228 = vmatprep.subr.mxu0 0.0
        %1229 = vmatpush1.xpose.msra.mxu0 0.0
        %1230 = vmatprep.subr.mxu0 0.0
        %1231 = vmatpush1.xpose.msra.mxu0 0.0
        %1232 = vmatprep.subr.mxu0 0.0
        %1233 = vmatpush1.xpose.msra.mxu0 %v1200
        %1234 = vmatprep.subr.mxu0 0.0
        %1235 = vmatpush2.xpose.msra.mxu0 0.0
        %1236 = vmatprep.subr.mxu0 0.0
        %1237 = vmatpush2.xpose.msra.mxu0 0.0
        %1238 = vmatprep.subr.mxu0 0.0
        %1239 = vmatpush2.xpose.msra.mxu0 0.0
        %1240 = vmatprep.subr.mxu0 0.0
        %1241 = vmatpush2.xpose.msra.mxu0 0.0
        %1242 = vmatprep.subr.mxu0 0.0
        %1243 = vmatpush2.xpose.msra.mxu0 0.0
        %1244 = vmatprep.subr.mxu0 0.0
        %1245 = vmatpush2.xpose.msra.mxu0 0.0
        %1246 = vmatprep.subr.mxu0 0.0
        %1247 = vmatpush2.xpose.msra.mxu0 0.0
        %1248 = vmatprep.subr.mxu0 0.0
        %1249 = vmatpush2.xpose.msra.mxu0 0.0
        %1250 = vmatprep.subr.mxu0 0.0
        %1251 = vmatpush2.xpose.msra.mxu0 0.0
        %1252 = vmatprep.subr.mxu0 0.0
        %1253 = vmatpush2.xpose.msra.mxu0 0.0
        %1254 = vmatprep.subr.mxu0 0.0
        %1255 = vmatpush2.xpose.msra.mxu0 0.0
        %1256 = vmatprep.subr.mxu0 0.0
        %1257 = vmatpush2.xpose.msra.mxu0 0.0
        %1258 = vmatprep.subr.mxu0 0.0
        %1259 = vmatpush2.xpose.msra.mxu0 0.0
        %1260 = vmatprep.subr.mxu0 0.0
        %1261 = vmatpush2.xpose.msra.mxu0 0.0
        %1262 = vmatprep.subr.mxu0 0.0
        %1263 = vmatpush2.xpose.msra.mxu0 0.0
        %1264 = vmatprep.subr.mxu0 0.0
        %1265 = vmatpush2.xpose.msra.mxu0 0.0
        %1266 = vmatprep.mubr.f32.mxu0 0.0
        %1267 = vmatmul.mubr.f32.gmra.mxu0 %v1122
        %v1268 = vpop.f32.mrf.mxu0
        %v1269 = vadd.f32 0.0, %v1268
        %v1270 = vpop.f32.mrf.mxu0
        %1271 = vmatprep.mubr.f32.mxu0 0.0
        %1272 = vmatmul.mubr.f32.gmra.mxu0 %v1125
        %v1273 = vpop.f32.mrf.mxu0
        %v1274 = vadd.f32 0.0, %v1273
        %v1275 = vpop.f32.mrf.mxu0
        %1276 = vmatprep.mubr.f32.mxu0 0.0
        %1277 = vmatmul.mubr.f32.gmra.mxu0 %v1128
        %v1278 = vpop.f32.mrf.mxu0
        %v1279 = vadd.f32 0.0, %v1278
        %v1280 = vpop.f32.mrf.mxu0
        %1281 = vmatprep.mubr.f32.mxu0 0.0
        %1282 = vmatmul.mubr.f32.gmra.mxu0 %v1131
        %v1283 = vpop.f32.mrf.mxu0
        %v1284 = vadd.f32 0.0, %v1283
        %v1285 = vpop.f32.mrf.mxu0
        %1286 = vmatprep.mubr.f32.mxu0 0.0
        %1287 = vmatmul.mubr.f32.gmra.mxu0 %v1134
        %v1288 = vpop.f32.mrf.mxu0
        %v1289 = vadd.f32 0.0, %v1288
        %v1290 = vpop.f32.mrf.mxu0
        %1291 = vmatprep.mubr.f32.mxu0 0.0
        %1292 = vmatmul.mubr.f32.gmra.mxu0 %v1137
        %v1293 = vpop.f32.mrf.mxu0
        %v1294 = vadd.f32 0.0, %v1293
        %v1295 = vpop.f32.mrf.mxu0
        %1296 = vmatprep.mubr.f32.mxu0 0.0
        %1297 = vmatmul.mubr.f32.gmra.mxu0 %v1140
        %v1298 = vpop.f32.mrf.mxu0
        %v1299 = vadd.f32 0.0, %v1298
        %v1300 = vpop.f32.mrf.mxu0
        %1301 = vmatprep.mubr.f32.mxu0 0.0
        %1302 = vmatmul.mubr.f32.gmra.mxu0 %v1143
        %v1303 = vpop.f32.mrf.mxu0
        %v1304 = vadd.f32 0.0, %v1303
        %v1305 = vpop.f32.mrf.mxu0
        %1306 = vmatprep.mubr.f32.mxu0 0.0
        %1307 = vmatmul.mubr.f32.gmra.mxu0 %v1146
        %v1308 = vpop.f32.mrf.mxu0
        %v1309 = vadd.f32 0.0, %v1308
        %v1310 = vpop.f32.mrf.mxu0
        %1311 = vmatprep.mubr.f32.mxu0 0.0
        %1312 = vmatmul.mubr.f32.gmra.mxu0 %v1149
        %v1313 = vpop.f32.mrf.mxu0
        %v1314 = vadd.f32 0.0, %v1313
        %v1315 = vpop.f32.mrf.mxu0
        %1316 = vmatprep.mubr.f32.mxu0 0.0
        %1317 = vmatmul.mubr.f32.gmra.mxu0 %v1152
        %v1318 = vpop.f32.mrf.mxu0
        %v1319 = vadd.f32 0.0, %v1318
        %v1320 = vpop.f32.mrf.mxu0
        %1321 = vmatprep.mubr.f32.mxu0 0.0
        %1322 = vmatmul.mubr.f32.gmra.mxu0 %v1155
        %v1323 = vpop.f32.mrf.mxu0
        %v1324 = vadd.f32 0.0, %v1323
        %v1325 = vpop.f32.mrf.mxu0
        %1326 = vmatprep.mubr.f32.mxu0 0.0
        %1327 = vmatmul.mubr.f32.gmra.mxu0 %v1158
        %v1328 = vpop.f32.mrf.mxu0
        %v1329 = vadd.f32 0.0, %v1328
        %v1330 = vpop.f32.mrf.mxu0
        %1331 = vmatprep.mubr.f32.mxu0 0.0
        %1332 = vmatmul.mubr.f32.gmra.mxu0 %v1161
        %v1333 = vpop.f32.mrf.mxu0
        %v1334 = vadd.f32 0.0, %v1333
        %v1335 = vpop.f32.mrf.mxu0
        %1336 = vmatprep.mubr.f32.mxu0 0.0
        %1337 = vmatmul.mubr.f32.gmra.mxu0 %v1164
        %v1338 = vpop.f32.mrf.mxu0
        %v1339 = vadd.f32 0.0, %v1338
        %v1340 = vpop.f32.mrf.mxu0
        %1341 = vmatprep.mubr.f32.mxu0 0.0
        %1342 = vmatmul.mubr.f32.gmra.mxu0 %v1167
        %v1343 = vpop.f32.mrf.mxu0
        %v1344 = vadd.f32 0.0, %v1343
        %v1345 = vpop.f32.mrf.mxu0
        %1346 = vmatprep.mubr.f32.mxu0 0.0
        %1347 = vmatmul.mubr.f32.gmra.mxu0 %v1170
        %v1348 = vpop.f32.mrf.mxu0
        %v1349 = vadd.f32 0.0, %v1348
        %v1350 = vpop.f32.mrf.mxu0
        %1351 = vmatprep.mubr.f32.mxu0 0.0
        %1352 = vmatmul.mubr.f32.gmra.mxu0 %v1173
        %v1353 = vpop.f32.mrf.mxu0
        %v1354 = vadd.f32 0.0, %v1353
        %v1355 = vpop.f32.mrf.mxu0
        %1356 = vmatprep.mubr.f32.mxu0 0.0
        %1357 = vmatmul.mubr.f32.gmra.mxu0 %v1176
        %v1358 = vpop.f32.mrf.mxu0
        %v1359 = vadd.f32 0.0, %v1358
        %v1360 = vpop.f32.mrf.mxu0
        %1361 = vmatprep.mubr.f32.mxu0 0.0
        %1362 = vmatmul.mubr.f32.gmra.mxu0 %v1179
        %v1363 = vpop.f32.mrf.mxu0
        %v1364 = vadd.f32 0.0, %v1363
        %v1365 = vpop.f32.mrf.mxu0
        %1366 = vmatprep.mubr.f32.mxu0 0.0
        %1367 = vmatmul.mubr.f32.gmra.mxu0 %v1182
        %v1368 = vpop.f32.mrf.mxu0
        %v1369 = vadd.f32 0.0, %v1368
        %v1370 = vpop.f32.mrf.mxu0
        %1371 = vmatprep.mubr.f32.mxu0 0.0
        %1372 = vmatmul.mubr.f32.gmra.mxu0 %v1185
        %v1373 = vpop.f32.mrf.mxu0
        %v1374 = vadd.f32 0.0, %v1373
        %v1375 = vpop.f32.mrf.mxu0
        %1376 = vmatprep.mubr.f32.mxu0 0.0
        %1377 = vmatmul.mubr.f32.gmra.mxu0 %v1188
        %v1378 = vpop.f32.mrf.mxu0
        %v1379 = vadd.f32 0.0, %v1378
        %v1380 = vpop.f32.mrf.mxu0
        %1381 = vmatprep.mubr.f32.mxu0 0.0
        %1382 = vmatmul.mubr.f32.gmra.mxu0 %v1191
        %v1383 = vpop.f32.mrf.mxu0
        %v1384 = vadd.f32 0.0, %v1383
        %v1385 = vpop.f32.mrf.mxu0
        %1386 = vmatprep.mubr.f32.mxu0 0.0
        %1387 = vmatmul.mubr.f32.gmra.mxu0 %v1194
        %v1388 = vpop.f32.mrf.mxu0
        %v1389 = vadd.f32 0.0, %v1388
        %v1390 = vpop.f32.mrf.mxu0
        %1391 = vmatprep.mubr.f32.mxu0 0.0
        %1392 = vmatmul.mubr.f32.gmra.mxu0 %v1197
        %v1393 = vpop.f32.mrf.mxu0
        %v1394 = vadd.f32 0.0, %v1393
        %v1395 = vpop.f32.mrf.mxu0
        %1396 = vdwg.mxu0
        %v1397 = vadd.f32 %v1066, %v1269
        %v1398 = vadd.f32 %v1067, %v1274
        %v1399 = vadd.f32 %v1068, %v1279
        %v1400 = vadd.f32 %v1069, %v1284
        %v1401 = vadd.f32 %v1070, %v1289
        %v1402 = vadd.f32 %v1071, %v1294
        %v1403 = vadd.f32 %v1072, %v1299
        %v1404 = vadd.f32 %v1073, %v1304
        %v1405 = vadd.f32 %v1074, %v1309
        %v1406 = vadd.f32 %v1075, %v1314
        %v1407 = vadd.f32 %v1076, %v1319
        %v1408 = vadd.f32 %v1077, %v1324
        %v1409 = vadd.f32 %v1078, %v1329
        %v1410 = vadd.f32 %v1079, %v1334
        %v1411 = vadd.f32 %v1080, %v1339
        %v1412 = vadd.f32 %v1081, %v1344
        %v1413 = vadd.f32 %v1082, %v1349
        %v1414 = vadd.f32 %v1083, %v1354
        %v1415 = vadd.f32 %v1084, %v1359
        %v1416 = vadd.f32 %v1085, %v1364
        %v1417 = vadd.f32 %v1086, %v1369
        %v1418 = vadd.f32 %v1087, %v1374
        %v1419 = vadd.f32 %v1088, %v1379
        %v1420 = vadd.f32 %v1089, %v1384
        %v1421 = vadd.f32 %v1090, %v1389
        %v1422 = vadd.f32 %v1091, %v1394
        %1423 = vst.msk [vmem:[#allocation2] sm:$0xff] %vm1039, %v1397
        %1424 = vst.msk [vmem:[#allocation2 + $0x8] sm:$0xff] %vm1039, %v1398
        %1425 = vst.msk [vmem:[#allocation2 + $0x10] sm:$0xff] %vm1039, %v1399
        %1426 = vst.msk [vmem:[#allocation2 + $0x18] sm:$0xff] %vm1039, %v1400
        %1427 = vst.msk [vmem:[#allocation2 + $0x20] sm:$0xff] %vm1039, %v1401
        %1428 = vst.msk [vmem:[#allocation2 + $0x28] sm:$0xff] %vm1039, %v1402
        %1429 = vst.msk [vmem:[#allocation2 + $0x30] sm:$0xff] %vm1039, %v1403
        %1430 = vst.msk [vmem:[#allocation2 + $0x38] sm:$0xff] %vm1039, %v1404
        %1431 = vst.msk [vmem:[#allocation2 + $0x40] sm:$0xff] %vm1039, %v1405
        %1432 = vst.msk [vmem:[#allocation2 + $0x48] sm:$0xff] %vm1039, %v1406
        %1433 = vst.msk [vmem:[#allocation2 + $0x50] sm:$0xff] %vm1039, %v1407
        %1434 = vst.msk [vmem:[#allocation2 + $0x58] sm:$0xff] %vm1039, %v1408
        %1435 = vst.msk [vmem:[#allocation2 + $0x60] sm:$0xff] %vm1039, %v1409
        %1436 = vst.msk [vmem:[#allocation2 + $0x68] sm:$0xff] %vm1039, %v1410
        %1437 = vst.msk [vmem:[#allocation2 + $0x70] sm:$0xff] %vm1039, %v1411
        %1438 = vst.msk [vmem:[#allocation2 + $0x78] sm:$0xff] %vm1039, %v1412
        %1439 = vst.msk [vmem:[#allocation2 + $0x80] sm:$0xff] %vm1039, %v1413
        %1440 = vst.msk [vmem:[#allocation2 + $0x88] sm:$0xff] %vm1039, %v1414
        %1441 = vst.msk [vmem:[#allocation2 + $0x90] sm:$0xff] %vm1039, %v1415
        %1442 = vst.msk [vmem:[#allocation2 + $0x98] sm:$0xff] %vm1039, %v1416
        %1443 = vst.msk [vmem:[#allocation2 + $0xa0] sm:$0xff] %vm1039, %v1417
        %1444 = vst.msk [vmem:[#allocation2 + $0xa8] sm:$0xff] %vm1039, %v1418
        %1445 = vst.msk [vmem:[#allocation2 + $0xb0] sm:$0xff] %vm1039, %v1419
        %1446 = vst.msk [vmem:[#allocation2 + $0xb8] sm:$0xff] %vm1039, %v1420
        %1447 = vst.msk [vmem:[#allocation2 + $0xc0] sm:$0xff] %vm1039, %v1421
        %1448 = vst.msk [vmem:[#allocation2 + $0xc8] sm:$0xff] %vm1039, %v1422
        %v1449 = vld [vmem:[#allocation2] sm:$0xff]
        %v1450 = vld [vmem:[#allocation2 + $0x8] sm:$0xff]
        %v1451 = vld [vmem:[#allocation2 + $0x10] sm:$0xff]
        %v1452 = vld [vmem:[#allocation2 + $0x18] sm:$0xff]
        %v1453 = vld [vmem:[#allocation2 + $0x20] sm:$0xff]
        %v1454 = vld [vmem:[#allocation2 + $0x28] sm:$0xff]
        %v1455 = vld [vmem:[#allocation2 + $0x30] sm:$0xff]
        %v1456 = vld [vmem:[#allocation2 + $0x38] sm:$0xff]
        %v1457 = vld [vmem:[#allocation2 + $0x40] sm:$0xff]
        %v1458 = vld [vmem:[#allocation2 + $0x48] sm:$0xff]
        %v1459 = vld [vmem:[#allocation2 + $0x50] sm:$0xff]
        %v1460 = vld [vmem:[#allocation2 + $0x58] sm:$0xff]
        %v1461 = vld [vmem:[#allocation2 + $0x60] sm:$0xff]
        %v1462 = vld [vmem:[#allocation2 + $0x68] sm:$0xff]
        %v1463 = vld [vmem:[#allocation2 + $0x70] sm:$0xff]
        %v1464 = vld [vmem:[#allocation2 + $0x78] sm:$0xff]
        %v1465 = vld [vmem:[#allocation2 + $0x80] sm:$0xff]
        %v1466 = vld [vmem:[#allocation2 + $0x88] sm:$0xff]
        %v1467 = vld [vmem:[#allocation2 + $0x90] sm:$0xff]
        %v1468 = vld [vmem:[#allocation2 + $0x98] sm:$0xff]
        %v1469 = vld [vmem:[#allocation2 + $0xa0] sm:$0xff]
        %v1470 = vld [vmem:[#allocation2 + $0xa8] sm:$0xff]
        %v1471 = vld [vmem:[#allocation2 + $0xb0] sm:$0xff]
        %v1472 = vld [vmem:[#allocation2 + $0xb8] sm:$0xff]
        %v1473 = vld [vmem:[#allocation2 + $0xc0] sm:$0xff]
        %v1474 = vld [vmem:[#allocation2 + $0xc8] sm:$0xff]
        %v1475 = vld [vmem:[%s206 + $0x30] sm:$0xff]
        %v1476 = vld [vmem:[%s206 + $0x38] sm:$0xff]
        %v1477 = vld [vmem:[%s206 + $0x40] sm:$0xff]
        %v1478 = vld [vmem:[%s206 + $0x48] sm:$0xff]
        %v1479 = vld [vmem:[%s206 + $0x50] sm:$0xff]
        %v1480 = vld [vmem:[%s206 + $0x58] sm:$0xff]
        %v1481 = vld [vmem:[%s206 + $0x60] sm:$0xff]
        %v1482 = vld [vmem:[%s206 + $0x68] sm:$0xff]
        %v1483 = vld [vmem:[%s206 + $0x70] sm:$0xff]
        %v1484 = vld [vmem:[%s206 + $0x78] sm:$0xff]
        %v1485 = vld [vmem:[%s206 + $0x80] sm:$0xff]
        %v1486 = vld [vmem:[%s206 + $0x88] sm:$0xff]
        %v1487 = vld [vmem:[%s206 + $0x90] sm:$0xff]
        %v1488 = vld [vmem:[%s206 + $0x98] sm:$0xff]
        %v1489 = vld [vmem:[%s206 + $0xa0] sm:$0xff]
        %v1490 = vld [vmem:[%s206 + $0xa8] sm:$0xff]
        %v1491 = vld [vmem:[%s206 + $0xb0] sm:$0xff]
        %v1492 = vld [vmem:[%s206 + $0xb8] sm:$0xff]
        %v1493 = vld [vmem:[%s206 + $0xc0] sm:$0xff]
        %v1494 = vld [vmem:[%s206 + $0xc8] sm:$0xff]
        %v1495 = vld [vmem:[%s206 + $0xd0] sm:$0xff]
        %v1496 = vld [vmem:[%s206 + $0xd8] sm:$0xff]
        %v1497 = vld [vmem:[%s206 + $0xe0] sm:$0xff]
        %v1498 = vld [vmem:[%s206 + $0xe8] sm:$0xff]
        %v1499 = vld [vmem:[%s206 + $0xf0] sm:$0xff]
        %v1500 = vld [vmem:[%s206 + $0xf8] sm:$0xff]
        %s1501 = sadd.s32 24, %s233
        %s1502 = scalar_lea.vmem %s1, %s1501
        %v1503 = vld [vmem:[%s1502] sm:$0xff]
        %v1505 = vsel %vm236, %v1475, 0
        %v1508 = vsel %vm236, %v1476, 0
        %v1511 = vsel %vm236, %v1477, 0
        %v1514 = vsel %vm236, %v1478, 0
        %v1517 = vsel %vm236, %v1479, 0
        %v1520 = vsel %vm236, %v1480, 0
        %v1523 = vsel %vm236, %v1481, 0
        %v1526 = vsel %vm236, %v1482, 0
        %v1529 = vsel %vm236, %v1483, 0
        %v1532 = vsel %vm236, %v1484, 0
        %v1535 = vsel %vm236, %v1485, 0
        %v1538 = vsel %vm236, %v1486, 0
        %v1541 = vsel %vm236, %v1487, 0
        %v1544 = vsel %vm236, %v1488, 0
        %v1547 = vsel %vm236, %v1489, 0
        %v1550 = vsel %vm236, %v1490, 0
        %v1553 = vsel %vm236, %v1491, 0
        %v1556 = vsel %vm236, %v1492, 0
        %v1559 = vsel %vm236, %v1493, 0
        %v1562 = vsel %vm236, %v1494, 0
        %v1565 = vsel %vm236, %v1495, 0
        %v1568 = vsel %vm236, %v1496, 0
        %v1571 = vsel %vm236, %v1497, 0
        %v1574 = vsel %vm236, %v1498, 0
        %v1577 = vsel %vm236, %v1499, 0
        %v1580 = vsel %vm236, %v1500, 0
        %v1583 = vsel %vm236, %v1503, 0
        %1585 = vmatprep.subr.mxu0 0.0
        %1586 = vmatpush1.xpose.msra.mxu0 0.0
        %1587 = vmatprep.subr.mxu0 0.0
        %1588 = vmatpush1.xpose.msra.mxu0 0.0
        %1589 = vmatprep.subr.mxu0 0.0
        %1590 = vmatpush1.xpose.msra.mxu0 0.0
        %1591 = vmatprep.subr.mxu0 0.0
        %1592 = vmatpush1.xpose.msra.mxu0 0.0
        %1593 = vmatprep.subr.mxu0 0.0
        %1594 = vmatpush1.xpose.msra.mxu0 0.0
        %1595 = vmatprep.subr.mxu0 0.0
        %1596 = vmatpush1.xpose.msra.mxu0 0.0
        %1597 = vmatprep.subr.mxu0 0.0
        %1598 = vmatpush1.xpose.msra.mxu0 0.0
        %1599 = vmatprep.subr.mxu0 0.0
        %1600 = vmatpush1.xpose.msra.mxu0 0.0
        %1601 = vmatprep.subr.mxu0 0.0
        %1602 = vmatpush1.xpose.msra.mxu0 0.0
        %1603 = vmatprep.subr.mxu0 0.0
        %1604 = vmatpush1.xpose.msra.mxu0 0.0
        %1605 = vmatprep.subr.mxu0 0.0
        %1606 = vmatpush1.xpose.msra.mxu0 0.0
        %1607 = vmatprep.subr.mxu0 0.0
        %1608 = vmatpush1.xpose.msra.mxu0 0.0
        %1609 = vmatprep.subr.mxu0 0.0
        %1610 = vmatpush1.xpose.msra.mxu0 0.0
        %1611 = vmatprep.subr.mxu0 0.0
        %1612 = vmatpush1.xpose.msra.mxu0 0.0
        %1613 = vmatprep.subr.mxu0 0.0
        %1614 = vmatpush1.xpose.msra.mxu0 0.0
        %1615 = vmatprep.subr.mxu0 0.0
        %1616 = vmatpush1.xpose.msra.mxu0 %v1583
        %1617 = vmatprep.subr.mxu0 0.0
        %1618 = vmatpush2.xpose.msra.mxu0 0.0
        %1619 = vmatprep.subr.mxu0 0.0
        %1620 = vmatpush2.xpose.msra.mxu0 0.0
        %1621 = vmatprep.subr.mxu0 0.0
        %1622 = vmatpush2.xpose.msra.mxu0 0.0
        %1623 = vmatprep.subr.mxu0 0.0
        %1624 = vmatpush2.xpose.msra.mxu0 0.0
        %1625 = vmatprep.subr.mxu0 0.0
        %1626 = vmatpush2.xpose.msra.mxu0 0.0
        %1627 = vmatprep.subr.mxu0 0.0
        %1628 = vmatpush2.xpose.msra.mxu0 0.0
        %1629 = vmatprep.subr.mxu0 0.0
        %1630 = vmatpush2.xpose.msra.mxu0 0.0
        %1631 = vmatprep.subr.mxu0 0.0
        %1632 = vmatpush2.xpose.msra.mxu0 0.0
        %1633 = vmatprep.subr.mxu0 0.0
        %1634 = vmatpush2.xpose.msra.mxu0 0.0
        %1635 = vmatprep.subr.mxu0 0.0
        %1636 = vmatpush2.xpose.msra.mxu0 0.0
        %1637 = vmatprep.subr.mxu0 0.0
        %1638 = vmatpush2.xpose.msra.mxu0 0.0
        %1639 = vmatprep.subr.mxu0 0.0
        %1640 = vmatpush2.xpose.msra.mxu0 0.0
        %1641 = vmatprep.subr.mxu0 0.0
        %1642 = vmatpush2.xpose.msra.mxu0 0.0
        %1643 = vmatprep.subr.mxu0 0.0
        %1644 = vmatpush2.xpose.msra.mxu0 0.0
        %1645 = vmatprep.subr.mxu0 0.0
        %1646 = vmatpush2.xpose.msra.mxu0 0.0
        %1647 = vmatprep.subr.mxu0 0.0
        %1648 = vmatpush2.xpose.msra.mxu0 0.0
        %1649 = vmatprep.mubr.f32.mxu0 0.0
        %1650 = vmatmul.mubr.f32.gmra.mxu0 %v1505
        %v1651 = vpop.f32.mrf.mxu0
        %v1652 = vadd.f32 0.0, %v1651
        %v1653 = vpop.f32.mrf.mxu0
        %1654 = vmatprep.mubr.f32.mxu0 0.0
        %1655 = vmatmul.mubr.f32.gmra.mxu0 %v1508
        %v1656 = vpop.f32.mrf.mxu0
        %v1657 = vadd.f32 0.0, %v1656
        %v1658 = vpop.f32.mrf.mxu0
        %1659 = vmatprep.mubr.f32.mxu0 0.0
        %1660 = vmatmul.mubr.f32.gmra.mxu0 %v1511
        %v1661 = vpop.f32.mrf.mxu0
        %v1662 = vadd.f32 0.0, %v1661
        %v1663 = vpop.f32.mrf.mxu0
        %1664 = vmatprep.mubr.f32.mxu0 0.0
        %1665 = vmatmul.mubr.f32.gmra.mxu0 %v1514
        %v1666 = vpop.f32.mrf.mxu0
        %v1667 = vadd.f32 0.0, %v1666
        %v1668 = vpop.f32.mrf.mxu0
        %1669 = vmatprep.mubr.f32.mxu0 0.0
        %1670 = vmatmul.mubr.f32.gmra.mxu0 %v1517
        %v1671 = vpop.f32.mrf.mxu0
        %v1672 = vadd.f32 0.0, %v1671
        %v1673 = vpop.f32.mrf.mxu0
        %1674 = vmatprep.mubr.f32.mxu0 0.0
        %1675 = vmatmul.mubr.f32.gmra.mxu0 %v1520
        %v1676 = vpop.f32.mrf.mxu0
        %v1677 = vadd.f32 0.0, %v1676
        %v1678 = vpop.f32.mrf.mxu0
        %1679 = vmatprep.mubr.f32.mxu0 0.0
        %1680 = vmatmul.mubr.f32.gmra.mxu0 %v1523
        %v1681 = vpop.f32.mrf.mxu0
        %v1682 = vadd.f32 0.0, %v1681
        %v1683 = vpop.f32.mrf.mxu0
        %1684 = vmatprep.mubr.f32.mxu0 0.0
        %1685 = vmatmul.mubr.f32.gmra.mxu0 %v1526
        %v1686 = vpop.f32.mrf.mxu0
        %v1687 = vadd.f32 0.0, %v1686
        %v1688 = vpop.f32.mrf.mxu0
        %1689 = vmatprep.mubr.f32.mxu0 0.0
        %1690 = vmatmul.mubr.f32.gmra.mxu0 %v1529
        %v1691 = vpop.f32.mrf.mxu0
        %v1692 = vadd.f32 0.0, %v1691
        %v1693 = vpop.f32.mrf.mxu0
        %1694 = vmatprep.mubr.f32.mxu0 0.0
        %1695 = vmatmul.mubr.f32.gmra.mxu0 %v1532
        %v1696 = vpop.f32.mrf.mxu0
        %v1697 = vadd.f32 0.0, %v1696
        %v1698 = vpop.f32.mrf.mxu0
        %1699 = vmatprep.mubr.f32.mxu0 0.0
        %1700 = vmatmul.mubr.f32.gmra.mxu0 %v1535
        %v1701 = vpop.f32.mrf.mxu0
        %v1702 = vadd.f32 0.0, %v1701
        %v1703 = vpop.f32.mrf.mxu0
        %1704 = vmatprep.mubr.f32.mxu0 0.0
        %1705 = vmatmul.mubr.f32.gmra.mxu0 %v1538
        %v1706 = vpop.f32.mrf.mxu0
        %v1707 = vadd.f32 0.0, %v1706
        %v1708 = vpop.f32.mrf.mxu0
        %1709 = vmatprep.mubr.f32.mxu0 0.0
        %1710 = vmatmul.mubr.f32.gmra.mxu0 %v1541
        %v1711 = vpop.f32.mrf.mxu0
        %v1712 = vadd.f32 0.0, %v1711
        %v1713 = vpop.f32.mrf.mxu0
        %1714 = vmatprep.mubr.f32.mxu0 0.0
        %1715 = vmatmul.mubr.f32.gmra.mxu0 %v1544
        %v1716 = vpop.f32.mrf.mxu0
        %v1717 = vadd.f32 0.0, %v1716
        %v1718 = vpop.f32.mrf.mxu0
        %1719 = vmatprep.mubr.f32.mxu0 0.0
        %1720 = vmatmul.mubr.f32.gmra.mxu0 %v1547
        %v1721 = vpop.f32.mrf.mxu0
        %v1722 = vadd.f32 0.0, %v1721
        %v1723 = vpop.f32.mrf.mxu0
        %1724 = vmatprep.mubr.f32.mxu0 0.0
        %1725 = vmatmul.mubr.f32.gmra.mxu0 %v1550
        %v1726 = vpop.f32.mrf.mxu0
        %v1727 = vadd.f32 0.0, %v1726
        %v1728 = vpop.f32.mrf.mxu0
        %1729 = vmatprep.mubr.f32.mxu0 0.0
        %1730 = vmatmul.mubr.f32.gmra.mxu0 %v1553
        %v1731 = vpop.f32.mrf.mxu0
        %v1732 = vadd.f32 0.0, %v1731
        %v1733 = vpop.f32.mrf.mxu0
        %1734 = vmatprep.mubr.f32.mxu0 0.0
        %1735 = vmatmul.mubr.f32.gmra.mxu0 %v1556
        %v1736 = vpop.f32.mrf.mxu0
        %v1737 = vadd.f32 0.0, %v1736
        %v1738 = vpop.f32.mrf.mxu0
        %1739 = vmatprep.mubr.f32.mxu0 0.0
        %1740 = vmatmul.mubr.f32.gmra.mxu0 %v1559
        %v1741 = vpop.f32.mrf.mxu0
        %v1742 = vadd.f32 0.0, %v1741
        %v1743 = vpop.f32.mrf.mxu0
        %1744 = vmatprep.mubr.f32.mxu0 0.0
        %1745 = vmatmul.mubr.f32.gmra.mxu0 %v1562
        %v1746 = vpop.f32.mrf.mxu0
        %v1747 = vadd.f32 0.0, %v1746
        %v1748 = vpop.f32.mrf.mxu0
        %1749 = vmatprep.mubr.f32.mxu0 0.0
        %1750 = vmatmul.mubr.f32.gmra.mxu0 %v1565
        %v1751 = vpop.f32.mrf.mxu0
        %v1752 = vadd.f32 0.0, %v1751
        %v1753 = vpop.f32.mrf.mxu0
        %1754 = vmatprep.mubr.f32.mxu0 0.0
        %1755 = vmatmul.mubr.f32.gmra.mxu0 %v1568
        %v1756 = vpop.f32.mrf.mxu0
        %v1757 = vadd.f32 0.0, %v1756
        %v1758 = vpop.f32.mrf.mxu0
        %1759 = vmatprep.mubr.f32.mxu0 0.0
        %1760 = vmatmul.mubr.f32.gmra.mxu0 %v1571
        %v1761 = vpop.f32.mrf.mxu0
        %v1762 = vadd.f32 0.0, %v1761
        %v1763 = vpop.f32.mrf.mxu0
        %1764 = vmatprep.mubr.f32.mxu0 0.0
        %1765 = vmatmul.mubr.f32.gmra.mxu0 %v1574
        %v1766 = vpop.f32.mrf.mxu0
        %v1767 = vadd.f32 0.0, %v1766
        %v1768 = vpop.f32.mrf.mxu0
        %1769 = vmatprep.mubr.f32.mxu0 0.0
        %1770 = vmatmul.mubr.f32.gmra.mxu0 %v1577
        %v1771 = vpop.f32.mrf.mxu0
        %v1772 = vadd.f32 0.0, %v1771
        %v1773 = vpop.f32.mrf.mxu0
        %1774 = vmatprep.mubr.f32.mxu0 0.0
        %1775 = vmatmul.mubr.f32.gmra.mxu0 %v1580
        %v1776 = vpop.f32.mrf.mxu0
        %v1777 = vadd.f32 0.0, %v1776
        %v1778 = vpop.f32.mrf.mxu0
        %1779 = vdwg.mxu0
        %v1780 = vadd.f32 %v1449, %v1652
        %v1781 = vadd.f32 %v1450, %v1657
        %v1782 = vadd.f32 %v1451, %v1662
        %v1783 = vadd.f32 %v1452, %v1667
        %v1784 = vadd.f32 %v1453, %v1672
        %v1785 = vadd.f32 %v1454, %v1677
        %v1786 = vadd.f32 %v1455, %v1682
        %v1787 = vadd.f32 %v1456, %v1687
        %v1788 = vadd.f32 %v1457, %v1692
        %v1789 = vadd.f32 %v1458, %v1697
        %v1790 = vadd.f32 %v1459, %v1702
        %v1791 = vadd.f32 %v1460, %v1707
        %v1792 = vadd.f32 %v1461, %v1712
        %v1793 = vadd.f32 %v1462, %v1717
        %v1794 = vadd.f32 %v1463, %v1722
        %v1795 = vadd.f32 %v1464, %v1727
        %v1796 = vadd.f32 %v1465, %v1732
        %v1797 = vadd.f32 %v1466, %v1737
        %v1798 = vadd.f32 %v1467, %v1742
        %v1799 = vadd.f32 %v1468, %v1747
        %v1800 = vadd.f32 %v1469, %v1752
        %v1801 = vadd.f32 %v1470, %v1757
        %v1802 = vadd.f32 %v1471, %v1762
        %v1803 = vadd.f32 %v1472, %v1767
        %v1804 = vadd.f32 %v1473, %v1772
        %v1805 = vadd.f32 %v1474, %v1777
        %1806 = vst.msk [vmem:[#allocation2] sm:$0xff] %vm1039, %v1780
        %1807 = vst.msk [vmem:[#allocation2 + $0x8] sm:$0xff] %vm1039, %v1781
        %1808 = vst.msk [vmem:[#allocation2 + $0x10] sm:$0xff] %vm1039, %v1782
        %1809 = vst.msk [vmem:[#allocation2 + $0x18] sm:$0xff] %vm1039, %v1783
        %1810 = vst.msk [vmem:[#allocation2 + $0x20] sm:$0xff] %vm1039, %v1784
        %1811 = vst.msk [vmem:[#allocation2 + $0x28] sm:$0xff] %vm1039, %v1785
        %1812 = vst.msk [vmem:[#allocation2 + $0x30] sm:$0xff] %vm1039, %v1786
        %1813 = vst.msk [vmem:[#allocation2 + $0x38] sm:$0xff] %vm1039, %v1787
        %1814 = vst.msk [vmem:[#allocation2 + $0x40] sm:$0xff] %vm1039, %v1788
        %1815 = vst.msk [vmem:[#allocation2 + $0x48] sm:$0xff] %vm1039, %v1789
        %1816 = vst.msk [vmem:[#allocation2 + $0x50] sm:$0xff] %vm1039, %v1790
        %1817 = vst.msk [vmem:[#allocation2 + $0x58] sm:$0xff] %vm1039, %v1791
        %1818 = vst.msk [vmem:[#allocation2 + $0x60] sm:$0xff] %vm1039, %v1792
        %1819 = vst.msk [vmem:[#allocation2 + $0x68] sm:$0xff] %vm1039, %v1793
        %1820 = vst.msk [vmem:[#allocation2 + $0x70] sm:$0xff] %vm1039, %v1794
        %1821 = vst.msk [vmem:[#allocation2 + $0x78] sm:$0xff] %vm1039, %v1795
        %1822 = vst.msk [vmem:[#allocation2 + $0x80] sm:$0xff] %vm1039, %v1796
        %1823 = vst.msk [vmem:[#allocation2 + $0x88] sm:$0xff] %vm1039, %v1797
        %1824 = vst.msk [vmem:[#allocation2 + $0x90] sm:$0xff] %vm1039, %v1798
        %1825 = vst.msk [vmem:[#allocation2 + $0x98] sm:$0xff] %vm1039, %v1799
        %1826 = vst.msk [vmem:[#allocation2 + $0xa0] sm:$0xff] %vm1039, %v1800
        %1827 = vst.msk [vmem:[#allocation2 + $0xa8] sm:$0xff] %vm1039, %v1801
        %1828 = vst.msk [vmem:[#allocation2 + $0xb0] sm:$0xff] %vm1039, %v1802
        %1829 = vst.msk [vmem:[#allocation2 + $0xb8] sm:$0xff] %vm1039, %v1803
        %1830 = vst.msk [vmem:[#allocation2 + $0xc0] sm:$0xff] %vm1039, %v1804
        %1831 = vst.msk [vmem:[#allocation2 + $0xc8] sm:$0xff] %vm1039, %v1805
        %v1832 = vld [vmem:[#allocation2] sm:$0xff]
        %v1833 = vld [vmem:[#allocation2 + $0x8] sm:$0xff]
        %v1834 = vld [vmem:[#allocation2 + $0x10] sm:$0xff]
        %v1835 = vld [vmem:[#allocation2 + $0x18] sm:$0xff]
        %v1836 = vld [vmem:[#allocation2 + $0x20] sm:$0xff]
        %v1837 = vld [vmem:[#allocation2 + $0x28] sm:$0xff]
        %v1838 = vld [vmem:[#allocation2 + $0x30] sm:$0xff]
        %v1839 = vld [vmem:[#allocation2 + $0x38] sm:$0xff]
        %v1840 = vld [vmem:[#allocation2 + $0x40] sm:$0xff]
        %v1841 = vld [vmem:[#allocation2 + $0x48] sm:$0xff]
        %v1842 = vld [vmem:[#allocation2 + $0x50] sm:$0xff]
        %v1843 = vld [vmem:[#allocation2 + $0x58] sm:$0xff]
        %v1844 = vld [vmem:[#allocation2 + $0x60] sm:$0xff]
        %v1845 = vld [vmem:[#allocation2 + $0x68] sm:$0xff]
        %v1846 = vld [vmem:[#allocation2 + $0x70] sm:$0xff]
        %v1847 = vld [vmem:[#allocation2 + $0x78] sm:$0xff]
        %v1848 = vld [vmem:[#allocation2 + $0x80] sm:$0xff]
        %v1849 = vld [vmem:[#allocation2 + $0x88] sm:$0xff]
        %v1850 = vld [vmem:[#allocation2 + $0x90] sm:$0xff]
        %v1851 = vld [vmem:[#allocation2 + $0x98] sm:$0xff]
        %v1852 = vld [vmem:[#allocation2 + $0xa0] sm:$0xff]
        %v1853 = vld [vmem:[#allocation2 + $0xa8] sm:$0xff]
        %v1854 = vld [vmem:[#allocation2 + $0xb0] sm:$0xff]
        %v1855 = vld [vmem:[#allocation2 + $0xb8] sm:$0xff]
        %v1856 = vld [vmem:[#allocation2 + $0xc0] sm:$0xff]
        %v1857 = vld [vmem:[#allocation2 + $0xc8] sm:$0xff]
        %v1858 = vld [vmem:[%s206 + $0x40] sm:$0xff]
        %v1859 = vld [vmem:[%s206 + $0x48] sm:$0xff]
        %v1860 = vld [vmem:[%s206 + $0x50] sm:$0xff]
        %v1861 = vld [vmem:[%s206 + $0x58] sm:$0xff]
        %v1862 = vld [vmem:[%s206 + $0x60] sm:$0xff]
        %v1863 = vld [vmem:[%s206 + $0x68] sm:$0xff]
        %v1864 = vld [vmem:[%s206 + $0x70] sm:$0xff]
        %v1865 = vld [vmem:[%s206 + $0x78] sm:$0xff]
        %v1866 = vld [vmem:[%s206 + $0x80] sm:$0xff]
        %v1867 = vld [vmem:[%s206 + $0x88] sm:$0xff]
        %v1868 = vld [vmem:[%s206 + $0x90] sm:$0xff]
        %v1869 = vld [vmem:[%s206 + $0x98] sm:$0xff]
        %v1870 = vld [vmem:[%s206 + $0xa0] sm:$0xff]
        %v1871 = vld [vmem:[%s206 + $0xa8] sm:$0xff]
        %v1872 = vld [vmem:[%s206 + $0xb0] sm:$0xff]
        %v1873 = vld [vmem:[%s206 + $0xb8] sm:$0xff]
        %v1874 = vld [vmem:[%s206 + $0xc0] sm:$0xff]
        %v1875 = vld [vmem:[%s206 + $0xc8] sm:$0xff]
        %v1876 = vld [vmem:[%s206 + $0xd0] sm:$0xff]
        %v1877 = vld [vmem:[%s206 + $0xd8] sm:$0xff]
        %v1878 = vld [vmem:[%s206 + $0xe0] sm:$0xff]
        %v1879 = vld [vmem:[%s206 + $0xe8] sm:$0xff]
        %v1880 = vld [vmem:[%s206 + $0xf0] sm:$0xff]
        %v1881 = vld [vmem:[%s206 + $0xf8] sm:$0xff]
        %v1882 = vld [vmem:[%s206 + $0x100] sm:$0xff]
        %v1883 = vld [vmem:[%s206 + $0x108] sm:$0xff]
        %s1884 = sadd.s32 32, %s233
        %s1885 = scalar_lea.vmem %s1, %s1884
        %v1886 = vld [vmem:[%s1885] sm:$0xff]
        %v1888 = vsel %vm236, %v1858, 0
        %v1891 = vsel %vm236, %v1859, 0
        %v1894 = vsel %vm236, %v1860, 0
        %v1897 = vsel %vm236, %v1861, 0
        %v1900 = vsel %vm236, %v1862, 0
        %v1903 = vsel %vm236, %v1863, 0
        %v1906 = vsel %vm236, %v1864, 0
        %v1909 = vsel %vm236, %v1865, 0
        %v1912 = vsel %vm236, %v1866, 0
        %v1915 = vsel %vm236, %v1867, 0
        %v1918 = vsel %vm236, %v1868, 0
        %v1921 = vsel %vm236, %v1869, 0
        %v1924 = vsel %vm236, %v1870, 0
        %v1927 = vsel %vm236, %v1871, 0
        %v1930 = vsel %vm236, %v1872, 0
        %v1933 = vsel %vm236, %v1873, 0
        %v1936 = vsel %vm236, %v1874, 0
        %v1939 = vsel %vm236, %v1875, 0
        %v1942 = vsel %vm236, %v1876, 0
        %v1945 = vsel %vm236, %v1877, 0
        %v1948 = vsel %vm236, %v1878, 0
        %v1951 = vsel %vm236, %v1879, 0
        %v1954 = vsel %vm236, %v1880, 0
        %v1957 = vsel %vm236, %v1881, 0
        %v1960 = vsel %vm236, %v1882, 0
        %v1963 = vsel %vm236, %v1883, 0
        %v1966 = vsel %vm236, %v1886, 0
        %1968 = vmatprep.subr.mxu0 0.0
        %1969 = vmatpush1.xpose.msra.mxu0 0.0
        %1970 = vmatprep.subr.mxu0 0.0
        %1971 = vmatpush1.xpose.msra.mxu0 0.0
        %1972 = vmatprep.subr.mxu0 0.0
        %1973 = vmatpush1.xpose.msra.mxu0 0.0
        %1974 = vmatprep.subr.mxu0 0.0
        %1975 = vmatpush1.xpose.msra.mxu0 0.0
        %1976 = vmatprep.subr.mxu0 0.0
        %1977 = vmatpush1.xpose.msra.mxu0 0.0
        %1978 = vmatprep.subr.mxu0 0.0
        %1979 = vmatpush1.xpose.msra.mxu0 0.0
        %1980 = vmatprep.subr.mxu0 0.0
        %1981 = vmatpush1.xpose.msra.mxu0 0.0
        %1982 = vmatprep.subr.mxu0 0.0
        %1983 = vmatpush1.xpose.msra.mxu0 0.0
        %1984 = vmatprep.subr.mxu0 0.0
        %1985 = vmatpush1.xpose.msra.mxu0 0.0
        %1986 = vmatprep.subr.mxu0 0.0
        %1987 = vmatpush1.xpose.msra.mxu0 0.0
        %1988 = vmatprep.subr.mxu0 0.0
        %1989 = vmatpush1.xpose.msra.mxu0 0.0
        %1990 = vmatprep.subr.mxu0 0.0
        %1991 = vmatpush1.xpose.msra.mxu0 0.0
        %1992 = vmatprep.subr.mxu0 0.0
        %1993 = vmatpush1.xpose.msra.mxu0 0.0
        %1994 = vmatprep.subr.mxu0 0.0
        %1995 = vmatpush1.xpose.msra.mxu0 0.0
        %1996 = vmatprep.subr.mxu0 0.0
        %1997 = vmatpush1.xpose.msra.mxu0 0.0
        %1998 = vmatprep.subr.mxu0 0.0
        %1999 = vmatpush1.xpose.msra.mxu0 %v1966
        %2000 = vmatprep.subr.mxu0 0.0
        %2001 = vmatpush2.xpose.msra.mxu0 0.0
        %2002 = vmatprep.subr.mxu0 0.0
        %2003 = vmatpush2.xpose.msra.mxu0 0.0
        %2004 = vmatprep.subr.mxu0 0.0
        %2005 = vmatpush2.xpose.msra.mxu0 0.0
        %2006 = vmatprep.subr.mxu0 0.0
        %2007 = vmatpush2.xpose.msra.mxu0 0.0
        %2008 = vmatprep.subr.mxu0 0.0
        %2009 = vmatpush2.xpose.msra.mxu0 0.0
        %2010 = vmatprep.subr.mxu0 0.0
        %2011 = vmatpush2.xpose.msra.mxu0 0.0
        %2012 = vmatprep.subr.mxu0 0.0
        %2013 = vmatpush2.xpose.msra.mxu0 0.0
        %2014 = vmatprep.subr.mxu0 0.0
        %2015 = vmatpush2.xpose.msra.mxu0 0.0
        %2016 = vmatprep.subr.mxu0 0.0
        %2017 = vmatpush2.xpose.msra.mxu0 0.0
        %2018 = vmatprep.subr.mxu0 0.0
        %2019 = vmatpush2.xpose.msra.mxu0 0.0
        %2020 = vmatprep.subr.mxu0 0.0
        %2021 = vmatpush2.xpose.msra.mxu0 0.0
        %2022 = vmatprep.subr.mxu0 0.0
        %2023 = vmatpush2.xpose.msra.mxu0 0.0
        %2024 = vmatprep.subr.mxu0 0.0
        %2025 = vmatpush2.xpose.msra.mxu0 0.0
        %2026 = vmatprep.subr.mxu0 0.0
        %2027 = vmatpush2.xpose.msra.mxu0 0.0
        %2028 = vmatprep.subr.mxu0 0.0
        %2029 = vmatpush2.xpose.msra.mxu0 0.0
        %2030 = vmatprep.subr.mxu0 0.0
        %2031 = vmatpush2.xpose.msra.mxu0 0.0
        %2032 = vmatprep.mubr.f32.mxu0 0.0
        %2033 = vmatmul.mubr.f32.gmra.mxu0 %v1888
        %v2034 = vpop.f32.mrf.mxu0
        %v2035 = vadd.f32 0.0, %v2034
        %v2036 = vpop.f32.mrf.mxu0
        %2037 = vmatprep.mubr.f32.mxu0 0.0
        %2038 = vmatmul.mubr.f32.gmra.mxu0 %v1891
        %v2039 = vpop.f32.mrf.mxu0
        %v2040 = vadd.f32 0.0, %v2039
        %v2041 = vpop.f32.mrf.mxu0
        %2042 = vmatprep.mubr.f32.mxu0 0.0
        %2043 = vmatmul.mubr.f32.gmra.mxu0 %v1894
        %v2044 = vpop.f32.mrf.mxu0
        %v2045 = vadd.f32 0.0, %v2044
        %v2046 = vpop.f32.mrf.mxu0
        %2047 = vmatprep.mubr.f32.mxu0 0.0
        %2048 = vmatmul.mubr.f32.gmra.mxu0 %v1897
        %v2049 = vpop.f32.mrf.mxu0
        %v2050 = vadd.f32 0.0, %v2049
        %v2051 = vpop.f32.mrf.mxu0
        %2052 = vmatprep.mubr.f32.mxu0 0.0
        %2053 = vmatmul.mubr.f32.gmra.mxu0 %v1900
        %v2054 = vpop.f32.mrf.mxu0
        %v2055 = vadd.f32 0.0, %v2054
        %v2056 = vpop.f32.mrf.mxu0
        %2057 = vmatprep.mubr.f32.mxu0 0.0
        %2058 = vmatmul.mubr.f32.gmra.mxu0 %v1903
        %v2059 = vpop.f32.mrf.mxu0
        %v2060 = vadd.f32 0.0, %v2059
        %v2061 = vpop.f32.mrf.mxu0
        %2062 = vmatprep.mubr.f32.mxu0 0.0
        %2063 = vmatmul.mubr.f32.gmra.mxu0 %v1906
        %v2064 = vpop.f32.mrf.mxu0
        %v2065 = vadd.f32 0.0, %v2064
        %v2066 = vpop.f32.mrf.mxu0
        %2067 = vmatprep.mubr.f32.mxu0 0.0
        %2068 = vmatmul.mubr.f32.gmra.mxu0 %v1909
        %v2069 = vpop.f32.mrf.mxu0
        %v2070 = vadd.f32 0.0, %v2069
        %v2071 = vpop.f32.mrf.mxu0
        %2072 = vmatprep.mubr.f32.mxu0 0.0
        %2073 = vmatmul.mubr.f32.gmra.mxu0 %v1912
        %v2074 = vpop.f32.mrf.mxu0
        %v2075 = vadd.f32 0.0, %v2074
        %v2076 = vpop.f32.mrf.mxu0
        %2077 = vmatprep.mubr.f32.mxu0 0.0
        %2078 = vmatmul.mubr.f32.gmra.mxu0 %v1915
        %v2079 = vpop.f32.mrf.mxu0
        %v2080 = vadd.f32 0.0, %v2079
        %v2081 = vpop.f32.mrf.mxu0
        %2082 = vmatprep.mubr.f32.mxu0 0.0
        %2083 = vmatmul.mubr.f32.gmra.mxu0 %v1918
        %v2084 = vpop.f32.mrf.mxu0
        %v2085 = vadd.f32 0.0, %v2084
        %v2086 = vpop.f32.mrf.mxu0
        %2087 = vmatprep.mubr.f32.mxu0 0.0
        %2088 = vmatmul.mubr.f32.gmra.mxu0 %v1921
        %v2089 = vpop.f32.mrf.mxu0
        %v2090 = vadd.f32 0.0, %v2089
        %v2091 = vpop.f32.mrf.mxu0
        %2092 = vmatprep.mubr.f32.mxu0 0.0
        %2093 = vmatmul.mubr.f32.gmra.mxu0 %v1924
        %v2094 = vpop.f32.mrf.mxu0
        %v2095 = vadd.f32 0.0, %v2094
        %v2096 = vpop.f32.mrf.mxu0
        %2097 = vmatprep.mubr.f32.mxu0 0.0
        %2098 = vmatmul.mubr.f32.gmra.mxu0 %v1927
        %v2099 = vpop.f32.mrf.mxu0
        %v2100 = vadd.f32 0.0, %v2099
        %v2101 = vpop.f32.mrf.mxu0
        %2102 = vmatprep.mubr.f32.mxu0 0.0
        %2103 = vmatmul.mubr.f32.gmra.mxu0 %v1930
        %v2104 = vpop.f32.mrf.mxu0
        %v2105 = vadd.f32 0.0, %v2104
        %v2106 = vpop.f32.mrf.mxu0
        %2107 = vmatprep.mubr.f32.mxu0 0.0
        %2108 = vmatmul.mubr.f32.gmra.mxu0 %v1933
        %v2109 = vpop.f32.mrf.mxu0
        %v2110 = vadd.f32 0.0, %v2109
        %v2111 = vpop.f32.mrf.mxu0
        %2112 = vmatprep.mubr.f32.mxu0 0.0
        %2113 = vmatmul.mubr.f32.gmra.mxu0 %v1936
        %v2114 = vpop.f32.mrf.mxu0
        %v2115 = vadd.f32 0.0, %v2114
        %v2116 = vpop.f32.mrf.mxu0
        %2117 = vmatprep.mubr.f32.mxu0 0.0
        %2118 = vmatmul.mubr.f32.gmra.mxu0 %v1939
        %v2119 = vpop.f32.mrf.mxu0
        %v2120 = vadd.f32 0.0, %v2119
        %v2121 = vpop.f32.mrf.mxu0
        %2122 = vmatprep.mubr.f32.mxu0 0.0
        %2123 = vmatmul.mubr.f32.gmra.mxu0 %v1942
        %v2124 = vpop.f32.mrf.mxu0
        %v2125 = vadd.f32 0.0, %v2124
        %v2126 = vpop.f32.mrf.mxu0
        %2127 = vmatprep.mubr.f32.mxu0 0.0
        %2128 = vmatmul.mubr.f32.gmra.mxu0 %v1945
        %v2129 = vpop.f32.mrf.mxu0
        %v2130 = vadd.f32 0.0, %v2129
        %v2131 = vpop.f32.mrf.mxu0
        %2132 = vmatprep.mubr.f32.mxu0 0.0
        %2133 = vmatmul.mubr.f32.gmra.mxu0 %v1948
        %v2134 = vpop.f32.mrf.mxu0
        %v2135 = vadd.f32 0.0, %v2134
        %v2136 = vpop.f32.mrf.mxu0
        %2137 = vmatprep.mubr.f32.mxu0 0.0
        %2138 = vmatmul.mubr.f32.gmra.mxu0 %v1951
        %v2139 = vpop.f32.mrf.mxu0
        %v2140 = vadd.f32 0.0, %v2139
        %v2141 = vpop.f32.mrf.mxu0
        %2142 = vmatprep.mubr.f32.mxu0 0.0
        %2143 = vmatmul.mubr.f32.gmra.mxu0 %v1954
        %v2144 = vpop.f32.mrf.mxu0
        %v2145 = vadd.f32 0.0, %v2144
        %v2146 = vpop.f32.mrf.mxu0
        %2147 = vmatprep.mubr.f32.mxu0 0.0
        %2148 = vmatmul.mubr.f32.gmra.mxu0 %v1957
        %v2149 = vpop.f32.mrf.mxu0
        %v2150 = vadd.f32 0.0, %v2149
        %v2151 = vpop.f32.mrf.mxu0
        %2152 = vmatprep.mubr.f32.mxu0 0.0
        %2153 = vmatmul.mubr.f32.gmra.mxu0 %v1960
        %v2154 = vpop.f32.mrf.mxu0
        %v2155 = vadd.f32 0.0, %v2154
        %v2156 = vpop.f32.mrf.mxu0
        %2157 = vmatprep.mubr.f32.mxu0 0.0
        %2158 = vmatmul.mubr.f32.gmra.mxu0 %v1963
        %v2159 = vpop.f32.mrf.mxu0
        %v2160 = vadd.f32 0.0, %v2159
        %v2161 = vpop.f32.mrf.mxu0
        %2162 = vdwg.mxu0
        %v2163 = vadd.f32 %v1832, %v2035
        %v2164 = vadd.f32 %v1833, %v2040
        %v2165 = vadd.f32 %v1834, %v2045
        %v2166 = vadd.f32 %v1835, %v2050
        %v2167 = vadd.f32 %v1836, %v2055
        %v2168 = vadd.f32 %v1837, %v2060
        %v2169 = vadd.f32 %v1838, %v2065
        %v2170 = vadd.f32 %v1839, %v2070
        %v2171 = vadd.f32 %v1840, %v2075
        %v2172 = vadd.f32 %v1841, %v2080
        %v2173 = vadd.f32 %v1842, %v2085
        %v2174 = vadd.f32 %v1843, %v2090
        %v2175 = vadd.f32 %v1844, %v2095
        %v2176 = vadd.f32 %v1845, %v2100
        %v2177 = vadd.f32 %v1846, %v2105
        %v2178 = vadd.f32 %v1847, %v2110
        %v2179 = vadd.f32 %v1848, %v2115
        %v2180 = vadd.f32 %v1849, %v2120
        %v2181 = vadd.f32 %v1850, %v2125
        %v2182 = vadd.f32 %v1851, %v2130
        %v2183 = vadd.f32 %v1852, %v2135
        %v2184 = vadd.f32 %v1853, %v2140
        %v2185 = vadd.f32 %v1854, %v2145
        %v2186 = vadd.f32 %v1855, %v2150
        %v2187 = vadd.f32 %v1856, %v2155
        %v2188 = vadd.f32 %v1857, %v2160
        %2189 = vst.msk [vmem:[#allocation2] sm:$0xff] %vm1039, %v2163
        %2190 = vst.msk [vmem:[#allocation2 + $0x8] sm:$0xff] %vm1039, %v2164
        %2191 = vst.msk [vmem:[#allocation2 + $0x10] sm:$0xff] %vm1039, %v2165
        %2192 = vst.msk [vmem:[#allocation2 + $0x18] sm:$0xff] %vm1039, %v2166
        %2193 = vst.msk [vmem:[#allocation2 + $0x20] sm:$0xff] %vm1039, %v2167
        %2194 = vst.msk [vmem:[#allocation2 + $0x28] sm:$0xff] %vm1039, %v2168
        %2195 = vst.msk [vmem:[#allocation2 + $0x30] sm:$0xff] %vm1039, %v2169
        %2196 = vst.msk [vmem:[#allocation2 + $0x38] sm:$0xff] %vm1039, %v2170
        %2197 = vst.msk [vmem:[#allocation2 + $0x40] sm:$0xff] %vm1039, %v2171
        %2198 = vst.msk [vmem:[#allocation2 + $0x48] sm:$0xff] %vm1039, %v2172
        %2199 = vst.msk [vmem:[#allocation2 + $0x50] sm:$0xff] %vm1039, %v2173
        %2200 = vst.msk [vmem:[#allocation2 + $0x58] sm:$0xff] %vm1039, %v2174
        %2201 = vst.msk [vmem:[#allocation2 + $0x60] sm:$0xff] %vm1039, %v2175
        %2202 = vst.msk [vmem:[#allocation2 + $0x68] sm:$0xff] %vm1039, %v2176
        %2203 = vst.msk [vmem:[#allocation2 + $0x70] sm:$0xff] %vm1039, %v2177
        %2204 = vst.msk [vmem:[#allocation2 + $0x78] sm:$0xff] %vm1039, %v2178
        %2205 = vst.msk [vmem:[#allocation2 + $0x80] sm:$0xff] %vm1039, %v2179
        %2206 = vst.msk [vmem:[#allocation2 + $0x88] sm:$0xff] %vm1039, %v2180
        %2207 = vst.msk [vmem:[#allocation2 + $0x90] sm:$0xff] %vm1039, %v2181
        %2208 = vst.msk [vmem:[#allocation2 + $0x98] sm:$0xff] %vm1039, %v2182
        %2209 = vst.msk [vmem:[#allocation2 + $0xa0] sm:$0xff] %vm1039, %v2183
        %2210 = vst.msk [vmem:[#allocation2 + $0xa8] sm:$0xff] %vm1039, %v2184
        %2211 = vst.msk [vmem:[#allocation2 + $0xb0] sm:$0xff] %vm1039, %v2185
        %2212 = vst.msk [vmem:[#allocation2 + $0xb8] sm:$0xff] %vm1039, %v2186
        %2213 = vst.msk [vmem:[#allocation2 + $0xc0] sm:$0xff] %vm1039, %v2187
        %2214 = vst.msk [vmem:[#allocation2 + $0xc8] sm:$0xff] %vm1039, %v2188
        %v2215 = vld [vmem:[#allocation2] sm:$0xff]
        %v2216 = vld [vmem:[#allocation2 + $0x8] sm:$0xff]
        %v2217 = vld [vmem:[#allocation2 + $0x10] sm:$0xff]
        %v2218 = vld [vmem:[#allocation2 + $0x18] sm:$0xff]
        %v2219 = vld [vmem:[#allocation2 + $0x20] sm:$0xff]
        %v2220 = vld [vmem:[#allocation2 + $0x28] sm:$0xff]
        %v2221 = vld [vmem:[#allocation2 + $0x30] sm:$0xff]
        %v2222 = vld [vmem:[#allocation2 + $0x38] sm:$0xff]
        %v2223 = vld [vmem:[#allocation2 + $0x40] sm:$0xff]
        %v2224 = vld [vmem:[#allocation2 + $0x48] sm:$0xff]
        %v2225 = vld [vmem:[#allocation2 + $0x50] sm:$0xff]
        %v2226 = vld [vmem:[#allocation2 + $0x58] sm:$0xff]
        %v2227 = vld [vmem:[#allocation2 + $0x60] sm:$0xff]
        %v2228 = vld [vmem:[#allocation2 + $0x68] sm:$0xff]
        %v2229 = vld [vmem:[#allocation2 + $0x70] sm:$0xff]
        %v2230 = vld [vmem:[#allocation2 + $0x78] sm:$0xff]
        %v2231 = vld [vmem:[#allocation2 + $0x80] sm:$0xff]
        %v2232 = vld [vmem:[#allocation2 + $0x88] sm:$0xff]
        %v2233 = vld [vmem:[#allocation2 + $0x90] sm:$0xff]
        %v2234 = vld [vmem:[#allocation2 + $0x98] sm:$0xff]
        %v2235 = vld [vmem:[#allocation2 + $0xa0] sm:$0xff]
        %v2236 = vld [vmem:[#allocation2 + $0xa8] sm:$0xff]
        %v2237 = vld [vmem:[#allocation2 + $0xb0] sm:$0xff]
        %v2238 = vld [vmem:[#allocation2 + $0xb8] sm:$0xff]
        %v2239 = vld [vmem:[#allocation2 + $0xc0] sm:$0xff]
        %v2240 = vld [vmem:[#allocation2 + $0xc8] sm:$0xff]
        %v2241 = vld [vmem:[%s206 + $0x50] sm:$0xff]
        %v2242 = vld [vmem:[%s206 + $0x58] sm:$0xff]
        %v2243 = vld [vmem:[%s206 + $0x60] sm:$0xff]
        %v2244 = vld [vmem:[%s206 + $0x68] sm:$0xff]
        %v2245 = vld [vmem:[%s206 + $0x70] sm:$0xff]
        %v2246 = vld [vmem:[%s206 + $0x78] sm:$0xff]
        %v2247 = vld [vmem:[%s206 + $0x80] sm:$0xff]
        %v2248 = vld [vmem:[%s206 + $0x88] sm:$0xff]
        %v2249 = vld [vmem:[%s206 + $0x90] sm:$0xff]
        %v2250 = vld [vmem:[%s206 + $0x98] sm:$0xff]
        %v2251 = vld [vmem:[%s206 + $0xa0] sm:$0xff]
        %v2252 = vld [vmem:[%s206 + $0xa8] sm:$0xff]
        %v2253 = vld [vmem:[%s206 + $0xb0] sm:$0xff]
        %v2254 = vld [vmem:[%s206 + $0xb8] sm:$0xff]
        %v2255 = vld [vmem:[%s206 + $0xc0] sm:$0xff]
        %v2256 = vld [vmem:[%s206 + $0xc8] sm:$0xff]
        %v2257 = vld [vmem:[%s206 + $0xd0] sm:$0xff]
        %v2258 = vld [vmem:[%s206 + $0xd8] sm:$0xff]
        %v2259 = vld [vmem:[%s206 + $0xe0] sm:$0xff]
        %v2260 = vld [vmem:[%s206 + $0xe8] sm:$0xff]
        %v2261 = vld [vmem:[%s206 + $0xf0] sm:$0xff]
        %v2262 = vld [vmem:[%s206 + $0xf8] sm:$0xff]
        %v2263 = vld [vmem:[%s206 + $0x100] sm:$0xff]
        %v2264 = vld [vmem:[%s206 + $0x108] sm:$0xff]
        %v2265 = vld [vmem:[%s206 + $0x110] sm:$0xff]
        %v2266 = vld [vmem:[%s206 + $0x118] sm:$0xff]
        %s2267 = sadd.s32 40, %s233
        %s2268 = scalar_lea.vmem %s1, %s2267
        %v2269 = vld [vmem:[%s2268] sm:$0xff]
        %v2271 = vsel %vm236, %v2241, 0
        %v2274 = vsel %vm236, %v2242, 0
        %v2277 = vsel %vm236, %v2243, 0
        %v2280 = vsel %vm236, %v2244, 0
        %v2283 = vsel %vm236, %v2245, 0
        %v2286 = vsel %vm236, %v2246, 0
        %v2289 = vsel %vm236, %v2247, 0
        %v2292 = vsel %vm236, %v2248, 0
        %v2295 = vsel %vm236, %v2249, 0
        %v2298 = vsel %vm236, %v2250, 0
        %v2301 = vsel %vm236, %v2251, 0
        %v2304 = vsel %vm236, %v2252, 0
        %v2307 = vsel %vm236, %v2253, 0
        %v2310 = vsel %vm236, %v2254, 0
        %v2313 = vsel %vm236, %v2255, 0
        %v2316 = vsel %vm236, %v2256, 0
        %v2319 = vsel %vm236, %v2257, 0
        %v2322 = vsel %vm236, %v2258, 0
        %v2325 = vsel %vm236, %v2259, 0
        %v2328 = vsel %vm236, %v2260, 0
        %v2331 = vsel %vm236, %v2261, 0
        %v2334 = vsel %vm236, %v2262, 0
        %v2337 = vsel %vm236, %v2263, 0
        %v2340 = vsel %vm236, %v2264, 0
        %v2343 = vsel %vm236, %v2265, 0
        %v2346 = vsel %vm236, %v2266, 0
        %v2349 = vsel %vm236, %v2269, 0
        %2351 = vmatprep.subr.mxu0 0.0
        %2352 = vmatpush1.xpose.msra.mxu0 0.0
        %2353 = vmatprep.subr.mxu0 0.0
        %2354 = vmatpush1.xpose.msra.mxu0 0.0
        %2355 = vmatprep.subr.mxu0 0.0
        %2356 = vmatpush1.xpose.msra.mxu0 0.0
        %2357 = vmatprep.subr.mxu0 0.0
        %2358 = vmatpush1.xpose.msra.mxu0 0.0
        %2359 = vmatprep.subr.mxu0 0.0
        %2360 = vmatpush1.xpose.msra.mxu0 0.0
        %2361 = vmatprep.subr.mxu0 0.0
        %2362 = vmatpush1.xpose.msra.mxu0 0.0
        %2363 = vmatprep.subr.mxu0 0.0
        %2364 = vmatpush1.xpose.msra.mxu0 0.0
        %2365 = vmatprep.subr.mxu0 0.0
        %2366 = vmatpush1.xpose.msra.mxu0 0.0
        %2367 = vmatprep.subr.mxu0 0.0
        %2368 = vmatpush1.xpose.msra.mxu0 0.0
        %2369 = vmatprep.subr.mxu0 0.0
        %2370 = vmatpush1.xpose.msra.mxu0 0.0
        %2371 = vmatprep.subr.mxu0 0.0
        %2372 = vmatpush1.xpose.msra.mxu0 0.0
        %2373 = vmatprep.subr.mxu0 0.0
        %2374 = vmatpush1.xpose.msra.mxu0 0.0
        %2375 = vmatprep.subr.mxu0 0.0
        %2376 = vmatpush1.xpose.msra.mxu0 0.0
        %2377 = vmatprep.subr.mxu0 0.0
        %2378 = vmatpush1.xpose.msra.mxu0 0.0
        %2379 = vmatprep.subr.mxu0 0.0
        %2380 = vmatpush1.xpose.msra.mxu0 0.0
        %2381 = vmatprep.subr.mxu0 0.0
        %2382 = vmatpush1.xpose.msra.mxu0 %v2349
        %2383 = vmatprep.subr.mxu0 0.0
        %2384 = vmatpush2.xpose.msra.mxu0 0.0
        %2385 = vmatprep.subr.mxu0 0.0
        %2386 = vmatpush2.xpose.msra.mxu0 0.0
        %2387 = vmatprep.subr.mxu0 0.0
        %2388 = vmatpush2.xpose.msra.mxu0 0.0
        %2389 = vmatprep.subr.mxu0 0.0
        %2390 = vmatpush2.xpose.msra.mxu0 0.0
        %2391 = vmatprep.subr.mxu0 0.0
        %2392 = vmatpush2.xpose.msra.mxu0 0.0
        %2393 = vmatprep.subr.mxu0 0.0
        %2394 = vmatpush2.xpose.msra.mxu0 0.0
        %2395 = vmatprep.subr.mxu0 0.0
        %2396 = vmatpush2.xpose.msra.mxu0 0.0
        %2397 = vmatprep.subr.mxu0 0.0
        %2398 = vmatpush2.xpose.msra.mxu0 0.0
        %2399 = vmatprep.subr.mxu0 0.0
        %2400 = vmatpush2.xpose.msra.mxu0 0.0
        %2401 = vmatprep.subr.mxu0 0.0
        %2402 = vmatpush2.xpose.msra.mxu0 0.0
        %2403 = vmatprep.subr.mxu0 0.0
        %2404 = vmatpush2.xpose.msra.mxu0 0.0
        %2405 = vmatprep.subr.mxu0 0.0
        %2406 = vmatpush2.xpose.msra.mxu0 0.0
        %2407 = vmatprep.subr.mxu0 0.0
        %2408 = vmatpush2.xpose.msra.mxu0 0.0
        %2409 = vmatprep.subr.mxu0 0.0
        %2410 = vmatpush2.xpose.msra.mxu0 0.0
        %2411 = vmatprep.subr.mxu0 0.0
        %2412 = vmatpush2.xpose.msra.mxu0 0.0
        %2413 = vmatprep.subr.mxu0 0.0
        %2414 = vmatpush2.xpose.msra.mxu0 0.0
        %2415 = vmatprep.mubr.f32.mxu0 0.0
        %2416 = vmatmul.mubr.f32.gmra.mxu0 %v2271
        %v2417 = vpop.f32.mrf.mxu0
        %v2418 = vadd.f32 0.0, %v2417
        %v2419 = vpop.f32.mrf.mxu0
        %2420 = vmatprep.mubr.f32.mxu0 0.0
        %2421 = vmatmul.mubr.f32.gmra.mxu0 %v2274
        %v2422 = vpop.f32.mrf.mxu0
        %v2423 = vadd.f32 0.0, %v2422
        %v2424 = vpop.f32.mrf.mxu0
        %2425 = vmatprep.mubr.f32.mxu0 0.0
        %2426 = vmatmul.mubr.f32.gmra.mxu0 %v2277
        %v2427 = vpop.f32.mrf.mxu0
        %v2428 = vadd.f32 0.0, %v2427
        %v2429 = vpop.f32.mrf.mxu0
        %2430 = vmatprep.mubr.f32.mxu0 0.0
        %2431 = vmatmul.mubr.f32.gmra.mxu0 %v2280
        %v2432 = vpop.f32.mrf.mxu0
        %v2433 = vadd.f32 0.0, %v2432
        %v2434 = vpop.f32.mrf.mxu0
        %2435 = vmatprep.mubr.f32.mxu0 0.0
        %2436 = vmatmul.mubr.f32.gmra.mxu0 %v2283
        %v2437 = vpop.f32.mrf.mxu0
        %v2438 = vadd.f32 0.0, %v2437
        %v2439 = vpop.f32.mrf.mxu0
        %2440 = vmatprep.mubr.f32.mxu0 0.0
        %2441 = vmatmul.mubr.f32.gmra.mxu0 %v2286
        %v2442 = vpop.f32.mrf.mxu0
        %v2443 = vadd.f32 0.0, %v2442
        %v2444 = vpop.f32.mrf.mxu0
        %2445 = vmatprep.mubr.f32.mxu0 0.0
        %2446 = vmatmul.mubr.f32.gmra.mxu0 %v2289
        %v2447 = vpop.f32.mrf.mxu0
        %v2448 = vadd.f32 0.0, %v2447
        %v2449 = vpop.f32.mrf.mxu0
        %2450 = vmatprep.mubr.f32.mxu0 0.0
        %2451 = vmatmul.mubr.f32.gmra.mxu0 %v2292
        %v2452 = vpop.f32.mrf.mxu0
        %v2453 = vadd.f32 0.0, %v2452
        %v2454 = vpop.f32.mrf.mxu0
        %2455 = vmatprep.mubr.f32.mxu0 0.0
        %2456 = vmatmul.mubr.f32.gmra.mxu0 %v2295
        %v2457 = vpop.f32.mrf.mxu0
        %v2458 = vadd.f32 0.0, %v2457
        %v2459 = vpop.f32.mrf.mxu0
        %2460 = vmatprep.mubr.f32.mxu0 0.0
        %2461 = vmatmul.mubr.f32.gmra.mxu0 %v2298
        %v2462 = vpop.f32.mrf.mxu0
        %v2463 = vadd.f32 0.0, %v2462
        %v2464 = vpop.f32.mrf.mxu0
        %2465 = vmatprep.mubr.f32.mxu0 0.0
        %2466 = vmatmul.mubr.f32.gmra.mxu0 %v2301
        %v2467 = vpop.f32.mrf.mxu0
        %v2468 = vadd.f32 0.0, %v2467
        %v2469 = vpop.f32.mrf.mxu0
        %2470 = vmatprep.mubr.f32.mxu0 0.0
        %2471 = vmatmul.mubr.f32.gmra.mxu0 %v2304
        %v2472 = vpop.f32.mrf.mxu0
        %v2473 = vadd.f32 0.0, %v2472
        %v2474 = vpop.f32.mrf.mxu0
        %2475 = vmatprep.mubr.f32.mxu0 0.0
        %2476 = vmatmul.mubr.f32.gmra.mxu0 %v2307
        %v2477 = vpop.f32.mrf.mxu0
        %v2478 = vadd.f32 0.0, %v2477
        %v2479 = vpop.f32.mrf.mxu0
        %2480 = vmatprep.mubr.f32.mxu0 0.0
        %2481 = vmatmul.mubr.f32.gmra.mxu0 %v2310
        %v2482 = vpop.f32.mrf.mxu0
        %v2483 = vadd.f32 0.0, %v2482
        %v2484 = vpop.f32.mrf.mxu0
        %2485 = vmatprep.mubr.f32.mxu0 0.0
        %2486 = vmatmul.mubr.f32.gmra.mxu0 %v2313
        %v2487 = vpop.f32.mrf.mxu0
        %v2488 = vadd.f32 0.0, %v2487
        %v2489 = vpop.f32.mrf.mxu0
        %2490 = vmatprep.mubr.f32.mxu0 0.0
        %2491 = vmatmul.mubr.f32.gmra.mxu0 %v2316
        %v2492 = vpop.f32.mrf.mxu0
        %v2493 = vadd.f32 0.0, %v2492
        %v2494 = vpop.f32.mrf.mxu0
        %2495 = vmatprep.mubr.f32.mxu0 0.0
        %2496 = vmatmul.mubr.f32.gmra.mxu0 %v2319
        %v2497 = vpop.f32.mrf.mxu0
        %v2498 = vadd.f32 0.0, %v2497
        %v2499 = vpop.f32.mrf.mxu0
        %2500 = vmatprep.mubr.f32.mxu0 0.0
        %2501 = vmatmul.mubr.f32.gmra.mxu0 %v2322
        %v2502 = vpop.f32.mrf.mxu0
        %v2503 = vadd.f32 0.0, %v2502
        %v2504 = vpop.f32.mrf.mxu0
        %2505 = vmatprep.mubr.f32.mxu0 0.0
        %2506 = vmatmul.mubr.f32.gmra.mxu0 %v2325
        %v2507 = vpop.f32.mrf.mxu0
        %v2508 = vadd.f32 0.0, %v2507
        %v2509 = vpop.f32.mrf.mxu0
        %2510 = vmatprep.mubr.f32.mxu0 0.0
        %2511 = vmatmul.mubr.f32.gmra.mxu0 %v2328
        %v2512 = vpop.f32.mrf.mxu0
        %v2513 = vadd.f32 0.0, %v2512
        %v2514 = vpop.f32.mrf.mxu0
        %2515 = vmatprep.mubr.f32.mxu0 0.0
        %2516 = vmatmul.mubr.f32.gmra.mxu0 %v2331
        %v2517 = vpop.f32.mrf.mxu0
        %v2518 = vadd.f32 0.0, %v2517
        %v2519 = vpop.f32.mrf.mxu0
        %2520 = vmatprep.mubr.f32.mxu0 0.0
        %2521 = vmatmul.mubr.f32.gmra.mxu0 %v2334
        %v2522 = vpop.f32.mrf.mxu0
        %v2523 = vadd.f32 0.0, %v2522
        %v2524 = vpop.f32.mrf.mxu0
        %2525 = vmatprep.mubr.f32.mxu0 0.0
        %2526 = vmatmul.mubr.f32.gmra.mxu0 %v2337
        %v2527 = vpop.f32.mrf.mxu0
        %v2528 = vadd.f32 0.0, %v2527
        %v2529 = vpop.f32.mrf.mxu0
        %2530 = vmatprep.mubr.f32.mxu0 0.0
        %2531 = vmatmul.mubr.f32.gmra.mxu0 %v2340
        %v2532 = vpop.f32.mrf.mxu0
        %v2533 = vadd.f32 0.0, %v2532
        %v2534 = vpop.f32.mrf.mxu0
        %2535 = vmatprep.mubr.f32.mxu0 0.0
        %2536 = vmatmul.mubr.f32.gmra.mxu0 %v2343
        %v2537 = vpop.f32.mrf.mxu0
        %v2538 = vadd.f32 0.0, %v2537
        %v2539 = vpop.f32.mrf.mxu0
        %2540 = vmatprep.mubr.f32.mxu0 0.0
        %2541 = vmatmul.mubr.f32.gmra.mxu0 %v2346
        %v2542 = vpop.f32.mrf.mxu0
        %v2543 = vadd.f32 0.0, %v2542
        %v2544 = vpop.f32.mrf.mxu0
        %2545 = vdwg.mxu0
        %v2546 = vadd.f32 %v2215, %v2418
        %v2547 = vadd.f32 %v2216, %v2423
        %v2548 = vadd.f32 %v2217, %v2428
        %v2549 = vadd.f32 %v2218, %v2433
        %v2550 = vadd.f32 %v2219, %v2438
        %v2551 = vadd.f32 %v2220, %v2443
        %v2552 = vadd.f32 %v2221, %v2448
        %v2553 = vadd.f32 %v2222, %v2453
        %v2554 = vadd.f32 %v2223, %v2458
        %v2555 = vadd.f32 %v2224, %v2463
        %v2556 = vadd.f32 %v2225, %v2468
        %v2557 = vadd.f32 %v2226, %v2473
        %v2558 = vadd.f32 %v2227, %v2478
        %v2559 = vadd.f32 %v2228, %v2483
        %v2560 = vadd.f32 %v2229, %v2488
        %v2561 = vadd.f32 %v2230, %v2493
        %v2562 = vadd.f32 %v2231, %v2498
        %v2563 = vadd.f32 %v2232, %v2503
        %v2564 = vadd.f32 %v2233, %v2508
        %v2565 = vadd.f32 %v2234, %v2513
        %v2566 = vadd.f32 %v2235, %v2518
        %v2567 = vadd.f32 %v2236, %v2523
        %v2568 = vadd.f32 %v2237, %v2528
        %v2569 = vadd.f32 %v2238, %v2533
        %v2570 = vadd.f32 %v2239, %v2538
        %v2571 = vadd.f32 %v2240, %v2543
        %2572 = vst.msk [vmem:[#allocation2] sm:$0xff] %vm1039, %v2546
        %2573 = vst.msk [vmem:[#allocation2 + $0x8] sm:$0xff] %vm1039, %v2547
        %2574 = vst.msk [vmem:[#allocation2 + $0x10] sm:$0xff] %vm1039, %v2548
        %2575 = vst.msk [vmem:[#allocation2 + $0x18] sm:$0xff] %vm1039, %v2549
        %2576 = vst.msk [vmem:[#allocation2 + $0x20] sm:$0xff] %vm1039, %v2550
        %2577 = vst.msk [vmem:[#allocation2 + $0x28] sm:$0xff] %vm1039, %v2551
        %2578 = vst.msk [vmem:[#allocation2 + $0x30] sm:$0xff] %vm1039, %v2552
        %2579 = vst.msk [vmem:[#allocation2 + $0x38] sm:$0xff] %vm1039, %v2553
        %2580 = vst.msk [vmem:[#allocation2 + $0x40] sm:$0xff] %vm1039, %v2554
        %2581 = vst.msk [vmem:[#allocation2 + $0x48] sm:$0xff] %vm1039, %v2555
        %2582 = vst.msk [vmem:[#allocation2 + $0x50] sm:$0xff] %vm1039, %v2556
        %2583 = vst.msk [vmem:[#allocation2 + $0x58] sm:$0xff] %vm1039, %v2557
        %2584 = vst.msk [vmem:[#allocation2 + $0x60] sm:$0xff] %vm1039, %v2558
        %2585 = vst.msk [vmem:[#allocation2 + $0x68] sm:$0xff] %vm1039, %v2559
        %2586 = vst.msk [vmem:[#allocation2 + $0x70] sm:$0xff] %vm1039, %v2560
        %2587 = vst.msk [vmem:[#allocation2 + $0x78] sm:$0xff] %vm1039, %v2561
        %2588 = vst.msk [vmem:[#allocation2 + $0x80] sm:$0xff] %vm1039, %v2562
        %2589 = vst.msk [vmem:[#allocation2 + $0x88] sm:$0xff] %vm1039, %v2563
        %2590 = vst.msk [vmem:[#allocation2 + $0x90] sm:$0xff] %vm1039, %v2564
        %2591 = vst.msk [vmem:[#allocation2 + $0x98] sm:$0xff] %vm1039, %v2565
        %2592 = vst.msk [vmem:[#allocation2 + $0xa0] sm:$0xff] %vm1039, %v2566
        %2593 = vst.msk [vmem:[#allocation2 + $0xa8] sm:$0xff] %vm1039, %v2567
        %2594 = vst.msk [vmem:[#allocation2 + $0xb0] sm:$0xff] %vm1039, %v2568
        %2595 = vst.msk [vmem:[#allocation2 + $0xb8] sm:$0xff] %vm1039, %v2569
        %2596 = vst.msk [vmem:[#allocation2 + $0xc0] sm:$0xff] %vm1039, %v2570
        %2597 = vst.msk [vmem:[#allocation2 + $0xc8] sm:$0xff] %vm1039, %v2571
        %p2598 = scmp.eq.s32.totalorder %s23, 5
        // Predicated region
        $region45: #{_lambda_.1} parent=35 // pred_check
          %p2599 = pneg %p2598
        $region46: #{_lambda_.1} parent=35 // pred_check_branch
          %2601 = sbr.rel (%p2599) target = $region48
        $region47: #{_lambda_.1} parent=35 // pred_region
          %v2602 = vld [vmem:[#allocation2] sm:$0xff]
          %v2603 = vld [vmem:[#allocation2 + $0x8] sm:$0xff]
          %v2604 = vld [vmem:[#allocation2 + $0x10] sm:$0xff]
          %v2605 = vld [vmem:[#allocation2 + $0x18] sm:$0xff]
          %v2606 = vld [vmem:[#allocation2 + $0x20] sm:$0xff]
          %v2607 = vld [vmem:[#allocation2 + $0x28] sm:$0xff]
          %v2608 = vld [vmem:[#allocation2 + $0x30] sm:$0xff]
          %v2609 = vld [vmem:[#allocation2 + $0x38] sm:$0xff]
          %v2610 = vld [vmem:[#allocation2 + $0x40] sm:$0xff]
          %v2611 = vld [vmem:[#allocation2 + $0x48] sm:$0xff]
          %v2612 = vld [vmem:[#allocation2 + $0x50] sm:$0xff]
          %v2613 = vld [vmem:[#allocation2 + $0x58] sm:$0xff]
          %v2614 = vld [vmem:[#allocation2 + $0x60] sm:$0xff]
          %v2615 = vld [vmem:[#allocation2 + $0x68] sm:$0xff]
          %v2616 = vld [vmem:[#allocation2 + $0x70] sm:$0xff]
          %v2617 = vld [vmem:[#allocation2 + $0x78] sm:$0xff]
          %v2618 = vld [vmem:[#allocation2 + $0x80] sm:$0xff]
          %v2619 = vld [vmem:[#allocation2 + $0x88] sm:$0xff]
          %v2620 = vld [vmem:[#allocation2 + $0x90] sm:$0xff]
          %v2621 = vld [vmem:[#allocation2 + $0x98] sm:$0xff]
          %v2622 = vld [vmem:[#allocation2 + $0xa0] sm:$0xff]
          %v2623 = vld [vmem:[#allocation2 + $0xa8] sm:$0xff]
          %v2624 = vld [vmem:[#allocation2 + $0xb0] sm:$0xff]
          %v2625 = vld [vmem:[#allocation2 + $0xb8] sm:$0xff]
          %v2626 = vld [vmem:[#allocation2 + $0xc0] sm:$0xff]
          %v2627 = vld [vmem:[#allocation2 + $0xc8] sm:$0xff]
          %v2628 = vld [vmem:[%s2] sm:$0x1]
          %v2630 = vlaneseq
          %v2631 = vshrl.u32 %v2630, 7
          %v2632 = vsub.s32 0, %v2631
          %v2633 = vrot.slane %v2628, %v2632
          %v2635 = vadd.f32 %v2602, %v2633
          %v2636 = vadd.f32 %v2603, %v2633
          %v2637 = vadd.f32 %v2604, %v2633
          %v2638 = vadd.f32 %v2605, %v2633
          %v2639 = vadd.f32 %v2606, %v2633
          %v2640 = vadd.f32 %v2607, %v2633
          %v2641 = vadd.f32 %v2608, %v2633
          %v2642 = vadd.f32 %v2609, %v2633
          %v2643 = vadd.f32 %v2610, %v2633
          %v2644 = vadd.f32 %v2611, %v2633
          %v2645 = vadd.f32 %v2612, %v2633
          %v2646 = vadd.f32 %v2613, %v2633
          %v2647 = vadd.f32 %v2614, %v2633
          %v2648 = vadd.f32 %v2615, %v2633
          %v2649 = vadd.f32 %v2616, %v2633
          %v2650 = vadd.f32 %v2617, %v2633
          %v2651 = vadd.f32 %v2618, %v2633
          %v2652 = vadd.f32 %v2619, %v2633
          %v2653 = vadd.f32 %v2620, %v2633
          %v2654 = vadd.f32 %v2621, %v2633
          %v2655 = vadd.f32 %v2622, %v2633
          %v2656 = vadd.f32 %v2623, %v2633
          %v2657 = vadd.f32 %v2624, %v2633
          %v2658 = vadd.f32 %v2625, %v2633
          %v2659 = vadd.f32 %v2626, %v2633
          %v2660 = vadd.f32 %v2627, %v2633
          %vm2661 = vcmp.gt.f32.partialorder %v2635, 0.0
          %vm2662 = vcmp.gt.f32.partialorder %v2636, 0.0
          %vm2663 = vcmp.gt.f32.partialorder %v2637, 0.0
          %vm2664 = vcmp.gt.f32.partialorder %v2638, 0.0
          %vm2665 = vcmp.gt.f32.partialorder %v2639, 0.0
          %vm2666 = vcmp.gt.f32.partialorder %v2640, 0.0
          %vm2667 = vcmp.gt.f32.partialorder %v2641, 0.0
          %vm2668 = vcmp.gt.f32.partialorder %v2642, 0.0
          %vm2669 = vcmp.gt.f32.partialorder %v2643, 0.0
          %vm2670 = vcmp.gt.f32.partialorder %v2644, 0.0
          %vm2671 = vcmp.gt.f32.partialorder %v2645, 0.0
          %vm2672 = vcmp.gt.f32.partialorder %v2646, 0.0
          %vm2673 = vcmp.gt.f32.partialorder %v2647, 0.0
          %vm2674 = vcmp.gt.f32.partialorder %v2648, 0.0
          %vm2675 = vcmp.gt.f32.partialorder %v2649, 0.0
          %vm2676 = vcmp.gt.f32.partialorder %v2650, 0.0
          %vm2677 = vcmp.gt.f32.partialorder %v2651, 0.0
          %vm2678 = vcmp.gt.f32.partialorder %v2652, 0.0
          %vm2679 = vcmp.gt.f32.partialorder %v2653, 0.0
          %vm2680 = vcmp.gt.f32.partialorder %v2654, 0.0
          %vm2681 = vcmp.gt.f32.partialorder %v2655, 0.0
          %vm2682 = vcmp.gt.f32.partialorder %v2656, 0.0
          %vm2683 = vcmp.gt.f32.partialorder %v2657, 0.0
          %vm2684 = vcmp.gt.f32.partialorder %v2658, 0.0
          %vm2685 = vcmp.gt.f32.partialorder %v2659, 0.0
          %vm2686 = vcmp.gt.f32.partialorder %v2660, 0.0
          %v2687 = vmul.f32 %v2635, -0.608
          %v2688 = vmul.f32 %v2636, -0.608
          %v2689 = vmul.f32 %v2637, -0.608
          %v2690 = vmul.f32 %v2638, -0.608
          %v2691 = vmul.f32 %v2639, -0.608
          %v2692 = vmul.f32 %v2640, -0.608
          %v2693 = vmul.f32 %v2641, -0.608
          %v2694 = vmul.f32 %v2642, -0.608
          %v2695 = vmul.f32 %v2643, -0.608
          %v2696 = vmul.f32 %v2644, -0.608
          %v2697 = vmul.f32 %v2645, -0.608
          %v2698 = vmul.f32 %v2646, -0.608
          %v2699 = vmul.f32 %v2647, -0.608
          %v2700 = vmul.f32 %v2648, -0.608
          %v2701 = vmul.f32 %v2649, -0.608
          %v2702 = vmul.f32 %v2650, -0.608
          %v2703 = vmul.f32 %v2651, -0.608
          %v2704 = vmul.f32 %v2652, -0.608
          %v2705 = vmul.f32 %v2653, -0.608
          %v2706 = vmul.f32 %v2654, -0.608
          %v2707 = vmul.f32 %v2655, -0.608
          %v2708 = vmul.f32 %v2656, -0.608
          %v2709 = vmul.f32 %v2657, -0.608
          %v2710 = vmul.f32 %v2658, -0.608
          %v2711 = vmul.f32 %v2659, -0.608
          %v2712 = vmul.f32 %v2660, -0.608
          %v2713 = vsel %vm2661, %v2635, %v2687
          %v2714 = vsel %vm2662, %v2636, %v2688
          %v2715 = vsel %vm2663, %v2637, %v2689
          %v2716 = vsel %vm2664, %v2638, %v2690
          %v2717 = vsel %vm2665, %v2639, %v2691
          %v2718 = vsel %vm2666, %v2640, %v2692
          %v2719 = vsel %vm2667, %v2641, %v2693
          %v2720 = vsel %vm2668, %v2642, %v2694
          %v2721 = vsel %vm2669, %v2643, %v2695
          %v2722 = vsel %vm2670, %v2644, %v2696
          %v2723 = vsel %vm2671, %v2645, %v2697
          %v2724 = vsel %vm2672, %v2646, %v2698
          %v2725 = vsel %vm2673, %v2647, %v2699
          %v2726 = vsel %vm2674, %v2648, %v2700
          %v2727 = vsel %vm2675, %v2649, %v2701
          %v2728 = vsel %vm2676, %v2650, %v2702
          %v2729 = vsel %vm2677, %v2651, %v2703
          %v2730 = vsel %vm2678, %v2652, %v2704
          %v2731 = vsel %vm2679, %v2653, %v2705
          %v2732 = vsel %vm2680, %v2654, %v2706
          %v2733 = vsel %vm2681, %v2655, %v2707
          %v2734 = vsel %vm2682, %v2656, %v2708
          %v2735 = vsel %vm2683, %v2657, %v2709
          %v2736 = vsel %vm2684, %v2658, %v2710
          %v2737 = vsel %vm2685, %v2659, %v2711
          %v2738 = vsel %vm2686, %v2660, %v2712
          %v2739 = vld [vmem:[%s3] sm:$0xff]
          %v2740 = vld [vmem:[%s3 + $0x8] sm:$0xff]
          %2742 = vset.pattern.permute.xlu0 0
          %2743 = vperm.xlu0 %2742, %v2739
          %v2744 = vpop.permute.xlu0 %2743
          %2747 = vset.pattern.permute.xlu0 0
          %2748 = vperm.xlu0 %2747, %v2740
          %v2749 = vpop.permute.xlu0 %2748
          %v2751 = vmul.f32 %v2713, %v2744
          %v2752 = vmul.f32 %v2714, %v2749
          %v2753 = vmul.f32 %v2715, %v2744
          %v2754 = vmul.f32 %v2716, %v2749
          %v2755 = vmul.f32 %v2717, %v2744
          %v2756 = vmul.f32 %v2718, %v2749
          %v2757 = vmul.f32 %v2719, %v2744
          %v2758 = vmul.f32 %v2720, %v2749
          %v2759 = vmul.f32 %v2721, %v2744
          %v2760 = vmul.f32 %v2722, %v2749
          %v2761 = vmul.f32 %v2723, %v2744
          %v2762 = vmul.f32 %v2724, %v2749
          %v2763 = vmul.f32 %v2725, %v2744
          %v2764 = vmul.f32 %v2726, %v2749
          %v2765 = vmul.f32 %v2727, %v2744
          %v2766 = vmul.f32 %v2728, %v2749
          %v2767 = vmul.f32 %v2729, %v2744
          %v2768 = vmul.f32 %v2730, %v2749
          %v2769 = vmul.f32 %v2731, %v2744
          %v2770 = vmul.f32 %v2732, %v2749
          %v2771 = vmul.f32 %v2733, %v2744
          %v2772 = vmul.f32 %v2734, %v2749
          %v2773 = vmul.f32 %v2735, %v2744
          %v2774 = vmul.f32 %v2736, %v2749
          %v2775 = vmul.f32 %v2737, %v2744
          %v2776 = vmul.f32 %v2738, %v2749
          %v2777 = vsel %vm1039, %v2751, 0.0
          %v2778 = vsel %vm1039, %v2752, 0.0
          %v2779 = vadd.f32 %v2777, %v2778
          %v2780 = vsel %vm1039, %v2753, 0.0
          %v2781 = vadd.f32 %v2779, %v2780
          %v2782 = vsel %vm1039, %v2754, 0.0
          %v2783 = vadd.f32 %v2781, %v2782
          %v2784 = vsel %vm1039, %v2755, 0.0
          %v2785 = vadd.f32 %v2783, %v2784
          %v2786 = vsel %vm1039, %v2756, 0.0
          %v2787 = vadd.f32 %v2785, %v2786
          %v2788 = vsel %vm1039, %v2757, 0.0
          %v2789 = vadd.f32 %v2787, %v2788
          %v2790 = vsel %vm1039, %v2758, 0.0
          %v2791 = vadd.f32 %v2789, %v2790
          %v2792 = vsel %vm1039, %v2759, 0.0
          %v2793 = vadd.f32 %v2791, %v2792
          %v2794 = vsel %vm1039, %v2760, 0.0
          %v2795 = vadd.f32 %v2793, %v2794
          %v2796 = vsel %vm1039, %v2761, 0.0
          %v2797 = vadd.f32 %v2795, %v2796
          %v2798 = vsel %vm1039, %v2762, 0.0
          %v2799 = vadd.f32 %v2797, %v2798
          %v2800 = vsel %vm1039, %v2763, 0.0
          %v2801 = vadd.f32 %v2799, %v2800
          %v2802 = vsel %vm1039, %v2764, 0.0
          %v2803 = vadd.f32 %v2801, %v2802
          %v2804 = vsel %vm1039, %v2765, 0.0
          %v2805 = vadd.f32 %v2803, %v2804
          %v2806 = vsel %vm1039, %v2766, 0.0
          %v2807 = vadd.f32 %v2805, %v2806
          %v2808 = vsel %vm1039, %v2767, 0.0
          %v2809 = vadd.f32 %v2807, %v2808
          %v2810 = vsel %vm1039, %v2768, 0.0
          %v2811 = vadd.f32 %v2809, %v2810
          %v2812 = vsel %vm1039, %v2769, 0.0
          %v2813 = vadd.f32 %v2811, %v2812
          %v2814 = vsel %vm1039, %v2770, 0.0
          %v2815 = vadd.f32 %v2813, %v2814
          %v2816 = vsel %vm1039, %v2771, 0.0
          %v2817 = vadd.f32 %v2815, %v2816
          %v2818 = vsel %vm1039, %v2772, 0.0
          %v2819 = vadd.f32 %v2817, %v2818
          %v2820 = vsel %vm1039, %v2773, 0.0
          %v2821 = vadd.f32 %v2819, %v2820
          %v2822 = vsel %vm1039, %v2774, 0.0
          %v2823 = vadd.f32 %v2821, %v2822
          %v2824 = vsel %vm1039, %v2775, 0.0
          %v2825 = vadd.f32 %v2823, %v2824
          %v2826 = vsel %vm1039, %v2776, 0.0
          %v2827 = vadd.f32 %v2825, %v2826
          %v2828 = vrot.slane %v2827, 4
          %v2829 = vadd.f32 %v2827, %v2828
          %v2830 = vrot.slane %v2829, 2
          %v2831 = vadd.f32 %v2829, %v2830
          %v2832 = vrot.slane %v2831, 1
          %v2833 = vadd.f32 %v2831, %v2832
          %vm2834 = vcmask 57344
          %2835 = vst.msk [vmem:[%s201] sm:$0x1] %vm2834, %v2833
        $region48: #{_lambda_.1} parent=35 // pred_fallthru
          _
        %s2836 = sand.u32 %s127, 1
        %s2837 = scalar_lea.sflag [#allocation4], %s2836
        %s2838 = sand.u32 %s127, 1
        %s2839 = scalar_lea.vmem [#allocation3], %s2838
        // Predicated region
        $region49: #{_lambda_.1} parent=35 // pred_check
          %p2840 = pneg %p137
        $region50: #{_lambda_.1} parent=35 // pred_check_branch
          %2842 = sbr.rel (%p2840) target = $region52
        $region51: #{_lambda_.1} parent=35 // pred_region
          %s2844 = ssub.s32 16, 16
          %2845 = vsyncadd %s2837, %s2844
          %s2846 = smul.addr %s22, 16
          %s2847 = scalar_lea.hbm %s4, %s2846
          %s2849 = sshll.u32 %s2839, 4
          %s2850 = int_to_ptr.vmem [resolvable:$true] %s2849
          %2852 = dma.vmem_to_hbm [thread:$0]  %s2850, 16, %s2847, %s2837
        $region52: #{_lambda_.1} parent=35 // pred_fallthru
          _
      $region36: #{_lambda_.1} parent=5 // pred_fallthru
        _
      %p2853 = scmp.le.s32.totalorder 2, %s13
      // Predicated region
      $region53: #{_lambda_.1} parent=5 // pred_check
        %p2854 = pneg %p2853
      $region54: #{_lambda_.1} parent=5 // pred_check_branch
        %2856 = sbr.rel (%p2854) target = $region56
      $region55: #{_lambda_.1} parent=5 // pred_region
        %s2857 = ssub.s32 %s13, 2
        // Predicated region
        $region57: #{_lambda_.1} parent=55 // pred_check
          %p2858 = pneg %p143
        $region58: #{_lambda_.1} parent=55 // pred_check_branch
          %2860 = sbr.rel (%p2858) target = $region60
        $region59: #{_lambda_.1} parent=55 // pred_region
          %s2861 = sand.u32 %s128, 1
          %s2862 = scalar_lea.sflag [#allocation4], %s2861
          %s2863 = sand.u32 %s128, 1
          %s2864 = scalar_lea.vmem [#allocation3], %s2863
          %2865 = dma.done %s2862, 16
        $region60: #{_lambda_.1} parent=55 // pred_fallthru
          _
      $region56: #{_lambda_.1} parent=5 // pred_fallthru
        _
    $region6: #{_lambda_.1} parent=1 // loop_footer
      %s17 = sadd.s32 1, %s13
    $region7: #{_lambda_.1} parent=1 // loop_footer_branch
      %12 = sbr.rel target = $region3
    $region8: #{_lambda_.1} parent=1 // loop_exit
      _
    %2866 = vsyncpa [#allocation4], 1
    %s2867 = scalar_lea.sflag [#allocation4], 1
    %2868 = vsyncpa %s2867, 1

</llo_original>
